<compile_context>
chip_gen: v7x
topology: tpu7x:2x2x1
jax: 0.10.0
libtpu: 0.0.40
codegen_flags: <defaults>
</compile_context>

<pallas_src>
import jax
import jax.numpy as jnp
from jax.experimental import pallas as pl
from jax.experimental.pallas import tpu as pltpu

EPS = 1e-5


# ---------------------------------------------------------------------------
# In-kernel helpers
# ---------------------------------------------------------------------------
def _conv_tile(xph_ref, wc_ref):
    """Fused [3x3 | 1x1] conv for one TH x W spatial tile.

    xph_ref: (1, TH+2, W+2, Cin)  reflection-padded tile (carries its 1-row halo).
    wc_ref : (9*Cin, 2*F)         cols [0:F]  = flattened 3x3 taps,
                                  cols [F:2F] = 1x1 weight on the centre-tap rows.
    Returns y = [y_3x3 | y_1x1], shape (TH*W, 2*F), float32.
    """
    th = xph_ref.shape[1] - 2
    w = xph_ref.shape[2] - 2
    cin = xph_ref.shape[3]
    xt = xph_ref[0].astype(jnp.float32)                       # (TH+2, W+2, Cin)
    # im2col slab built ONCE per tile: 9 shifted windows stacked on channels
    # (tap order dy-major, dx-minor, matching wc row order).
    taps = [xt[dy:dy + th, dx:dx + w, :] for dy in range(3) for dx in range(3)]
    patches = jnp.concatenate(taps, axis=-1).reshape(th * w, 9 * cin)
    # Single MXU call: K = 9*Cin, Nout = 2*F (vs 9 tiny K=Cin matmuls before).
    return jnp.dot(patches, wc_ref[...].astype(jnp.float32),
                   preferred_element_type=jnp.float32)         # (TH*W, 2F)


def _sum_and_sumsq(v):
    """Per-column [sum | sum-of-squares] via a ones-row MXU matmul (keeps the
    batch-stat reduction off the XLU).  Returns (8, 2*cols); all rows identical."""
    rows = v.shape[0]
    vv = jnp.concatenate([v, v * v], axis=-1)
    ones = jnp.ones((8, rows), jnp.float32)
    return jnp.dot(ones, vv, preferred_element_type=jnp.float32)


def _fused_pre_bn3(xph_ref, wc_ref, ab12_ref):
    """Recompute conv tile, apply folded BN1/BN2, residual add, ReLU."""
    f = wc_ref.shape[1] // 2
    y = _conv_tile(xph_ref, wc_ref)                            # (ROWS, 2F)
    ab = ab12_ref[...].astype(jnp.float32)                     # (2, 2F): [scale; shift]
    yn = y * ab[0:1, :] + ab[1:2, :]
    return jnp.maximum(yn[:, :f] + yn[:, f:], 0.0)             # (ROWS, F)


# ---------------------------------------------------------------------------
# Kernels (one grid step == one tile of TH image rows; grid axis is "parallel")
# ---------------------------------------------------------------------------
def _conv_stats_kernel(xph_ref, wc_ref, stat_ref):
    """Pass 1: per-tile partial sum / sum-of-squares of [y_3x3 | y_1x1]."""
    y = _conv_tile(xph_ref, wc_ref)
    stat_ref[...] = _sum_and_sumsq(y).reshape(stat_ref.shape)   # (1, 8, 4F)


def _relu_stats_kernel(xph_ref, wc_ref, ab12_ref, stat_ref):
    """Pass 2: folded BN1/BN2 + add + ReLU, partial stats for BN3."""
    z = _fused_pre_bn3(xph_ref, wc_ref, ab12_ref)
    stat_ref[...] = _sum_and_sumsq(z).reshape(stat_ref.shape)   # (1, 8, 2F)


def _final_kernel(xph_ref, wc_ref, ab12_ref, ab3_ref, o_ref):
    """Pass 3: recompute, apply folded BN3, emit output tile."""
    z = _fused_pre_bn3(xph_ref, wc_ref, ab12_ref)
    ab3 = ab3_ref[...].astype(jnp.float32)                      # (2, F)
    out = z * ab3[0:1, :] + ab3[1:2, :]
    o_ref[...] = out.reshape(o_ref.shape).astype(o_ref.dtype)


# ---------------------------------------------------------------------------
# Host-side helpers
# ---------------------------------------------------------------------------
def _fold_bn(s, ss, count, gamma, beta):
    """Fold training-mode BN (batch stats, biased var) into y*scale + shift."""
    mean = s / count
    var = jnp.maximum(ss / count - mean * mean, 0.0)
    scale = gamma.astype(jnp.float32) * jax.lax.rsqrt(var + EPS)
    shift = beta.astype(jnp.float32) - mean * scale
    return scale, shift


def _pick_tile_h(H, W, target_rows=2048):
    """Largest divisor of H keeping TH*W under budget; prefer >=2 tiles so the
    grid actually pipelines DMA against compute."""
    th = 1
    for cand in range(1, H + 1):
        if H % cand == 0 and cand * W <= target_rows:
            th = cand
    if th == H and H > 1:
        for cand in range(H // 2, 0, -1):
            if H % cand == 0:
                th = cand
                break
    return th


def respath_block(x_nchw, w1, w2, g1, b1, g2, b2, g3, b3):
    """x_nchw: (N, Cin, H, W) float32 (PyTorch layout).  Returns (N, F, H, W)."""
    N, Cin, H, W = x_nchw.shape
    F = w1.shape[1]

    # --- layout / padding glue (wrapper-side XLA) ----------------------------
    x = jnp.transpose(x_nchw, (0, 2, 3, 1)).astype(jnp.float32)          # NHWC
    xp = jnp.pad(x, ((0, 0), (1, 1), (1, 1), (0, 0)), mode="reflect")     # ReflectionPad2d(1)

    TH = _pick_tile_h(H, W)
    nH = H // TH
    T = N * nH                    # number of spatial tiles == grid size
    ROWS = TH * W

    # Non-overlapping tiles of TH image rows, each carrying its 1-row H halo
    # (single HBM input; the old duplicate unpadded x is gone).
    xph = jnp.stack([xp[:, i * TH:i * TH + TH + 2] for i in range(nH)], axis=1)
    xph = xph.reshape(T, TH + 2, W + 2, Cin)

    # Combined conv weight: one matmul yields [y_3x3 | y_1x1].
    wc = jnp.zeros((9 * Cin, 2 * F), jnp.float32)
    wc = wc.at[:, :F].set(w2.astype(jnp.float32).reshape(9 * Cin, F))
    ctr = 4 * Cin                                        # centre tap (dy=1, dx=1)
    wc = wc.at[ctr:ctr + Cin, F:].set(w1.astype(jnp.float32))

    xph_spec = pl.BlockSpec((1, TH + 2, W + 2, Cin), lambda t: (t, 0, 0, 0))
    wc_spec = pl.BlockSpec((9 * Cin, 2 * F), lambda t: (0, 0))
    cparams = pltpu.CompilerParams(
        dimension_semantics=("parallel",),               # independent tiles -> megacore OK
        vmem_limit_bytes=32 * 1024 * 1024,               # explicit; fits v5e/v6e/v7x
    )

    # --- pass 1: conv + per-tile partial stats for BN1 / BN2 -----------------
    part12 = pl.pallas_call(
        _conv_stats_kernel,
        out_shape=jax.ShapeDtypeStruct((T, 8, 4 * F), jnp.float32),
        grid_spec=pl.GridSpec(
            grid=(T,),
            in_specs=[xph_spec, wc_spec],
            out_specs=pl.BlockSpec((1, 8, 4 * F), lambda t: (t, 0, 0)),
        ),
        compiler_params=cparams,
    )(xph, wc)

    cnt = float(N * H * W)
    s = part12[:, 0, :].sum(axis=0)                               # (4F,) global sums
    a2, c2 = _fold_bn(s[:F], s[2 * F:3 * F], cnt, g2, b2)         # 3x3 path -> BN2
    a1, c1 = _fold_bn(s[F:2 * F], s[3 * F:], cnt, g1, b1)         # 1x1 path -> BN1
    ab12 = jnp.stack([jnp.concatenate([a2, a1]), jnp.concatenate([c2, c1])])   # (2, 2F)
    ab12_spec = pl.BlockSpec((2, 2 * F), lambda t: (0, 0))

    # --- pass 2: BN1/BN2 + add + ReLU, partial stats for BN3 -----------------
    part3 = pl.pallas_call(
        _relu_stats_kernel,
        out_shape=jax.ShapeDtypeStruct((T, 8, 2 * F), jnp.float32),
        grid_spec=pl.GridSpec(
            grid=(T,),
            in_specs=[xph_spec, wc_spec, ab12_spec],
            out_specs=pl.BlockSpec((1, 8, 2 * F), lambda t: (t, 0, 0)),
        ),
        compiler_params=cparams,
    )(xph, wc, ab12)

    s3 = part3[:, 0, :].sum(axis=0)
    a3, c3 = _fold_bn(s3[:F], s3[F:], cnt, g3, b3)
    ab3 = jnp.stack([a3, c3])                                     # (2, F)
    ab3_spec = pl.BlockSpec((2, F), lambda t: (0, 0))

    # --- pass 3: apply BN3, emit output tiles --------------------------------
    out_tiles = pl.pallas_call(
        _final_kernel,
        out_shape=jax.ShapeDtypeStruct((T, ROWS, F), jnp.float32),
        grid_spec=pl.GridSpec(
            grid=(T,),
            in_specs=[xph_spec, wc_spec, ab12_spec, ab3_spec],
            out_specs=pl.BlockSpec((1, ROWS, F), lambda t: (t, 0, 0)),
        ),
        compiler_params=cparams,
    )(xph, wc, ab12, ab3)

    out = out_tiles.reshape(N, nH, TH, W, F).reshape(N, H, W, F)
    return jnp.transpose(out, (0, 3, 1, 2))                       # back to NCHW


# ---------------------------------------------------------------------------
# Pure-JAX reference (self-check only)
# ---------------------------------------------------------------------------
def _reference(x_nchw, w1, w2, g1, b1, g2, b2, g3, b3):
    x = jnp.transpose(x_nchw, (0, 2, 3, 1)).astype(jnp.float32)
    xp = jnp.pad(x, ((0, 0), (1, 1), (1, 1), (0, 0)), mode="reflect")
    N, H, W, Cin = x.shape
    F = w1.shape[1]
    y1 = jnp.einsum("nhwc,cf->nhwf", x, w1)
    y2 = jnp.zeros((N, H, W, F), jnp.float32)
    for dy in range(3):
        for dx in range(3):
            y2 = y2 + jnp.einsum("nhwc,cf->nhwf",
                                 xp[:, dy:dy + H, dx:dx + W, :], w2[dy, dx])

    def bn(y, g, b):
        m = jnp.mean(y, axis=(0, 1, 2), keepdims=True)
        v = jnp.mean((y - m) ** 2, axis=(0, 1, 2), keepdims=True)
        return (y - m) * jax.lax.rsqrt(v + EPS) * g + b

    z = jnp.maximum(bn(y1, g1, b1) + bn(y2, g2, b2), 0.0)
    return jnp.transpose(bn(z, g3, b3), (0, 3, 1, 2))


if __name__ == "__main__":
    # Small deterministic setup: N=2, Cin=4, F=8, H=W=16.
    N, Cin, F, H, W = 2, 4, 8, 16, 16
    key = jax.random.PRNGKey(0)
    kx, k1, k2, kg = jax.random.split(key, 4)

    x = jax.random.normal(kx, (N, Cin, H, W), jnp.float32)

    w1 = 0.2 * jax.random.normal(k1, (Cin, F), jnp.float32)        # 1x1 conv weight
    w2 = 0.2 * jax.random.normal(k2, (3, 3, Cin, F), jnp.float32)  # 3x3 conv weight
    gk = jax.random.split(kg, 6)
    g1 = 1.0 + 0.1 * jax.random.normal(gk[0], (F,), jnp.float32)
    b1 = 0.05 * jax.random.normal(gk[1], (F,), jnp.float32)
    g2 = 1.0 + 0.1 * jax.random.normal(gk[2], (F,), jnp.float32)
    b2 = 0.05 * jax.random.normal(gk[3], (F,), jnp.float32)
    g3 = 1.0 + 0.1 * jax.random.normal(gk[4], (F,), jnp.float32)
    b3 = 0.05 * jax.random.normal(gk[5], (F,), jnp.float32)

    fn = jax.jit(respath_block)
    out = fn(x, w1, w2, g1, b1, g2, b2, g3, b3)
    jax.block_until_ready(out)

    assert out.shape == (N, F, H, W), out.shape
    assert bool(jnp.all(jnp.isfinite(out)))

    ref = _reference(x, w1, w2, g1, b1, g2, b2, g3, b3)
    err = float(jnp.max(jnp.abs(out - ref)))
    assert err < 3e-3, f"max abs error vs pure-JAX reference: {err}"

    print("KERNEL_OK")
</pallas_src>

<mosaic_0001>
module attributes {stable_mosaic.version = 11 : i64} {
  func.func @_relu_stats_kernel(%arg0: i32, %arg1: memref<1x10x18x4xf32, #tpu.memory_space<vmem>>, %arg2: memref<36x16xf32, #tpu.memory_space<vmem>>, %arg3: memref<2x16xf32, #tpu.memory_space<vmem>>, %arg4: memref<1x8x16xf32, #tpu.memory_space<vmem>>) attributes {dimension_semantics = [#tpu.dimension_semantics<parallel>], iteration_bounds = array<i64: 4>, scalar_prefetch = 0 : i64, scratch_operands = 0 : i64, tpu.core_type = #tpu.core_type<tc>, window_params = [{transform_indices = @transform_0, window_bounds = array<i64: 1, 10, 18, 4>}, {pipeline_mode = #tpu.pipeline_mode<synchronous>, transform_indices = @transform_1, window_bounds = array<i64: 36, 16>}, {pipeline_mode = #tpu.pipeline_mode<synchronous>, transform_indices = @transform_2, window_bounds = array<i64: 2, 16>}, {transform_indices = @transform_3, window_bounds = array<i64: 1, 8, 16>}]} {
    %c0 = arith.constant 0 : index
    %c0_0 = arith.constant 0 : index
    %c0_1 = arith.constant 0 : index
    %c0_2 = arith.constant 0 : index
    %0 = vector.load %arg1[%c0, %c0_0, %c0_1, %c0_2] : memref<1x10x18x4xf32, #tpu.memory_space<vmem>>, vector<1x10x18x4xf32>
    %1 = vector.shape_cast %0 : vector<1x10x18x4xf32> to vector<10x18x4xf32>
    %2 = vector.extract_strided_slice %1 {offsets = [0, 0, 0], sizes = [8, 16, 4], strides = [1, 1, 1]} : vector<10x18x4xf32> to vector<8x16x4xf32>
    %3 = vector.extract_strided_slice %1 {offsets = [0, 1, 0], sizes = [8, 16, 4], strides = [1, 1, 1]} : vector<10x18x4xf32> to vector<8x16x4xf32>
    %4 = vector.extract_strided_slice %1 {offsets = [0, 2, 0], sizes = [8, 16, 4], strides = [1, 1, 1]} : vector<10x18x4xf32> to vector<8x16x4xf32>
    %5 = vector.extract_strided_slice %1 {offsets = [1, 0, 0], sizes = [8, 16, 4], strides = [1, 1, 1]} : vector<10x18x4xf32> to vector<8x16x4xf32>
    %6 = vector.extract_strided_slice %1 {offsets = [1, 1, 0], sizes = [8, 16, 4], strides = [1, 1, 1]} : vector<10x18x4xf32> to vector<8x16x4xf32>
    %7 = vector.extract_strided_slice %1 {offsets = [1, 2, 0], sizes = [8, 16, 4], strides = [1, 1, 1]} : vector<10x18x4xf32> to vector<8x16x4xf32>
    %8 = vector.extract_strided_slice %1 {offsets = [2, 0, 0], sizes = [8, 16, 4], strides = [1, 1, 1]} : vector<10x18x4xf32> to vector<8x16x4xf32>
    %9 = vector.extract_strided_slice %1 {offsets = [2, 1, 0], sizes = [8, 16, 4], strides = [1, 1, 1]} : vector<10x18x4xf32> to vector<8x16x4xf32>
    %10 = vector.extract_strided_slice %1 {offsets = [2, 2, 0], sizes = [8, 16, 4], strides = [1, 1, 1]} : vector<10x18x4xf32> to vector<8x16x4xf32>
    %11 = tpu.concatenate %2, %3, %4, %5, %6, %7, %8, %9, %10 in 2 : vector<8x16x4xf32>, vector<8x16x4xf32>, vector<8x16x4xf32>, vector<8x16x4xf32>, vector<8x16x4xf32>, vector<8x16x4xf32>, vector<8x16x4xf32>, vector<8x16x4xf32>, vector<8x16x4xf32> -> vector<8x16x36xf32>
    %12 = vector.shape_cast %11 : vector<8x16x36xf32> to vector<128x36xf32>
    %c0_3 = arith.constant 0 : index
    %c0_4 = arith.constant 0 : index
    %13 = vector.load %arg2[%c0_3, %c0_4] : memref<36x16xf32, #tpu.memory_space<vmem>>, vector<36x16xf32>
    %cst = arith.constant dense<0.000000e+00> : vector<128x16xf32>
    %14 = tpu.matmul %12, %13, %cst {dimension_numbers = #tpu.dot_dimension_numbers<[1], [0], [0], [1], [0, 0, 1, 1], [], []>} : vector<128x36xf32>, vector<36x16xf32>, vector<128x16xf32> -> vector<128x16xf32>
    %c0_5 = arith.constant 0 : index
    %c0_6 = arith.constant 0 : index
    %15 = vector.load %arg3[%c0_5, %c0_6] : memref<2x16xf32, #tpu.memory_space<vmem>>, vector<2x16xf32>
    %16 = vector.extract_strided_slice %15 {offsets = [0, 0], sizes = [1, 16], strides = [1, 1]} : vector<2x16xf32> to vector<1x16xf32>
    %17 = vector.broadcast %16 : vector<1x16xf32> to vector<128x16xf32>
    %18 = arith.mulf %14, %17 : vector<128x16xf32>
    %19 = vector.extract_strided_slice %15 {offsets = [1, 0], sizes = [1, 16], strides = [1, 1]} : vector<2x16xf32> to vector<1x16xf32>
    %20 = vector.broadcast %19 : vector<1x16xf32> to vector<128x16xf32>
    %21 = arith.addf %18, %20 : vector<128x16xf32>
    %22 = vector.extract_strided_slice %21 {offsets = [0, 0], sizes = [128, 8], strides = [1, 1]} : vector<128x16xf32> to vector<128x8xf32>
    %23 = vector.extract_strided_slice %21 {offsets = [0, 8], sizes = [128, 8], strides = [1, 1]} : vector<128x16xf32> to vector<128x8xf32>
    %24 = arith.addf %22, %23 : vector<128x8xf32>
    %cst_7 = arith.constant 0.000000e+00 : f32
    %25 = vector.broadcast %cst_7 : f32 to vector<128x8xf32>
    %26 = arith.maximumf %24, %25 : vector<128x8xf32>
    %27 = arith.mulf %26, %26 : vector<128x8xf32>
    %28 = tpu.concatenate %26, %27 in 1 : vector<128x8xf32>, vector<128x8xf32> -> vector<128x16xf32>
    %cst_8 = arith.constant 1.000000e+00 : f32
    %29 = vector.broadcast %cst_8 : f32 to vector<8x128xf32>
    %cst_9 = arith.constant dense<0.000000e+00> : vector<8x16xf32>
    %30 = tpu.matmul %29, %28, %cst_9 {dimension_numbers = #tpu.dot_dimension_numbers<[1], [0], [0], [1], [0, 0, 1, 1], [], []>} : vector<8x128xf32>, vector<128x16xf32>, vector<8x16xf32> -> vector<8x16xf32>
    %31 = vector.shape_cast %30 : vector<8x16xf32> to vector<1x8x16xf32>
    %c0_10 = arith.constant 0 : index
    %c0_11 = arith.constant 0 : index
    %c0_12 = arith.constant 0 : index
    %32 = vector.load %arg4[%c0_10, %c0_11, %c0_12] : memref<1x8x16xf32, #tpu.memory_space<vmem>>, vector<1x8x16xf32>
    tpu.vector_store %arg4[%c0_10, %c0_11, %c0_12], %31 {strides = array<i32>} : memref<1x8x16xf32, #tpu.memory_space<vmem>>, vector<1x8x16xf32>,
    return
  }
  func.func @transform_0(%arg0: i32) -> (i32, i32, i32, i32) {
    %c0_i32 = arith.constant 0 : i32
    %c0_i32_0 = arith.constant 0 : i32
    %c0_i32_1 = arith.constant 0 : i32
    %c0_i32_2 = arith.constant 0 : i32
    return %arg0, %c0_i32, %c0_i32_0, %c0_i32_1 : i32, i32, i32, i32
  }
  func.func @transform_1(%arg0: i32) -> (i32, i32) {
    %c0_i32 = arith.constant 0 : i32
    %c0_i32_0 = arith.constant 0 : i32
    %c0_i32_1 = arith.constant 0 : i32
    return %c0_i32, %c0_i32_0 : i32, i32
  }
  func.func @transform_2(%arg0: i32) -> (i32, i32) {
    %c0_i32 = arith.constant 0 : i32
    %c0_i32_0 = arith.constant 0 : i32
    %c0_i32_1 = arith.constant 0 : i32
    return %c0_i32, %c0_i32_0 : i32, i32
  }
  func.func @transform_3(%arg0: i32) -> (i32, i32, i32) {
    %c0_i32 = arith.constant 0 : i32
    %c0_i32_0 = arith.constant 0 : i32
    %c0_i32_1 = arith.constant 0 : i32
    return %arg0, %c0_i32, %c0_i32_0 : i32, i32, i32
  }
}

module attributes {stable_mosaic.version = 11 : i64} {
  func.func @_conv_stats_kernel(%arg0: i32, %arg1: memref<1x10x18x4xf32, #tpu.memory_space<vmem>>, %arg2: memref<36x16xf32, #tpu.memory_space<vmem>>, %arg3: memref<1x8x32xf32, #tpu.memory_space<vmem>>) attributes {dimension_semantics = [#tpu.dimension_semantics<parallel>], iteration_bounds = array<i64: 4>, scalar_prefetch = 0 : i64, scratch_operands = 0 : i64, tpu.core_type = #tpu.core_type<tc>, window_params = [{transform_indices = @transform_0, window_bounds = array<i64: 1, 10, 18, 4>}, {pipeline_mode = #tpu.pipeline_mode<synchronous>, transform_indices = @transform_1, window_bounds = array<i64: 36, 16>}, {transform_indices = @transform_2, window_bounds = array<i64: 1, 8, 32>}]} {
    %c0 = arith.constant 0 : index
    %c0_0 = arith.constant 0 : index
    %c0_1 = arith.constant 0 : index
    %c0_2 = arith.constant 0 : index
    %0 = vector.load %arg1[%c0, %c0_0, %c0_1, %c0_2] : memref<1x10x18x4xf32, #tpu.memory_space<vmem>>, vector<1x10x18x4xf32>
    %1 = vector.shape_cast %0 : vector<1x10x18x4xf32> to vector<10x18x4xf32>
    %2 = vector.extract_strided_slice %1 {offsets = [0, 0, 0], sizes = [8, 16, 4], strides = [1, 1, 1]} : vector<10x18x4xf32> to vector<8x16x4xf32>
    %3 = vector.extract_strided_slice %1 {offsets = [0, 1, 0], sizes = [8, 16, 4], strides = [1, 1, 1]} : vector<10x18x4xf32> to vector<8x16x4xf32>
    %4 = vector.extract_strided_slice %1 {offsets = [0, 2, 0], sizes = [8, 16, 4], strides = [1, 1, 1]} : vector<10x18x4xf32> to vector<8x16x4xf32>
    %5 = vector.extract_strided_slice %1 {offsets = [1, 0, 0], sizes = [8, 16, 4], strides = [1, 1, 1]} : vector<10x18x4xf32> to vector<8x16x4xf32>
    %6 = vector.extract_strided_slice %1 {offsets = [1, 1, 0], sizes = [8, 16, 4], strides = [1, 1, 1]} : vector<10x18x4xf32> to vector<8x16x4xf32>
    %7 = vector.extract_strided_slice %1 {offsets = [1, 2, 0], sizes = [8, 16, 4], strides = [1, 1, 1]} : vector<10x18x4xf32> to vector<8x16x4xf32>
    %8 = vector.extract_strided_slice %1 {offsets = [2, 0, 0], sizes = [8, 16, 4], strides = [1, 1, 1]} : vector<10x18x4xf32> to vector<8x16x4xf32>
    %9 = vector.extract_strided_slice %1 {offsets = [2, 1, 0], sizes = [8, 16, 4], strides = [1, 1, 1]} : vector<10x18x4xf32> to vector<8x16x4xf32>
    %10 = vector.extract_strided_slice %1 {offsets = [2, 2, 0], sizes = [8, 16, 4], strides = [1, 1, 1]} : vector<10x18x4xf32> to vector<8x16x4xf32>
    %11 = tpu.concatenate %2, %3, %4, %5, %6, %7, %8, %9, %10 in 2 : vector<8x16x4xf32>, vector<8x16x4xf32>, vector<8x16x4xf32>, vector<8x16x4xf32>, vector<8x16x4xf32>, vector<8x16x4xf32>, vector<8x16x4xf32>, vector<8x16x4xf32>, vector<8x16x4xf32> -> vector<8x16x36xf32>
    %12 = vector.shape_cast %11 : vector<8x16x36xf32> to vector<128x36xf32>
    %c0_3 = arith.constant 0 : index
    %c0_4 = arith.constant 0 : index
    %13 = vector.load %arg2[%c0_3, %c0_4] : memref<36x16xf32, #tpu.memory_space<vmem>>, vector<36x16xf32>
    %cst = arith.constant dense<0.000000e+00> : vector<128x16xf32>
    %14 = tpu.matmul %12, %13, %cst {dimension_numbers = #tpu.dot_dimension_numbers<[1], [0], [0], [1], [0, 0, 1, 1], [], []>} : vector<128x36xf32>, vector<36x16xf32>, vector<128x16xf32> -> vector<128x16xf32>
    %15 = arith.mulf %14, %14 : vector<128x16xf32>
    %16 = tpu.concatenate %14, %15 in 1 : vector<128x16xf32>, vector<128x16xf32> -> vector<128x32xf32>
    %cst_5 = arith.constant 1.000000e+00 : f32
    %17 = vector.broadcast %cst_5 : f32 to vector<8x128xf32>
    %cst_6 = arith.constant dense<0.000000e+00> : vector<8x32xf32>
    %18 = tpu.matmul %17, %16, %cst_6 {dimension_numbers = #tpu.dot_dimension_numbers<[1], [0], [0], [1], [0, 0, 1, 1], [], []>} : vector<8x128xf32>, vector<128x32xf32>, vector<8x32xf32> -> vector<8x32xf32>
    %19 = vector.shape_cast %18 : vector<8x32xf32> to vector<1x8x32xf32>
    %c0_7 = arith.constant 0 : index
    %c0_8 = arith.constant 0 : index
    %c0_9 = arith.constant 0 : index
    %20 = vector.load %arg3[%c0_7, %c0_8, %c0_9] : memref<1x8x32xf32, #tpu.memory_space<vmem>>, vector<1x8x32xf32>
    tpu.vector_store %arg3[%c0_7, %c0_8, %c0_9], %19 {strides = array<i32>} : memref<1x8x32xf32, #tpu.memory_space<vmem>>, vector<1x8x32xf32>,
    return
  }
  func.func @transform_0(%arg0: i32) -> (i32, i32, i32, i32) {
    %c0_i32 = arith.constant 0 : i32
    %c0_i32_0 = arith.constant 0 : i32
    %c0_i32_1 = arith.constant 0 : i32
    %c0_i32_2 = arith.constant 0 : i32
    return %arg0, %c0_i32, %c0_i32_0, %c0_i32_1 : i32, i32, i32, i32
  }
  func.func @transform_1(%arg0: i32) -> (i32, i32) {
    %c0_i32 = arith.constant 0 : i32
    %c0_i32_0 = arith.constant 0 : i32
    %c0_i32_1 = arith.constant 0 : i32
    return %c0_i32, %c0_i32_0 : i32, i32
  }
  func.func @transform_2(%arg0: i32) -> (i32, i32, i32) {
    %c0_i32 = arith.constant 0 : i32
    %c0_i32_0 = arith.constant 0 : i32
    %c0_i32_1 = arith.constant 0 : i32
    return %arg0, %c0_i32, %c0_i32_0 : i32, i32, i32
  }
}

module attributes {stable_mosaic.version = 11 : i64} {
  func.func @_final_kernel(%arg0: i32, %arg1: memref<1x10x18x4xf32, #tpu.memory_space<vmem>>, %arg2: memref<36x16xf32, #tpu.memory_space<vmem>>, %arg3: memref<2x16xf32, #tpu.memory_space<vmem>>, %arg4: memref<2x8xf32, #tpu.memory_space<vmem>>, %arg5: memref<1x128x8xf32, #tpu.memory_space<vmem>>) attributes {dimension_semantics = [#tpu.dimension_semantics<parallel>], iteration_bounds = array<i64: 4>, scalar_prefetch = 0 : i64, scratch_operands = 0 : i64, tpu.core_type = #tpu.core_type<tc>, window_params = [{transform_indices = @transform_0, window_bounds = array<i64: 1, 10, 18, 4>}, {pipeline_mode = #tpu.pipeline_mode<synchronous>, transform_indices = @transform_1, window_bounds = array<i64: 36, 16>}, {pipeline_mode = #tpu.pipeline_mode<synchronous>, transform_indices = @transform_2, window_bounds = array<i64: 2, 16>}, {pipeline_mode = #tpu.pipeline_mode<synchronous>, transform_indices = @transform_3, window_bounds = array<i64: 2, 8>}, {transform_indices = @transform_4, window_bounds = array<i64: 1, 128, 8>}]} {
    %c0 = arith.constant 0 : index
    %c0_0 = arith.constant 0 : index
    %c0_1 = arith.constant 0 : index
    %c0_2 = arith.constant 0 : index
    %0 = vector.load %arg1[%c0, %c0_0, %c0_1, %c0_2] : memref<1x10x18x4xf32, #tpu.memory_space<vmem>>, vector<1x10x18x4xf32>
    %1 = vector.shape_cast %0 : vector<1x10x18x4xf32> to vector<10x18x4xf32>
    %2 = vector.extract_strided_slice %1 {offsets = [0, 0, 0], sizes = [8, 16, 4], strides = [1, 1, 1]} : vector<10x18x4xf32> to vector<8x16x4xf32>
    %3 = vector.extract_strided_slice %1 {offsets = [0, 1, 0], sizes = [8, 16, 4], strides = [1, 1, 1]} : vector<10x18x4xf32> to vector<8x16x4xf32>
    %4 = vector.extract_strided_slice %1 {offsets = [0, 2, 0], sizes = [8, 16, 4], strides = [1, 1, 1]} : vector<10x18x4xf32> to vector<8x16x4xf32>
    %5 = vector.extract_strided_slice %1 {offsets = [1, 0, 0], sizes = [8, 16, 4], strides = [1, 1, 1]} : vector<10x18x4xf32> to vector<8x16x4xf32>
    %6 = vector.extract_strided_slice %1 {offsets = [1, 1, 0], sizes = [8, 16, 4], strides = [1, 1, 1]} : vector<10x18x4xf32> to vector<8x16x4xf32>
    %7 = vector.extract_strided_slice %1 {offsets = [1, 2, 0], sizes = [8, 16, 4], strides = [1, 1, 1]} : vector<10x18x4xf32> to vector<8x16x4xf32>
    %8 = vector.extract_strided_slice %1 {offsets = [2, 0, 0], sizes = [8, 16, 4], strides = [1, 1, 1]} : vector<10x18x4xf32> to vector<8x16x4xf32>
    %9 = vector.extract_strided_slice %1 {offsets = [2, 1, 0], sizes = [8, 16, 4], strides = [1, 1, 1]} : vector<10x18x4xf32> to vector<8x16x4xf32>
    %10 = vector.extract_strided_slice %1 {offsets = [2, 2, 0], sizes = [8, 16, 4], strides = [1, 1, 1]} : vector<10x18x4xf32> to vector<8x16x4xf32>
    %11 = tpu.concatenate %2, %3, %4, %5, %6, %7, %8, %9, %10 in 2 : vector<8x16x4xf32>, vector<8x16x4xf32>, vector<8x16x4xf32>, vector<8x16x4xf32>, vector<8x16x4xf32>, vector<8x16x4xf32>, vector<8x16x4xf32>, vector<8x16x4xf32>, vector<8x16x4xf32> -> vector<8x16x36xf32>
    %12 = vector.shape_cast %11 : vector<8x16x36xf32> to vector<128x36xf32>
    %c0_3 = arith.constant 0 : index
    %c0_4 = arith.constant 0 : index
    %13 = vector.load %arg2[%c0_3, %c0_4] : memref<36x16xf32, #tpu.memory_space<vmem>>, vector<36x16xf32>
    %cst = arith.constant dense<0.000000e+00> : vector<128x16xf32>
    %14 = tpu.matmul %12, %13, %cst {dimension_numbers = #tpu.dot_dimension_numbers<[1], [0], [0], [1], [0, 0, 1, 1], [], []>} : vector<128x36xf32>, vector<36x16xf32>, vector<128x16xf32> -> vector<128x16xf32>
    %c0_5 = arith.constant 0 : index
    %c0_6 = arith.constant 0 : index
    %15 = vector.load %arg3[%c0_5, %c0_6] : memref<2x16xf32, #tpu.memory_space<vmem>>, vector<2x16xf32>
    %16 = vector.extract_strided_slice %15 {offsets = [0, 0], sizes = [1, 16], strides = [1, 1]} : vector<2x16xf32> to vector<1x16xf32>
    %17 = vector.broadcast %16 : vector<1x16xf32> to vector<128x16xf32>
    %18 = arith.mulf %14, %17 : vector<128x16xf32>
    %19 = vector.extract_strided_slice %15 {offsets = [1, 0], sizes = [1, 16], strides = [1, 1]} : vector<2x16xf32> to vector<1x16xf32>
    %20 = vector.broadcast %19 : vector<1x16xf32> to vector<128x16xf32>
    %21 = arith.addf %18, %20 : vector<128x16xf32>
    %22 = vector.extract_strided_slice %21 {offsets = [0, 0], sizes = [128, 8], strides = [1, 1]} : vector<128x16xf32> to vector<128x8xf32>
    %23 = vector.extract_strided_slice %21 {offsets = [0, 8], sizes = [128, 8], strides = [1, 1]} : vector<128x16xf32> to vector<128x8xf32>
    %24 = arith.addf %22, %23 : vector<128x8xf32>
    %cst_7 = arith.constant 0.000000e+00 : f32
    %25 = vector.broadcast %cst_7 : f32 to vector<128x8xf32>
    %26 = arith.maximumf %24, %25 : vector<128x8xf32>
    %c0_8 = arith.constant 0 : index
    %c0_9 = arith.constant 0 : index
    %27 = vector.load %arg4[%c0_8, %c0_9] : memref<2x8xf32, #tpu.memory_space<vmem>>, vector<2x8xf32>
    %28 = vector.extract_strided_slice %27 {offsets = [0, 0], sizes = [1, 8], strides = [1, 1]} : vector<2x8xf32> to vector<1x8xf32>
    %29 = vector.broadcast %28 : vector<1x8xf32> to vector<128x8xf32>
    %30 = arith.mulf %26, %29 : vector<128x8xf32>
    %31 = vector.extract_strided_slice %27 {offsets = [1, 0], sizes = [1, 8], strides = [1, 1]} : vector<2x8xf32> to vector<1x8xf32>
    %32 = vector.broadcast %31 : vector<1x8xf32> to vector<128x8xf32>
    %33 = arith.addf %30, %32 : vector<128x8xf32>
    %34 = vector.shape_cast %33 : vector<128x8xf32> to vector<1x128x8xf32>
    %c0_10 = arith.constant 0 : index
    %c0_11 = arith.constant 0 : index
    %c0_12 = arith.constant 0 : index
    %35 = vector.load %arg5[%c0_10, %c0_11, %c0_12] : memref<1x128x8xf32, #tpu.memory_space<vmem>>, vector<1x128x8xf32>
    tpu.vector_store %arg5[%c0_10, %c0_11, %c0_12], %34 {strides = array<i32>} : memref<1x128x8xf32, #tpu.memory_space<vmem>>, vector<1x128x8xf32>,
    return
  }
  func.func @transform_0(%arg0: i32) -> (i32, i32, i32, i32) {
    %c0_i32 = arith.constant 0 : i32
    %c0_i32_0 = arith.constant 0 : i32
    %c0_i32_1 = arith.constant 0 : i32
    %c0_i32_2 = arith.constant 0 : i32
    return %arg0, %c0_i32, %c0_i32_0, %c0_i32_1 : i32, i32, i32, i32
  }
  func.func @transform_1(%arg0: i32) -> (i32, i32) {
    %c0_i32 = arith.constant 0 : i32
    %c0_i32_0 = arith.constant 0 : i32
    %c0_i32_1 = arith.constant 0 : i32
    return %c0_i32, %c0_i32_0 : i32, i32
  }
  func.func @transform_2(%arg0: i32) -> (i32, i32) {
    %c0_i32 = arith.constant 0 : i32
    %c0_i32_0 = arith.constant 0 : i32
    %c0_i32_1 = arith.constant 0 : i32
    return %c0_i32, %c0_i32_0 : i32, i32
  }
  func.func @transform_3(%arg0: i32) -> (i32, i32) {
    %c0_i32 = arith.constant 0 : i32
    %c0_i32_0 = arith.constant 0 : i32
    %c0_i32_1 = arith.constant 0 : i32
    return %c0_i32, %c0_i32_0 : i32, i32
  }
  func.func @transform_4(%arg0: i32) -> (i32, i32, i32) {
    %c0_i32 = arith.constant 0 : i32
    %c0_i32_0 = arith.constant 0 : i32
    %c0_i32_1 = arith.constant 0 : i32
    return %arg0, %c0_i32, %c0_i32_0 : i32, i32, i32
  }
}

</mosaic_0001>

<llo_original>
// kernel: respath_block.5
$region0: #{respath_block.5}
  #allocation0 [shape = 'u32[]', space=smem, size = 0x4, offset = 0x4, fixed_abs, tag = 'smem constant byte address 0x4 - core index']
  #allocation1 [shape = 'u32[144,128]{1,0:T(1,128)}', space=vmem, size = 0x12000, scoped, tag = 'internal scratch']
  %s0 = inlined_call_operand.vmem [shape: f32[4,10,18,4], index: 0, kind: input, shape index: {}]
  %s1 = inlined_call_operand.vmem [shape: f32[36,16], index: 1, kind: input, shape index: {}]
  %s2 = inlined_call_operand.vmem [shape: f32[2,16], index: 2, kind: input, shape index: {}]
  %s3 = inlined_call_operand.vmem [shape: f32[2,8], index: 3, kind: input, shape index: {}]
  %s4 = inlined_call_operand.vmem [shape: f32[4,128,8], index: 4, kind: output, shape index: {}]
  %s5 = sld [smem:[#allocation0]]
  $region49: #{respath_block.5} parent=0
    _
  %s7 = ssub.s32 1, %s5
  %s8 = scalar_select 0, %s7, %s5
  loop: start=0, step=1, limit=6
  $region2: #{respath_block.5} parent=0 // loop_pre_header
    _
  $region3: #{respath_block.5} parent=0 // loop_header
    %s10 = sphi 0, %s14
    %p11 = scmp.ge.s32.totalorder %s10, 6
    %s20 = sphi 0, %s22
    %s23 = sphi 0, %s20
    %s24 = sphi 0, %s23
    %s40 = sphi 0, %s24
    %s44 = sphi 0, %s44
    %s46 = sphi 0, %s44
    %s47 = sphi 0, %s46
    %s61 = sphi 0, %s47
    %s65 = sphi 0, %s65
    %s67 = sphi 0, %s65
    %s68 = sphi 0, %s67
    %s82 = sphi 0, %s68
    %s86 = sphi 0, %s86
    %s88 = sphi 0, %s86
    %s89 = sphi 0, %s88
    %s103 = sphi 0, %s89
    %s109 = sphi 0, %s111
    %s112 = sphi 0, %s109
    %s113 = sphi 0, %s112
    %s129 = sphi 0, %s113
  $region4: #{respath_block.5} parent=0 // loop_header_branch
    %13 = sbr.rel (%p11) target = $region8
  $region5: #{respath_block.5} parent=0 // loop_body
    %s15 = ssub.s32 %s10, 1
    %s16 = ssub.s32 %s10, 2
    %s17 = sadd.s32 %s10, 1
    %s18 = ssub.s32 %s10, %s17
    %p19 = scmp.eq.s32.totalorder %s18, 0
    %s21 = sadd.s32 %s20, 1
    %s22 = scalar_select %p19, %s20, %s21
    %p25 = pneg %p19
    %p26 = scmp.eq.s32.totalorder %s10, 3
    %p27 = por %p25, %p26
    %p28 = scmp.ne.s32.totalorder %s20, %s23
    %p29 = scmp.eq.s32.totalorder %s10, 0
    %p30 = por %p28, %p29
    %p31 = scmp.ne.s32.totalorder %s20, %s23
    %p32 = scmp.eq.s32.totalorder %s15, 3
    %p33 = por %p31, %p32
    %p34 = scmp.ne.s32.totalorder %s23, %s24
    %p35 = scmp.eq.s32.totalorder %s15, 0
    %p36 = por %p34, %p35
    %p37 = scmp.ne.s32.totalorder %s23, %s24
    %p38 = scmp.eq.s32.totalorder %s16, 3
    %p39 = por %p37, %p38
    %p41 = scmp.ne.s32.totalorder %s24, %s40
    %p42 = scmp.eq.s32.totalorder %s16, 0
    %p43 = por %p41, %p42
    %s45 = sadd.s32 %s44, 1
    %p48 = scmp.eq.s32.totalorder %s10, 3
    %p49 = scmp.ne.s32.totalorder %s44, %s46
    %p50 = scmp.eq.s32.totalorder %s10, 0
    %p51 = por %p49, %p50
    %p52 = scmp.ne.s32.totalorder %s44, %s46
    %p53 = scmp.eq.s32.totalorder %s15, 3
    %p54 = por %p52, %p53
    %p55 = scmp.ne.s32.totalorder %s46, %s47
    %p56 = scmp.eq.s32.totalorder %s15, 0
    %p57 = por %p55, %p56
    %p58 = scmp.ne.s32.totalorder %s46, %s47
    %p59 = scmp.eq.s32.totalorder %s16, 3
    %p60 = por %p58, %p59
    %p62 = scmp.ne.s32.totalorder %s47, %s61
    %p63 = scmp.eq.s32.totalorder %s16, 0
    %p64 = por %p62, %p63
    %s66 = sadd.s32 %s65, 1
    %p69 = scmp.eq.s32.totalorder %s10, 3
    %p70 = scmp.ne.s32.totalorder %s65, %s67
    %p71 = scmp.eq.s32.totalorder %s10, 0
    %p72 = por %p70, %p71
    %p73 = scmp.ne.s32.totalorder %s65, %s67
    %p74 = scmp.eq.s32.totalorder %s15, 3
    %p75 = por %p73, %p74
    %p76 = scmp.ne.s32.totalorder %s67, %s68
    %p77 = scmp.eq.s32.totalorder %s15, 0
    %p78 = por %p76, %p77
    %p79 = scmp.ne.s32.totalorder %s67, %s68
    %p80 = scmp.eq.s32.totalorder %s16, 3
    %p81 = por %p79, %p80
    %p83 = scmp.ne.s32.totalorder %s68, %s82
    %p84 = scmp.eq.s32.totalorder %s16, 0
    %p85 = por %p83, %p84
    %s87 = sadd.s32 %s86, 1
    %p90 = scmp.eq.s32.totalorder %s10, 3
    %p91 = scmp.ne.s32.totalorder %s86, %s88
    %p92 = scmp.eq.s32.totalorder %s10, 0
    %p93 = por %p91, %p92
    %p94 = scmp.ne.s32.totalorder %s86, %s88
    %p95 = scmp.eq.s32.totalorder %s15, 3
    %p96 = por %p94, %p95
    %p97 = scmp.ne.s32.totalorder %s88, %s89
    %p98 = scmp.eq.s32.totalorder %s15, 0
    %p99 = por %p97, %p98
    %p100 = scmp.ne.s32.totalorder %s88, %s89
    %p101 = scmp.eq.s32.totalorder %s16, 3
    %p102 = por %p100, %p101
    %p104 = scmp.ne.s32.totalorder %s89, %s103
    %p105 = scmp.eq.s32.totalorder %s16, 0
    %p106 = por %p104, %p105
    %s107 = ssub.s32 %s10, %s17
    %p108 = scmp.eq.s32.totalorder %s107, 0
    %s110 = sadd.s32 %s109, 1
    %s111 = scalar_select %p108, %s109, %s110
    %p114 = pneg %p108
    %p115 = scmp.eq.s32.totalorder %s10, 3
    %p116 = por %p114, %p115
    %p117 = scmp.ne.s32.totalorder %s109, %s112
    %p118 = scmp.eq.s32.totalorder %s10, 0
    %p119 = por %p117, %p118
    %p120 = scmp.ne.s32.totalorder %s109, %s112
    %p121 = scmp.eq.s32.totalorder %s15, 3
    %p122 = por %p120, %p121
    %p123 = scmp.ne.s32.totalorder %s112, %s113
    %p124 = scmp.eq.s32.totalorder %s15, 0
    %p125 = por %p123, %p124
    %p126 = scmp.ne.s32.totalorder %s112, %s113
    %p127 = scmp.eq.s32.totalorder %s16, 3
    %p128 = por %p126, %p127
    %p130 = scmp.ne.s32.totalorder %s113, %s129
    %p131 = scmp.eq.s32.totalorder %s16, 0
    %p132 = por %p130, %p131
    %p133 = scmp.le.s32.totalorder 1, %s10
    %p134 = scmp.lt.s32.totalorder %s10, 5
    %p135 = pnand %p133, %p134
    %p136 = pneg %p135
    // Predicated region
    $region9: #{respath_block.5} parent=5 // pred_check
      _
    $region10: #{respath_block.5} parent=5 // pred_check_branch
      %138 = sbr.rel (%p135) target = $region12
    $region11: #{respath_block.5} parent=5 // pred_region
      %s139 = ssub.s32 %s10, 1
      // Predicated region
      $region13: #{respath_block.5} parent=11 // pred_check
        %p140 = pneg %p57
      $region14: #{respath_block.5} parent=11 // pred_check_branch
        %142 = sbr.rel (%p140) target = $region16
      $region15: #{respath_block.5} parent=11 // pred_region
        _
      $region16: #{respath_block.5} parent=11 // pred_fallthru
        _
      // Predicated region
      $region17: #{respath_block.5} parent=11 // pred_check
        %p143 = pneg %p78
      $region18: #{respath_block.5} parent=11 // pred_check_branch
        %145 = sbr.rel (%p143) target = $region20
      $region19: #{respath_block.5} parent=11 // pred_region
        _
      $region20: #{respath_block.5} parent=11 // pred_fallthru
        _
      // Predicated region
      $region21: #{respath_block.5} parent=11 // pred_check
        %p146 = pneg %p99
      $region22: #{respath_block.5} parent=11 // pred_check_branch
        %148 = sbr.rel (%p146) target = $region24
      $region23: #{respath_block.5} parent=11 // pred_region
        _
      $region24: #{respath_block.5} parent=11 // pred_fallthru
        _
    $region12: #{respath_block.5} parent=5 // pred_fallthru
      _
    %p149 = scmp.lt.s32.totalorder %s10, 4
    // Predicated region
    $region25: #{respath_block.5} parent=5 // pred_check
      %p150 = pneg %p149
    $region26: #{respath_block.5} parent=5 // pred_check_branch
      %152 = sbr.rel (%p150) target = $region28
    $region27: #{respath_block.5} parent=5 // pred_region
      // Predicated region
      $region29: #{respath_block.5} parent=27 // pred_check
        %p153 = pneg %p30
      $region30: #{respath_block.5} parent=27 // pred_check_branch
        %155 = sbr.rel (%p153) target = $region32
      $region31: #{respath_block.5} parent=27 // pred_region
        %p156 = scmp.lt.s32.totalorder %s10, 3
        %s157 = scalar_select %p156, %s10, 3
        %s158 = smul.addr %s157, 30
        %s159 = smul.addr %s158, 8
        %s160 = scalar_lea.vmem %s0, %s159
      $region32: #{respath_block.5} parent=27 // pred_fallthru
        _
    $region28: #{respath_block.5} parent=5 // pred_fallthru
      _
    %p161 = scmp.le.s32.totalorder 1, %s10
    %p162 = scmp.lt.s32.totalorder %s10, 5
    %p163 = pnand %p161, %p162
    %p164 = pneg %p163
    // Predicated region
    $region33: #{respath_block.5} parent=5 // pred_check
      _
    $region34: #{respath_block.5} parent=5 // pred_check_branch
      %166 = sbr.rel (%p163) target = $region36
    $region35: #{respath_block.5} parent=5 // pred_region
      %s167 = ssub.s32 %s10, 1
      %p168 = scmp.lt.s32.totalorder %s15, 3
      %s169 = scalar_select %p168, %s15, 3
      %s170 = smul.addr %s169, 30
      %s171 = smul.addr %s170, 8
      %s172 = scalar_lea.vmem %s0, %s171
      %p173 = pneg %p36
      %p174 = pneg %p33
      %p175 = pneg %p57
      %p176 = pneg %p54
      %p177 = pneg %p78
      %p178 = pneg %p75
      %p179 = pneg %p99
      %p180 = pneg %p96
      %p181 = pneg %p125
      %p182 = pneg %p122
      %p183 = scmp.lt.s32.totalorder %s15, 3
      %s184 = scalar_select %p183, %s15, 3
      %s185 = smul.addr %s184, 16
      %s186 = smul.addr %s185, 8
      %s187 = scalar_lea.vmem %s4, %s186
      %p188 = scmp.lt.s32.totalorder %s15, 3
      %s189 = scalar_select %p188, %s15, 3
      %s190 = smul.addr %s189, 30
      %s191 = smul.addr %s190, 8
      %s192 = scalar_lea.vmem %s0, %s191
      %p193 = scmp.lt.s32.totalorder %s15, 3
      %s194 = scalar_select %p193, %s15, 3
      %s195 = smul.addr %s194, 16
      %s196 = smul.addr %s195, 8
      %s197 = scalar_lea.vmem %s4, %s196
      %v198 = vld [vmem:[%s192] sm:$0xff]
      %v199 = vld [vmem:[%s192 + $0x8] sm:$0xff]
      %v200 = vld [vmem:[%s192 + $0x10] sm:$0x3]
      %v201 = vld [vmem:[%s192 + $0x18] sm:$0xff]
      %v202 = vld [vmem:[%s192 + $0x20] sm:$0xff]
      %v203 = vld [vmem:[%s192 + $0x28] sm:$0x3]
      %v204 = vld [vmem:[%s192 + $0x30] sm:$0xff]
      %v205 = vld [vmem:[%s192 + $0x38] sm:$0xff]
      %v206 = vld [vmem:[%s192 + $0x40] sm:$0x3]
      %v207 = vld [vmem:[%s192 + $0x48] sm:$0xff]
      %v208 = vld [vmem:[%s192 + $0x50] sm:$0xff]
      %v209 = vld [vmem:[%s192 + $0x58] sm:$0x3]
      %v210 = vld [vmem:[%s192 + $0x60] sm:$0xff]
      %v211 = vld [vmem:[%s192 + $0x68] sm:$0xff]
      %v212 = vld [vmem:[%s192 + $0x70] sm:$0x3]
      %v213 = vld [vmem:[%s192 + $0x78] sm:$0xff]
      %v214 = vld [vmem:[%s192 + $0x80] sm:$0xff]
      %v215 = vld [vmem:[%s192 + $0x88] sm:$0x3]
      %v216 = vld [vmem:[%s192 + $0x90] sm:$0xff]
      %v217 = vld [vmem:[%s192 + $0x98] sm:$0xff]
      %v218 = vld [vmem:[%s192 + $0xa0] sm:$0x3]
      %v219 = vld [vmem:[%s192 + $0xa8] sm:$0xff]
      %v220 = vld [vmem:[%s192 + $0xb0] sm:$0xff]
      %v221 = vld [vmem:[%s192 + $0xb8] sm:$0x3]
      %v222 = vld [vmem:[%s192 + $0xc0] sm:$0xff]
      %v223 = vld [vmem:[%s192 + $0xc8] sm:$0xff]
      %v224 = vld [vmem:[%s192 + $0xd0] sm:$0x3]
      %v225 = vld [vmem:[%s192 + $0xd8] sm:$0xff]
      %v226 = vld [vmem:[%s192 + $0xe0] sm:$0xff]
      %v227 = vld [vmem:[%s192 + $0xe8] sm:$0x3]
      %vm252 = vcmask 1046528
      %v253 = vrot.slane %v198, 1
      %v254 = vrot.slane %v199, 1
      %v255 = vsel %vm252, %v253, %v254
      %v256 = vrot.slane %v200, 1
      %v257 = vsel %vm252, %v254, %v256
      %v258 = vrot.slane %v201, 1
      %v259 = vrot.slane %v202, 1
      %v260 = vsel %vm252, %v258, %v259
      %v261 = vrot.slane %v203, 1
      %v262 = vsel %vm252, %v259, %v261
      %v263 = vrot.slane %v204, 1
      %v264 = vrot.slane %v205, 1
      %v265 = vsel %vm252, %v263, %v264
      %v266 = vrot.slane %v206, 1
      %v267 = vsel %vm252, %v264, %v266
      %v268 = vrot.slane %v207, 1
      %v269 = vrot.slane %v208, 1
      %v270 = vsel %vm252, %v268, %v269
      %v271 = vrot.slane %v209, 1
      %v272 = vsel %vm252, %v269, %v271
      %v273 = vrot.slane %v210, 1
      %v274 = vrot.slane %v211, 1
      %v275 = vsel %vm252, %v273, %v274
      %v276 = vrot.slane %v212, 1
      %v277 = vsel %vm252, %v274, %v276
      %v278 = vrot.slane %v213, 1
      %v279 = vrot.slane %v214, 1
      %v280 = vsel %vm252, %v278, %v279
      %v281 = vrot.slane %v215, 1
      %v282 = vsel %vm252, %v279, %v281
      %v283 = vrot.slane %v216, 1
      %v284 = vrot.slane %v217, 1
      %v285 = vsel %vm252, %v283, %v284
      %v286 = vrot.slane %v218, 1
      %v287 = vsel %vm252, %v284, %v286
      %v288 = vrot.slane %v219, 1
      %v289 = vrot.slane %v220, 1
      %v290 = vsel %vm252, %v288, %v289
      %v291 = vrot.slane %v221, 1
      %v292 = vsel %vm252, %v289, %v291
      %293 = vrot.lane.b32.xlu0 %v255, 4
      %v294 = vpop.permute.xlu0 %293
      %295 = vrot.lane.b32.xlu0 %v257, 4
      %v296 = vpop.permute.xlu0 %295
      %297 = vrot.lane.b32.xlu0 %v260, 4
      %v298 = vpop.permute.xlu0 %297
      %299 = vrot.lane.b32.xlu0 %v262, 4
      %v300 = vpop.permute.xlu0 %299
      %301 = vrot.lane.b32.xlu0 %v265, 4
      %v302 = vpop.permute.xlu0 %301
      %303 = vrot.lane.b32.xlu0 %v267, 4
      %v304 = vpop.permute.xlu0 %303
      %305 = vrot.lane.b32.xlu0 %v270, 4
      %v306 = vpop.permute.xlu0 %305
      %307 = vrot.lane.b32.xlu0 %v272, 4
      %v308 = vpop.permute.xlu0 %307
      %309 = vrot.lane.b32.xlu0 %v275, 4
      %v310 = vpop.permute.xlu0 %309
      %311 = vrot.lane.b32.xlu0 %v277, 4
      %v312 = vpop.permute.xlu0 %311
      %313 = vrot.lane.b32.xlu0 %v280, 4
      %v314 = vpop.permute.xlu0 %313
      %315 = vrot.lane.b32.xlu0 %v282, 4
      %v316 = vpop.permute.xlu0 %315
      %317 = vrot.lane.b32.xlu0 %v285, 4
      %v318 = vpop.permute.xlu0 %317
      %319 = vrot.lane.b32.xlu0 %v287, 4
      %v320 = vpop.permute.xlu0 %319
      %321 = vrot.lane.b32.xlu0 %v290, 4
      %v322 = vpop.permute.xlu0 %321
      %323 = vrot.lane.b32.xlu0 %v292, 4
      %v324 = vpop.permute.xlu0 %323
      %vm341 = vcmask 1045504
      %v342 = vrot.slane %v198, 2
      %v343 = vrot.slane %v199, 2
      %v344 = vsel %vm341, %v342, %v343
      %v345 = vrot.slane %v200, 2
      %v346 = vsel %vm341, %v343, %v345
      %v347 = vrot.slane %v201, 2
      %v348 = vrot.slane %v202, 2
      %v349 = vsel %vm341, %v347, %v348
      %v350 = vrot.slane %v203, 2
      %v351 = vsel %vm341, %v348, %v350
      %v352 = vrot.slane %v204, 2
      %v353 = vrot.slane %v205, 2
      %v354 = vsel %vm341, %v352, %v353
      %v355 = vrot.slane %v206, 2
      %v356 = vsel %vm341, %v353, %v355
      %v357 = vrot.slane %v207, 2
      %v358 = vrot.slane %v208, 2
      %v359 = vsel %vm341, %v357, %v358
      %v360 = vrot.slane %v209, 2
      %v361 = vsel %vm341, %v358, %v360
      %v362 = vrot.slane %v210, 2
      %v363 = vrot.slane %v211, 2
      %v364 = vsel %vm341, %v362, %v363
      %v365 = vrot.slane %v212, 2
      %v366 = vsel %vm341, %v363, %v365
      %v367 = vrot.slane %v213, 2
      %v368 = vrot.slane %v214, 2
      %v369 = vsel %vm341, %v367, %v368
      %v370 = vrot.slane %v215, 2
      %v371 = vsel %vm341, %v368, %v370
      %v372 = vrot.slane %v216, 2
      %v373 = vrot.slane %v217, 2
      %v374 = vsel %vm341, %v372, %v373
      %v375 = vrot.slane %v218, 2
      %v376 = vsel %vm341, %v373, %v375
      %v377 = vrot.slane %v219, 2
      %v378 = vrot.slane %v220, 2
      %v379 = vsel %vm341, %v377, %v378
      %v380 = vrot.slane %v221, 2
      %v381 = vsel %vm341, %v378, %v380
      %382 = vrot.lane.b32.xlu0 %v344, 8
      %v383 = vpop.permute.xlu0 %382
      %384 = vrot.lane.b32.xlu0 %v346, 8
      %v385 = vpop.permute.xlu0 %384
      %386 = vrot.lane.b32.xlu0 %v349, 8
      %v387 = vpop.permute.xlu0 %386
      %388 = vrot.lane.b32.xlu0 %v351, 8
      %v389 = vpop.permute.xlu0 %388
      %390 = vrot.lane.b32.xlu0 %v354, 8
      %v391 = vpop.permute.xlu0 %390
      %392 = vrot.lane.b32.xlu0 %v356, 8
      %v393 = vpop.permute.xlu0 %392
      %394 = vrot.lane.b32.xlu0 %v359, 8
      %v395 = vpop.permute.xlu0 %394
      %396 = vrot.lane.b32.xlu0 %v361, 8
      %v397 = vpop.permute.xlu0 %396
      %398 = vrot.lane.b32.xlu0 %v364, 8
      %v399 = vpop.permute.xlu0 %398
      %400 = vrot.lane.b32.xlu0 %v366, 8
      %v401 = vpop.permute.xlu0 %400
      %402 = vrot.lane.b32.xlu0 %v369, 8
      %v403 = vpop.permute.xlu0 %402
      %404 = vrot.lane.b32.xlu0 %v371, 8
      %v405 = vpop.permute.xlu0 %404
      %406 = vrot.lane.b32.xlu0 %v374, 8
      %v407 = vpop.permute.xlu0 %406
      %408 = vrot.lane.b32.xlu0 %v376, 8
      %v409 = vpop.permute.xlu0 %408
      %410 = vrot.lane.b32.xlu0 %v379, 8
      %v411 = vpop.permute.xlu0 %410
      %412 = vrot.lane.b32.xlu0 %v381, 8
      %v413 = vpop.permute.xlu0 %412
      %432 = vrot.lane.b32.xlu0 %v201, 12
      %v433 = vpop.permute.xlu0 %432
      %434 = vrot.lane.b32.xlu0 %v202, 12
      %v435 = vpop.permute.xlu0 %434
      %436 = vrot.lane.b32.xlu0 %v204, 12
      %v437 = vpop.permute.xlu0 %436
      %438 = vrot.lane.b32.xlu0 %v205, 12
      %v439 = vpop.permute.xlu0 %438
      %440 = vrot.lane.b32.xlu0 %v207, 12
      %v441 = vpop.permute.xlu0 %440
      %442 = vrot.lane.b32.xlu0 %v208, 12
      %v443 = vpop.permute.xlu0 %442
      %444 = vrot.lane.b32.xlu0 %v210, 12
      %v445 = vpop.permute.xlu0 %444
      %446 = vrot.lane.b32.xlu0 %v211, 12
      %v447 = vpop.permute.xlu0 %446
      %448 = vrot.lane.b32.xlu0 %v213, 12
      %v449 = vpop.permute.xlu0 %448
      %450 = vrot.lane.b32.xlu0 %v214, 12
      %v451 = vpop.permute.xlu0 %450
      %452 = vrot.lane.b32.xlu0 %v216, 12
      %v453 = vpop.permute.xlu0 %452
      %454 = vrot.lane.b32.xlu0 %v217, 12
      %v455 = vpop.permute.xlu0 %454
      %456 = vrot.lane.b32.xlu0 %v219, 12
      %v457 = vpop.permute.xlu0 %456
      %458 = vrot.lane.b32.xlu0 %v220, 12
      %v459 = vpop.permute.xlu0 %458
      %460 = vrot.lane.b32.xlu0 %v222, 12
      %v461 = vpop.permute.xlu0 %460
      %462 = vrot.lane.b32.xlu0 %v223, 12
      %v463 = vpop.permute.xlu0 %462
      %v481 = vrot.slane %v222, 1
      %v482 = vrot.slane %v223, 1
      %v483 = vsel %vm252, %v481, %v482
      %v484 = vrot.slane %v224, 1
      %v485 = vsel %vm252, %v482, %v484
      %486 = vrot.lane.b32.xlu0 %v260, 16
      %v487 = vpop.permute.xlu0 %486
      %488 = vrot.lane.b32.xlu0 %v262, 16
      %v489 = vpop.permute.xlu0 %488
      %490 = vrot.lane.b32.xlu0 %v265, 16
      %v491 = vpop.permute.xlu0 %490
      %492 = vrot.lane.b32.xlu0 %v267, 16
      %v493 = vpop.permute.xlu0 %492
      %494 = vrot.lane.b32.xlu0 %v270, 16
      %v495 = vpop.permute.xlu0 %494
      %496 = vrot.lane.b32.xlu0 %v272, 16
      %v497 = vpop.permute.xlu0 %496
      %498 = vrot.lane.b32.xlu0 %v275, 16
      %v499 = vpop.permute.xlu0 %498
      %500 = vrot.lane.b32.xlu0 %v277, 16
      %v501 = vpop.permute.xlu0 %500
      %502 = vrot.lane.b32.xlu0 %v280, 16
      %v503 = vpop.permute.xlu0 %502
      %504 = vrot.lane.b32.xlu0 %v282, 16
      %v505 = vpop.permute.xlu0 %504
      %506 = vrot.lane.b32.xlu0 %v285, 16
      %v507 = vpop.permute.xlu0 %506
      %508 = vrot.lane.b32.xlu0 %v287, 16
      %v509 = vpop.permute.xlu0 %508
      %510 = vrot.lane.b32.xlu0 %v290, 16
      %v511 = vpop.permute.xlu0 %510
      %512 = vrot.lane.b32.xlu0 %v292, 16
      %v513 = vpop.permute.xlu0 %512
      %514 = vrot.lane.b32.xlu0 %v483, 16
      %v515 = vpop.permute.xlu0 %514
      %516 = vrot.lane.b32.xlu0 %v485, 16
      %v517 = vpop.permute.xlu0 %516
      %v534 = vrot.slane %v222, 2
      %v535 = vrot.slane %v223, 2
      %v536 = vsel %vm341, %v534, %v535
      %v537 = vrot.slane %v224, 2
      %v538 = vsel %vm341, %v535, %v537
      %539 = vrot.lane.b32.xlu0 %v349, 20
      %v540 = vpop.permute.xlu0 %539
      %541 = vrot.lane.b32.xlu0 %v351, 20
      %v542 = vpop.permute.xlu0 %541
      %543 = vrot.lane.b32.xlu0 %v354, 20
      %v544 = vpop.permute.xlu0 %543
      %545 = vrot.lane.b32.xlu0 %v356, 20
      %v546 = vpop.permute.xlu0 %545
      %547 = vrot.lane.b32.xlu0 %v359, 20
      %v548 = vpop.permute.xlu0 %547
      %549 = vrot.lane.b32.xlu0 %v361, 20
      %v550 = vpop.permute.xlu0 %549
      %551 = vrot.lane.b32.xlu0 %v364, 20
      %v552 = vpop.permute.xlu0 %551
      %553 = vrot.lane.b32.xlu0 %v366, 20
      %v554 = vpop.permute.xlu0 %553
      %555 = vrot.lane.b32.xlu0 %v369, 20
      %v556 = vpop.permute.xlu0 %555
      %557 = vrot.lane.b32.xlu0 %v371, 20
      %v558 = vpop.permute.xlu0 %557
      %559 = vrot.lane.b32.xlu0 %v374, 20
      %v560 = vpop.permute.xlu0 %559
      %561 = vrot.lane.b32.xlu0 %v376, 20
      %v562 = vpop.permute.xlu0 %561
      %563 = vrot.lane.b32.xlu0 %v379, 20
      %v564 = vpop.permute.xlu0 %563
      %565 = vrot.lane.b32.xlu0 %v381, 20
      %v566 = vpop.permute.xlu0 %565
      %567 = vrot.lane.b32.xlu0 %v536, 20
      %v568 = vpop.permute.xlu0 %567
      %569 = vrot.lane.b32.xlu0 %v538, 20
      %v570 = vpop.permute.xlu0 %569
      %589 = vrot.lane.b32.xlu0 %v204, 24
      %v590 = vpop.permute.xlu0 %589
      %591 = vrot.lane.b32.xlu0 %v205, 24
      %v592 = vpop.permute.xlu0 %591
      %593 = vrot.lane.b32.xlu0 %v207, 24
      %v594 = vpop.permute.xlu0 %593
      %595 = vrot.lane.b32.xlu0 %v208, 24
      %v596 = vpop.permute.xlu0 %595
      %597 = vrot.lane.b32.xlu0 %v210, 24
      %v598 = vpop.permute.xlu0 %597
      %599 = vrot.lane.b32.xlu0 %v211, 24
      %v600 = vpop.permute.xlu0 %599
      %601 = vrot.lane.b32.xlu0 %v213, 24
      %v602 = vpop.permute.xlu0 %601
      %603 = vrot.lane.b32.xlu0 %v214, 24
      %v604 = vpop.permute.xlu0 %603
      %605 = vrot.lane.b32.xlu0 %v216, 24
      %v606 = vpop.permute.xlu0 %605
      %607 = vrot.lane.b32.xlu0 %v217, 24
      %v608 = vpop.permute.xlu0 %607
      %609 = vrot.lane.b32.xlu0 %v219, 24
      %v610 = vpop.permute.xlu0 %609
      %611 = vrot.lane.b32.xlu0 %v220, 24
      %v612 = vpop.permute.xlu0 %611
      %613 = vrot.lane.b32.xlu0 %v222, 24
      %v614 = vpop.permute.xlu0 %613
      %615 = vrot.lane.b32.xlu0 %v223, 24
      %v616 = vpop.permute.xlu0 %615
      %617 = vrot.lane.b32.xlu0 %v225, 24
      %v618 = vpop.permute.xlu0 %617
      %619 = vrot.lane.b32.xlu0 %v226, 24
      %v620 = vpop.permute.xlu0 %619
      %v638 = vrot.slane %v225, 1
      %v639 = vrot.slane %v226, 1
      %v640 = vsel %vm252, %v638, %v639
      %v641 = vrot.slane %v227, 1
      %v642 = vsel %vm252, %v639, %v641
      %643 = vrot.lane.b32.xlu0 %v265, 28
      %v644 = vpop.permute.xlu0 %643
      %645 = vrot.lane.b32.xlu0 %v267, 28
      %v646 = vpop.permute.xlu0 %645
      %647 = vrot.lane.b32.xlu0 %v270, 28
      %v648 = vpop.permute.xlu0 %647
      %649 = vrot.lane.b32.xlu0 %v272, 28
      %v650 = vpop.permute.xlu0 %649
      %651 = vrot.lane.b32.xlu0 %v275, 28
      %v652 = vpop.permute.xlu0 %651
      %653 = vrot.lane.b32.xlu0 %v277, 28
      %v654 = vpop.permute.xlu0 %653
      %655 = vrot.lane.b32.xlu0 %v280, 28
      %v656 = vpop.permute.xlu0 %655
      %657 = vrot.lane.b32.xlu0 %v282, 28
      %v658 = vpop.permute.xlu0 %657
      %659 = vrot.lane.b32.xlu0 %v285, 28
      %v660 = vpop.permute.xlu0 %659
      %661 = vrot.lane.b32.xlu0 %v287, 28
      %v662 = vpop.permute.xlu0 %661
      %663 = vrot.lane.b32.xlu0 %v290, 28
      %v664 = vpop.permute.xlu0 %663
      %665 = vrot.lane.b32.xlu0 %v292, 28
      %v666 = vpop.permute.xlu0 %665
      %667 = vrot.lane.b32.xlu0 %v483, 28
      %v668 = vpop.permute.xlu0 %667
      %669 = vrot.lane.b32.xlu0 %v485, 28
      %v670 = vpop.permute.xlu0 %669
      %671 = vrot.lane.b32.xlu0 %v640, 28
      %v672 = vpop.permute.xlu0 %671
      %673 = vrot.lane.b32.xlu0 %v642, 28
      %v674 = vpop.permute.xlu0 %673
      %v691 = vrot.slane %v225, 2
      %v692 = vrot.slane %v226, 2
      %v693 = vsel %vm341, %v691, %v692
      %v694 = vrot.slane %v227, 2
      %v695 = vsel %vm341, %v692, %v694
      %696 = vrot.lane.b32.xlu0 %v354, 32
      %v697 = vpop.permute.xlu0 %696
      %698 = vrot.lane.b32.xlu0 %v356, 32
      %v699 = vpop.permute.xlu0 %698
      %700 = vrot.lane.b32.xlu0 %v359, 32
      %v701 = vpop.permute.xlu0 %700
      %702 = vrot.lane.b32.xlu0 %v361, 32
      %v703 = vpop.permute.xlu0 %702
      %704 = vrot.lane.b32.xlu0 %v364, 32
      %v705 = vpop.permute.xlu0 %704
      %706 = vrot.lane.b32.xlu0 %v366, 32
      %v707 = vpop.permute.xlu0 %706
      %708 = vrot.lane.b32.xlu0 %v369, 32
      %v709 = vpop.permute.xlu0 %708
      %710 = vrot.lane.b32.xlu0 %v371, 32
      %v711 = vpop.permute.xlu0 %710
      %712 = vrot.lane.b32.xlu0 %v374, 32
      %v713 = vpop.permute.xlu0 %712
      %714 = vrot.lane.b32.xlu0 %v376, 32
      %v715 = vpop.permute.xlu0 %714
      %716 = vrot.lane.b32.xlu0 %v379, 32
      %v717 = vpop.permute.xlu0 %716
      %718 = vrot.lane.b32.xlu0 %v381, 32
      %v719 = vpop.permute.xlu0 %718
      %720 = vrot.lane.b32.xlu0 %v536, 32
      %v721 = vpop.permute.xlu0 %720
      %722 = vrot.lane.b32.xlu0 %v538, 32
      %v723 = vpop.permute.xlu0 %722
      %724 = vrot.lane.b32.xlu0 %v693, 32
      %v725 = vpop.permute.xlu0 %724
      %726 = vrot.lane.b32.xlu0 %v695, 32
      %v727 = vpop.permute.xlu0 %726
      %vm744 = vcmask 31744
      %v745 = vsel %vm744, %v198, %v294
      %v746 = vsel %vm744, %v199, %v296
      %v747 = vsel %vm744, %v201, %v298
      %v748 = vsel %vm744, %v202, %v300
      %v749 = vsel %vm744, %v204, %v302
      %v750 = vsel %vm744, %v205, %v304
      %v751 = vsel %vm744, %v207, %v306
      %v752 = vsel %vm744, %v208, %v308
      %v753 = vsel %vm744, %v210, %v310
      %v754 = vsel %vm744, %v211, %v312
      %v755 = vsel %vm744, %v213, %v314
      %v756 = vsel %vm744, %v214, %v316
      %v757 = vsel %vm744, %v216, %v318
      %v758 = vsel %vm744, %v217, %v320
      %v759 = vsel %vm744, %v219, %v322
      %v760 = vsel %vm744, %v220, %v324
      %vm761 = vcmask 64512
      %v762 = vsel %vm761, %v745, %v383
      %v763 = vsel %vm761, %v746, %v385
      %v764 = vsel %vm761, %v747, %v387
      %v765 = vsel %vm761, %v748, %v389
      %v766 = vsel %vm761, %v749, %v391
      %v767 = vsel %vm761, %v750, %v393
      %v768 = vsel %vm761, %v751, %v395
      %v769 = vsel %vm761, %v752, %v397
      %v770 = vsel %vm761, %v753, %v399
      %v771 = vsel %vm761, %v754, %v401
      %v772 = vsel %vm761, %v755, %v403
      %v773 = vsel %vm761, %v756, %v405
      %v774 = vsel %vm761, %v757, %v407
      %v775 = vsel %vm761, %v758, %v409
      %v776 = vsel %vm761, %v759, %v411
      %v777 = vsel %vm761, %v760, %v413
      %vm778 = vcmask 97280
      %v779 = vsel %vm778, %v762, %v433
      %v780 = vsel %vm778, %v763, %v435
      %v781 = vsel %vm778, %v764, %v437
      %v782 = vsel %vm778, %v765, %v439
      %v783 = vsel %vm778, %v766, %v441
      %v784 = vsel %vm778, %v767, %v443
      %v785 = vsel %vm778, %v768, %v445
      %v786 = vsel %vm778, %v769, %v447
      %v787 = vsel %vm778, %v770, %v449
      %v788 = vsel %vm778, %v771, %v451
      %v789 = vsel %vm778, %v772, %v453
      %v790 = vsel %vm778, %v773, %v455
      %v791 = vsel %vm778, %v774, %v457
      %v792 = vsel %vm778, %v775, %v459
      %v793 = vsel %vm778, %v776, %v461
      %v794 = vsel %vm778, %v777, %v463
      %vm795 = vcmask 130048
      %v796 = vsel %vm795, %v779, %v487
      %v797 = vsel %vm795, %v780, %v489
      %v798 = vsel %vm795, %v781, %v491
      %v799 = vsel %vm795, %v782, %v493
      %v800 = vsel %vm795, %v783, %v495
      %v801 = vsel %vm795, %v784, %v497
      %v802 = vsel %vm795, %v785, %v499
      %v803 = vsel %vm795, %v786, %v501
      %v804 = vsel %vm795, %v787, %v503
      %v805 = vsel %vm795, %v788, %v505
      %v806 = vsel %vm795, %v789, %v507
      %v807 = vsel %vm795, %v790, %v509
      %v808 = vsel %vm795, %v791, %v511
      %v809 = vsel %vm795, %v792, %v513
      %v810 = vsel %vm795, %v793, %v515
      %v811 = vsel %vm795, %v794, %v517
      %vm812 = vcmask 162816
      %v813 = vsel %vm812, %v796, %v540
      %v814 = vsel %vm812, %v797, %v542
      %v815 = vsel %vm812, %v798, %v544
      %v816 = vsel %vm812, %v799, %v546
      %v817 = vsel %vm812, %v800, %v548
      %v818 = vsel %vm812, %v801, %v550
      %v819 = vsel %vm812, %v802, %v552
      %v820 = vsel %vm812, %v803, %v554
      %v821 = vsel %vm812, %v804, %v556
      %v822 = vsel %vm812, %v805, %v558
      %v823 = vsel %vm812, %v806, %v560
      %v824 = vsel %vm812, %v807, %v562
      %v825 = vsel %vm812, %v808, %v564
      %v826 = vsel %vm812, %v809, %v566
      %v827 = vsel %vm812, %v810, %v568
      %v828 = vsel %vm812, %v811, %v570
      %vm829 = vcmask 195584
      %v830 = vsel %vm829, %v813, %v590
      %v831 = vsel %vm829, %v814, %v592
      %v832 = vsel %vm829, %v815, %v594
      %v833 = vsel %vm829, %v816, %v596
      %v834 = vsel %vm829, %v817, %v598
      %v835 = vsel %vm829, %v818, %v600
      %v836 = vsel %vm829, %v819, %v602
      %v837 = vsel %vm829, %v820, %v604
      %v838 = vsel %vm829, %v821, %v606
      %v839 = vsel %vm829, %v822, %v608
      %v840 = vsel %vm829, %v823, %v610
      %v841 = vsel %vm829, %v824, %v612
      %v842 = vsel %vm829, %v825, %v614
      %v843 = vsel %vm829, %v826, %v616
      %v844 = vsel %vm829, %v827, %v618
      %v845 = vsel %vm829, %v828, %v620
      %vm846 = vcmask 228352
      %v847 = vsel %vm846, %v830, %v644
      %v848 = vsel %vm846, %v831, %v646
      %v849 = vsel %vm846, %v832, %v648
      %v850 = vsel %vm846, %v833, %v650
      %v851 = vsel %vm846, %v834, %v652
      %v852 = vsel %vm846, %v835, %v654
      %v853 = vsel %vm846, %v836, %v656
      %v854 = vsel %vm846, %v837, %v658
      %v855 = vsel %vm846, %v838, %v660
      %v856 = vsel %vm846, %v839, %v662
      %v857 = vsel %vm846, %v840, %v664
      %v858 = vsel %vm846, %v841, %v666
      %v859 = vsel %vm846, %v842, %v668
      %v860 = vsel %vm846, %v843, %v670
      %v861 = vsel %vm846, %v844, %v672
      %v862 = vsel %vm846, %v845, %v674
      %vm863 = vcmask 261120
      %v864 = vsel %vm863, %v847, %v697
      %v865 = vsel %vm863, %v848, %v699
      %v866 = vsel %vm863, %v849, %v701
      %v867 = vsel %vm863, %v850, %v703
      %v868 = vsel %vm863, %v851, %v705
      %v869 = vsel %vm863, %v852, %v707
      %v870 = vsel %vm863, %v853, %v709
      %v871 = vsel %vm863, %v854, %v711
      %v872 = vsel %vm863, %v855, %v713
      %v873 = vsel %vm863, %v856, %v715
      %v874 = vsel %vm863, %v857, %v717
      %v875 = vsel %vm863, %v858, %v719
      %v876 = vsel %vm863, %v859, %v721
      %v877 = vsel %vm863, %v860, %v723
      %v878 = vsel %vm863, %v861, %v725
      %v879 = vsel %vm863, %v862, %v727
      %v880 = vld [vmem:[%s1] sm:$0xff]
      %v881 = vld [vmem:[%s1 + $0x8] sm:$0xff]
      %v882 = vld [vmem:[%s1 + $0x10] sm:$0xff]
      %v883 = vld [vmem:[%s1 + $0x18] sm:$0xff]
      %v884 = vld [vmem:[%s1 + $0x20] sm:$0xf]
      %vm885 = vcmask 293888
      %v887 = vsel %vm885, %v864, 0
      %v890 = vsel %vm885, %v865, 0
      %v893 = vsel %vm885, %v866, 0
      %v896 = vsel %vm885, %v867, 0
      %v899 = vsel %vm885, %v868, 0
      %v902 = vsel %vm885, %v869, 0
      %v905 = vsel %vm885, %v870, 0
      %v908 = vsel %vm885, %v871, 0
      %v911 = vsel %vm885, %v872, 0
      %v914 = vsel %vm885, %v873, 0
      %v917 = vsel %vm885, %v874, 0
      %v920 = vsel %vm885, %v875, 0
      %v923 = vsel %vm885, %v876, 0
      %v926 = vsel %vm885, %v877, 0
      %v929 = vsel %vm885, %v878, 0
      %v932 = vsel %vm885, %v879, 0
      %vm934 = vcmask 1043456
      %v936 = vsel %vm934, %v884, 0
      %938 = vmatprep.subr.mxu0 0.0
      %939 = vmatpush1.msra.mxu0 %v880
      %940 = vmatprep.subr.mxu0 0.0
      %941 = vmatpush1.msra.mxu0 %v881
      %942 = vmatprep.subr.mxu0 0.0
      %943 = vmatpush1.msra.mxu0 %v882
      %944 = vmatprep.subr.mxu0 0.0
      %945 = vmatpush1.msra.mxu0 %v883
      %946 = vmatprep.subr.mxu0 0.0
      %947 = vmatpush1.msra.mxu0 %v936
      %948 = vmatprep.subr.mxu0 0.0
      %949 = vmatpush1.msra.mxu0 0.0
      %950 = vmatprep.subr.mxu0 0.0
      %951 = vmatpush1.msra.mxu0 0.0
      %952 = vmatprep.subr.mxu0 0.0
      %953 = vmatpush1.msra.mxu0 0.0
      %954 = vmatprep.subr.mxu0 0.0
      %955 = vmatpush1.msra.mxu0 0.0
      %956 = vmatprep.subr.mxu0 0.0
      %957 = vmatpush1.msra.mxu0 0.0
      %958 = vmatprep.subr.mxu0 0.0
      %959 = vmatpush1.msra.mxu0 0.0
      %960 = vmatprep.subr.mxu0 0.0
      %961 = vmatpush1.msra.mxu0 0.0
      %962 = vmatprep.subr.mxu0 0.0
      %963 = vmatpush1.msra.mxu0 0.0
      %964 = vmatprep.subr.mxu0 0.0
      %965 = vmatpush1.msra.mxu0 0.0
      %966 = vmatprep.subr.mxu0 0.0
      %967 = vmatpush1.msra.mxu0 0.0
      %968 = vmatprep.subr.mxu0 0.0
      %969 = vmatpush1.msra.mxu0 0.0
      %970 = vmatprep.subr.mxu0 0.0
      %971 = vmatpush1.msra.mxu0 0.0
      %972 = vmatprep.subr.mxu0 0.0
      %973 = vmatpush1.msra.mxu0 0.0
      %974 = vmatprep.subr.mxu0 0.0
      %975 = vmatpush1.msra.mxu0 0.0
      %976 = vmatprep.subr.mxu0 0.0
      %977 = vmatpush1.msra.mxu0 0.0
      %978 = vmatprep.subr.mxu0 0.0
      %979 = vmatpush1.msra.mxu0 0.0
      %980 = vmatprep.subr.mxu0 0.0
      %981 = vmatpush1.msra.mxu0 0.0
      %982 = vmatprep.subr.mxu0 0.0
      %983 = vmatpush1.msra.mxu0 0.0
      %984 = vmatprep.subr.mxu0 0.0
      %985 = vmatpush1.msra.mxu0 0.0
      %986 = vmatprep.subr.mxu0 0.0
      %987 = vmatpush1.msra.mxu0 0.0
      %988 = vmatprep.subr.mxu0 0.0
      %989 = vmatpush1.msra.mxu0 0.0
      %990 = vmatprep.subr.mxu0 0.0
      %991 = vmatpush1.msra.mxu0 0.0
      %992 = vmatprep.subr.mxu0 0.0
      %993 = vmatpush1.msra.mxu0 0.0
      %994 = vmatprep.subr.mxu0 0.0
      %995 = vmatpush1.msra.mxu0 0.0
      %996 = vmatprep.subr.mxu0 0.0
      %997 = vmatpush1.msra.mxu0 0.0
      %998 = vmatprep.subr.mxu0 0.0
      %999 = vmatpush1.msra.mxu0 0.0
      %1000 = vmatprep.subr.mxu0 0.0
      %1001 = vmatpush1.msra.mxu0 0.0
      %1002 = vmatprep.mubr.f32.mxu0 0.0
      %1003 = vmatmul.mubr.f32.gmra.mrb[0].mxu0 %v887
      %v1004 = vpop.f32.mrb[0].mxu0
      %v1005 = vadd.f32 0.0, %v1004
      %v1006 = vpop.f32.mrb[0].mxu0
      %1007 = vmatprep.mubr.f32.mxu0 0.0
      %1008 = vmatmul.mubr.f32.gmra.mrb[0].mxu0 %v890
      %v1009 = vpop.f32.mrb[0].mxu0
      %v1010 = vadd.f32 0.0, %v1009
      %v1011 = vpop.f32.mrb[0].mxu0
      %1012 = vmatprep.mubr.f32.mxu0 0.0
      %1013 = vmatmul.mubr.f32.gmra.mrb[0].mxu0 %v893
      %v1014 = vpop.f32.mrb[0].mxu0
      %v1015 = vadd.f32 0.0, %v1014
      %v1016 = vpop.f32.mrb[0].mxu0
      %1017 = vmatprep.mubr.f32.mxu0 0.0
      %1018 = vmatmul.mubr.f32.gmra.mrb[0].mxu0 %v896
      %v1019 = vpop.f32.mrb[0].mxu0
      %v1020 = vadd.f32 0.0, %v1019
      %v1021 = vpop.f32.mrb[0].mxu0
      %1022 = vmatprep.mubr.f32.mxu0 0.0
      %1023 = vmatmul.mubr.f32.gmra.mrb[0].mxu0 %v899
      %v1024 = vpop.f32.mrb[0].mxu0
      %v1025 = vadd.f32 0.0, %v1024
      %v1026 = vpop.f32.mrb[0].mxu0
      %1027 = vmatprep.mubr.f32.mxu0 0.0
      %1028 = vmatmul.mubr.f32.gmra.mrb[0].mxu0 %v902
      %v1029 = vpop.f32.mrb[0].mxu0
      %v1030 = vadd.f32 0.0, %v1029
      %v1031 = vpop.f32.mrb[0].mxu0
      %1032 = vmatprep.mubr.f32.mxu0 0.0
      %1033 = vmatmul.mubr.f32.gmra.mrb[0].mxu0 %v905
      %v1034 = vpop.f32.mrb[0].mxu0
      %v1035 = vadd.f32 0.0, %v1034
      %v1036 = vpop.f32.mrb[0].mxu0
      %1037 = vmatprep.mubr.f32.mxu0 0.0
      %1038 = vmatmul.mubr.f32.gmra.mrb[0].mxu0 %v908
      %v1039 = vpop.f32.mrb[0].mxu0
      %v1040 = vadd.f32 0.0, %v1039
      %v1041 = vpop.f32.mrb[0].mxu0
      %1042 = vmatprep.mubr.f32.mxu0 0.0
      %1043 = vmatmul.mubr.f32.gmra.mrb[0].mxu0 %v911
      %v1044 = vpop.f32.mrb[0].mxu0
      %v1045 = vadd.f32 0.0, %v1044
      %v1046 = vpop.f32.mrb[0].mxu0
      %1047 = vmatprep.mubr.f32.mxu0 0.0
      %1048 = vmatmul.mubr.f32.gmra.mrb[0].mxu0 %v914
      %v1049 = vpop.f32.mrb[0].mxu0
      %v1050 = vadd.f32 0.0, %v1049
      %v1051 = vpop.f32.mrb[0].mxu0
      %1052 = vmatprep.mubr.f32.mxu0 0.0
      %1053 = vmatmul.mubr.f32.gmra.mrb[0].mxu0 %v917
      %v1054 = vpop.f32.mrb[0].mxu0
      %v1055 = vadd.f32 0.0, %v1054
      %v1056 = vpop.f32.mrb[0].mxu0
      %1057 = vmatprep.mubr.f32.mxu0 0.0
      %1058 = vmatmul.mubr.f32.gmra.mrb[0].mxu0 %v920
      %v1059 = vpop.f32.mrb[0].mxu0
      %v1060 = vadd.f32 0.0, %v1059
      %v1061 = vpop.f32.mrb[0].mxu0
      %1062 = vmatprep.mubr.f32.mxu0 0.0
      %1063 = vmatmul.mubr.f32.gmra.mrb[0].mxu0 %v923
      %v1064 = vpop.f32.mrb[0].mxu0
      %v1065 = vadd.f32 0.0, %v1064
      %v1066 = vpop.f32.mrb[0].mxu0
      %1067 = vmatprep.mubr.f32.mxu0 0.0
      %1068 = vmatmul.mubr.f32.gmra.mrb[0].mxu0 %v926
      %v1069 = vpop.f32.mrb[0].mxu0
      %v1070 = vadd.f32 0.0, %v1069
      %v1071 = vpop.f32.mrb[0].mxu0
      %1072 = vmatprep.mubr.f32.mxu0 0.0
      %1073 = vmatmul.mubr.f32.gmra.mrb[0].mxu0 %v929
      %v1074 = vpop.f32.mrb[0].mxu0
      %v1075 = vadd.f32 0.0, %v1074
      %v1076 = vpop.f32.mrb[0].mxu0
      %1077 = vmatprep.mubr.f32.mxu0 0.0
      %1078 = vmatmul.mubr.f32.gmra.mrb[0].mxu0 %v932
      %v1079 = vpop.f32.mrb[0].mxu0
      %v1080 = vadd.f32 0.0, %v1079
      %v1081 = vpop.f32.mrb[0].mxu0
      %1082 = vdwg.mxu0
      %v1083 = vld [vmem:[%s2] sm:$0x3]
      %v1084 = vlaneseq
      %v1085 = vshrl.u32 %v1084, 7
      %v1086 = vsub.s32 0, %v1085
      %v1087 = vrot.slane %v1083, %v1086
      %v1088 = vmul.f32 %v1005, %v1087
      %v1089 = vmul.f32 %v1010, %v1087
      %v1090 = vmul.f32 %v1015, %v1087
      %v1091 = vmul.f32 %v1020, %v1087
      %v1092 = vmul.f32 %v1025, %v1087
      %v1093 = vmul.f32 %v1030, %v1087
      %v1094 = vmul.f32 %v1035, %v1087
      %v1095 = vmul.f32 %v1040, %v1087
      %v1096 = vmul.f32 %v1045, %v1087
      %v1097 = vmul.f32 %v1050, %v1087
      %v1098 = vmul.f32 %v1055, %v1087
      %v1099 = vmul.f32 %v1060, %v1087
      %v1100 = vmul.f32 %v1065, %v1087
      %v1101 = vmul.f32 %v1070, %v1087
      %v1102 = vmul.f32 %v1075, %v1087
      %v1103 = vmul.f32 %v1080, %v1087
      %v1104 = vlaneseq
      %v1105 = vshrl.u32 %v1104, 7
      %v1106 = vsub.s32 1, %v1105
      %v1107 = vrot.slane %v1083, %v1106
      %v1108 = vadd.f32 %v1088, %v1107
      %v1109 = vadd.f32 %v1089, %v1107
      %v1110 = vadd.f32 %v1090, %v1107
      %v1111 = vadd.f32 %v1091, %v1107
      %v1112 = vadd.f32 %v1092, %v1107
      %v1113 = vadd.f32 %v1093, %v1107
      %v1114 = vadd.f32 %v1094, %v1107
      %v1115 = vadd.f32 %v1095, %v1107
      %v1116 = vadd.f32 %v1096, %v1107
      %v1117 = vadd.f32 %v1097, %v1107
      %v1118 = vadd.f32 %v1098, %v1107
      %v1119 = vadd.f32 %v1099, %v1107
      %v1120 = vadd.f32 %v1100, %v1107
      %v1121 = vadd.f32 %v1101, %v1107
      %v1122 = vadd.f32 %v1102, %v1107
      %v1123 = vadd.f32 %v1103, %v1107
      %1140 = vrot.lane.b32.xlu0 %v1108, 120
      %v1141 = vpop.permute.xlu0 %1140
      %1142 = vrot.lane.b32.xlu0 %v1109, 120
      %v1143 = vpop.permute.xlu0 %1142
      %1144 = vrot.lane.b32.xlu0 %v1110, 120
      %v1145 = vpop.permute.xlu0 %1144
      %1146 = vrot.lane.b32.xlu0 %v1111, 120
      %v1147 = vpop.permute.xlu0 %1146
      %1148 = vrot.lane.b32.xlu0 %v1112, 120
      %v1149 = vpop.permute.xlu0 %1148
      %1150 = vrot.lane.b32.xlu0 %v1113, 120
      %v1151 = vpop.permute.xlu0 %1150
      %1152 = vrot.lane.b32.xlu0 %v1114, 120
      %v1153 = vpop.permute.xlu0 %1152
      %1154 = vrot.lane.b32.xlu0 %v1115, 120
      %v1155 = vpop.permute.xlu0 %1154
      %1156 = vrot.lane.b32.xlu0 %v1116, 120
      %v1157 = vpop.permute.xlu0 %1156
      %1158 = vrot.lane.b32.xlu0 %v1117, 120
      %v1159 = vpop.permute.xlu0 %1158
      %1160 = vrot.lane.b32.xlu0 %v1118, 120
      %v1161 = vpop.permute.xlu0 %1160
      %1162 = vrot.lane.b32.xlu0 %v1119, 120
      %v1163 = vpop.permute.xlu0 %1162
      %1164 = vrot.lane.b32.xlu0 %v1120, 120
      %v1165 = vpop.permute.xlu0 %1164
      %1166 = vrot.lane.b32.xlu0 %v1121, 120
      %v1167 = vpop.permute.xlu0 %1166
      %1168 = vrot.lane.b32.xlu0 %v1122, 120
      %v1169 = vpop.permute.xlu0 %1168
      %1170 = vrot.lane.b32.xlu0 %v1123, 120
      %v1171 = vpop.permute.xlu0 %1170
      %v1188 = vadd.f32 %v1108, %v1141
      %v1189 = vadd.f32 %v1109, %v1143
      %v1190 = vadd.f32 %v1110, %v1145
      %v1191 = vadd.f32 %v1111, %v1147
      %v1192 = vadd.f32 %v1112, %v1149
      %v1193 = vadd.f32 %v1113, %v1151
      %v1194 = vadd.f32 %v1114, %v1153
      %v1195 = vadd.f32 %v1115, %v1155
      %v1196 = vadd.f32 %v1116, %v1157
      %v1197 = vadd.f32 %v1117, %v1159
      %v1198 = vadd.f32 %v1118, %v1161
      %v1199 = vadd.f32 %v1119, %v1163
      %v1200 = vadd.f32 %v1120, %v1165
      %v1201 = vadd.f32 %v1121, %v1167
      %v1202 = vadd.f32 %v1122, %v1169
      %v1203 = vadd.f32 %v1123, %v1171
      %v1204 = vmax.f32 %v1188, 0.0
      %v1205 = vmax.f32 %v1189, 0.0
      %v1206 = vmax.f32 %v1190, 0.0
      %v1207 = vmax.f32 %v1191, 0.0
      %v1208 = vmax.f32 %v1192, 0.0
      %v1209 = vmax.f32 %v1193, 0.0
      %v1210 = vmax.f32 %v1194, 0.0
      %v1211 = vmax.f32 %v1195, 0.0
      %v1212 = vmax.f32 %v1196, 0.0
      %v1213 = vmax.f32 %v1197, 0.0
      %v1214 = vmax.f32 %v1198, 0.0
      %v1215 = vmax.f32 %v1199, 0.0
      %v1216 = vmax.f32 %v1200, 0.0
      %v1217 = vmax.f32 %v1201, 0.0
      %v1218 = vmax.f32 %v1202, 0.0
      %v1219 = vmax.f32 %v1203, 0.0
      %v1220 = vld [vmem:[%s3] sm:$0x3]
      %v1221 = vlaneseq
      %v1222 = vshrl.u32 %v1221, 7
      %v1223 = vsub.s32 0, %v1222
      %v1224 = vrot.slane %v1220, %v1223
      %v1225 = vmul.f32 %v1204, %v1224
      %v1226 = vmul.f32 %v1205, %v1224
      %v1227 = vmul.f32 %v1206, %v1224
      %v1228 = vmul.f32 %v1207, %v1224
      %v1229 = vmul.f32 %v1208, %v1224
      %v1230 = vmul.f32 %v1209, %v1224
      %v1231 = vmul.f32 %v1210, %v1224
      %v1232 = vmul.f32 %v1211, %v1224
      %v1233 = vmul.f32 %v1212, %v1224
      %v1234 = vmul.f32 %v1213, %v1224
      %v1235 = vmul.f32 %v1214, %v1224
      %v1236 = vmul.f32 %v1215, %v1224
      %v1237 = vmul.f32 %v1216, %v1224
      %v1238 = vmul.f32 %v1217, %v1224
      %v1239 = vmul.f32 %v1218, %v1224
      %v1240 = vmul.f32 %v1219, %v1224
      %v1241 = vlaneseq
      %v1242 = vshrl.u32 %v1241, 7
      %v1243 = vsub.s32 1, %v1242
      %v1244 = vrot.slane %v1220, %v1243
      %v1245 = vadd.f32 %v1225, %v1244
      %v1246 = vadd.f32 %v1226, %v1244
      %v1247 = vadd.f32 %v1227, %v1244
      %v1248 = vadd.f32 %v1228, %v1244
      %v1249 = vadd.f32 %v1229, %v1244
      %v1250 = vadd.f32 %v1230, %v1244
      %v1251 = vadd.f32 %v1231, %v1244
      %v1252 = vadd.f32 %v1232, %v1244
      %v1253 = vadd.f32 %v1233, %v1244
      %v1254 = vadd.f32 %v1234, %v1244
      %v1255 = vadd.f32 %v1235, %v1244
      %v1256 = vadd.f32 %v1236, %v1244
      %v1257 = vadd.f32 %v1237, %v1244
      %v1258 = vadd.f32 %v1238, %v1244
      %v1259 = vadd.f32 %v1239, %v1244
      %v1260 = vadd.f32 %v1240, %v1244
      %1261 = vst.msk [vmem:[%s197] sm:$0xff] %vm761, %v1245
      %1262 = vst.msk [vmem:[%s197 + $0x8] sm:$0xff] %vm761, %v1246
      %1263 = vst.msk [vmem:[%s197 + $0x10] sm:$0xff] %vm761, %v1247
      %1264 = vst.msk [vmem:[%s197 + $0x18] sm:$0xff] %vm761, %v1248
      %1265 = vst.msk [vmem:[%s197 + $0x20] sm:$0xff] %vm761, %v1249
      %1266 = vst.msk [vmem:[%s197 + $0x28] sm:$0xff] %vm761, %v1250
      %1267 = vst.msk [vmem:[%s197 + $0x30] sm:$0xff] %vm761, %v1251
      %1268 = vst.msk [vmem:[%s197 + $0x38] sm:$0xff] %vm761, %v1252
      %1269 = vst.msk [vmem:[%s197 + $0x40] sm:$0xff] %vm761, %v1253
      %1270 = vst.msk [vmem:[%s197 + $0x48] sm:$0xff] %vm761, %v1254
      %1271 = vst.msk [vmem:[%s197 + $0x50] sm:$0xff] %vm761, %v1255
      %1272 = vst.msk [vmem:[%s197 + $0x58] sm:$0xff] %vm761, %v1256
      %1273 = vst.msk [vmem:[%s197 + $0x60] sm:$0xff] %vm761, %v1257
      %1274 = vst.msk [vmem:[%s197 + $0x68] sm:$0xff] %vm761, %v1258
      %1275 = vst.msk [vmem:[%s197 + $0x70] sm:$0xff] %vm761, %v1259
      %1276 = vst.msk [vmem:[%s197 + $0x78] sm:$0xff] %vm761, %v1260
      %p1277 = scmp.lt.s32.totalorder %s15, 3
      %s1278 = scalar_select %p1277, %s15, 3
      %s1279 = smul.addr %s1278, 16
      %s1280 = smul.addr %s1279, 8
      %s1281 = scalar_lea.vmem %s4, %s1280
      // Predicated region
      $region37: #{respath_block.5} parent=35 // pred_check
        %p1282 = pneg %p122
      $region38: #{respath_block.5} parent=35 // pred_check_branch
        %1284 = sbr.rel (%p1282) target = $region40
      $region39: #{respath_block.5} parent=35 // pred_region
        _
      $region40: #{respath_block.5} parent=35 // pred_fallthru
        _
    $region36: #{respath_block.5} parent=5 // pred_fallthru
      _
    %p1285 = scmp.le.s32.totalorder 2, %s10
    // Predicated region
    $region41: #{respath_block.5} parent=5 // pred_check
      %p1286 = pneg %p1285
    $region42: #{respath_block.5} parent=5 // pred_check_branch
      %1288 = sbr.rel (%p1286) target = $region44
    $region43: #{respath_block.5} parent=5 // pred_region
      %s1289 = ssub.s32 %s10, 2
      // Predicated region
      $region45: #{respath_block.5} parent=43 // pred_check
        %p1290 = pneg %p128
      $region46: #{respath_block.5} parent=43 // pred_check_branch
        %1292 = sbr.rel (%p1290) target = $region48
      $region47: #{respath_block.5} parent=43 // pred_region
        %p1293 = scmp.lt.s32.totalorder %s16, 3
        %s1294 = scalar_select %p1293, %s16, 3
        %s1295 = smul.addr %s1294, 16
        %s1296 = smul.addr %s1295, 8
        %s1297 = scalar_lea.vmem %s4, %s1296
      $region48: #{respath_block.5} parent=43 // pred_fallthru
        _
    $region44: #{respath_block.5} parent=5 // pred_fallthru
      _
  $region6: #{respath_block.5} parent=0 // loop_footer
    %s14 = sadd.s32 1, %s10
  $region7: #{respath_block.5} parent=0 // loop_footer_branch
    %9 = sbr.rel target = $region3
  $region8: #{respath_block.5} parent=0 // loop_exit
    _

// kernel: respath_block.4
$region0: #{respath_block.4}
  #allocation0 [shape = 'u32[]', space=smem, size = 0x4, offset = 0x4, fixed_abs, tag = 'smem constant byte address 0x4 - core index']
  #allocation1 [shape = 'u32[144,128]{1,0:T(1,128)}', space=vmem, size = 0x12000, scoped, tag = 'internal scratch']
  %s0 = inlined_call_operand.vmem [shape: f32[4,10,18,4], index: 0, kind: input, shape index: {}]
  %s1 = inlined_call_operand.vmem [shape: f32[36,16], index: 1, kind: input, shape index: {}]
  %s2 = inlined_call_operand.vmem [shape: f32[2,16], index: 2, kind: input, shape index: {}]
  %s3 = inlined_call_operand.vmem [shape: f32[4,8,16], index: 3, kind: output, shape index: {}]
  %s4 = sld [smem:[#allocation0]]
  $region45: #{respath_block.4} parent=0
    _
  %s6 = ssub.s32 1, %s4
  %s7 = scalar_select 0, %s6, %s4
  loop: start=0, step=1, limit=6
  $region2: #{respath_block.4} parent=0 // loop_pre_header
    _
  $region3: #{respath_block.4} parent=0 // loop_header
    %s9 = sphi 0, %s13
    %p10 = scmp.ge.s32.totalorder %s9, 6
    %s19 = sphi 0, %s21
    %s22 = sphi 0, %s19
    %s23 = sphi 0, %s22
    %s39 = sphi 0, %s23
    %s43 = sphi 0, %s43
    %s45 = sphi 0, %s43
    %s46 = sphi 0, %s45
    %s60 = sphi 0, %s46
    %s64 = sphi 0, %s64
    %s66 = sphi 0, %s64
    %s67 = sphi 0, %s66
    %s81 = sphi 0, %s67
    %s87 = sphi 0, %s89
    %s90 = sphi 0, %s87
    %s91 = sphi 0, %s90
    %s107 = sphi 0, %s91
  $region4: #{respath_block.4} parent=0 // loop_header_branch
    %12 = sbr.rel (%p10) target = $region8
  $region5: #{respath_block.4} parent=0 // loop_body
    %s14 = ssub.s32 %s9, 1
    %s15 = ssub.s32 %s9, 2
    %s16 = sadd.s32 %s9, 1
    %s17 = ssub.s32 %s9, %s16
    %p18 = scmp.eq.s32.totalorder %s17, 0
    %s20 = sadd.s32 %s19, 1
    %s21 = scalar_select %p18, %s19, %s20
    %p24 = pneg %p18
    %p25 = scmp.eq.s32.totalorder %s9, 3
    %p26 = por %p24, %p25
    %p27 = scmp.ne.s32.totalorder %s19, %s22
    %p28 = scmp.eq.s32.totalorder %s9, 0
    %p29 = por %p27, %p28
    %p30 = scmp.ne.s32.totalorder %s19, %s22
    %p31 = scmp.eq.s32.totalorder %s14, 3
    %p32 = por %p30, %p31
    %p33 = scmp.ne.s32.totalorder %s22, %s23
    %p34 = scmp.eq.s32.totalorder %s14, 0
    %p35 = por %p33, %p34
    %p36 = scmp.ne.s32.totalorder %s22, %s23
    %p37 = scmp.eq.s32.totalorder %s15, 3
    %p38 = por %p36, %p37
    %p40 = scmp.ne.s32.totalorder %s23, %s39
    %p41 = scmp.eq.s32.totalorder %s15, 0
    %p42 = por %p40, %p41
    %s44 = sadd.s32 %s43, 1
    %p47 = scmp.eq.s32.totalorder %s9, 3
    %p48 = scmp.ne.s32.totalorder %s43, %s45
    %p49 = scmp.eq.s32.totalorder %s9, 0
    %p50 = por %p48, %p49
    %p51 = scmp.ne.s32.totalorder %s43, %s45
    %p52 = scmp.eq.s32.totalorder %s14, 3
    %p53 = por %p51, %p52
    %p54 = scmp.ne.s32.totalorder %s45, %s46
    %p55 = scmp.eq.s32.totalorder %s14, 0
    %p56 = por %p54, %p55
    %p57 = scmp.ne.s32.totalorder %s45, %s46
    %p58 = scmp.eq.s32.totalorder %s15, 3
    %p59 = por %p57, %p58
    %p61 = scmp.ne.s32.totalorder %s46, %s60
    %p62 = scmp.eq.s32.totalorder %s15, 0
    %p63 = por %p61, %p62
    %s65 = sadd.s32 %s64, 1
    %p68 = scmp.eq.s32.totalorder %s9, 3
    %p69 = scmp.ne.s32.totalorder %s64, %s66
    %p70 = scmp.eq.s32.totalorder %s9, 0
    %p71 = por %p69, %p70
    %p72 = scmp.ne.s32.totalorder %s64, %s66
    %p73 = scmp.eq.s32.totalorder %s14, 3
    %p74 = por %p72, %p73
    %p75 = scmp.ne.s32.totalorder %s66, %s67
    %p76 = scmp.eq.s32.totalorder %s14, 0
    %p77 = por %p75, %p76
    %p78 = scmp.ne.s32.totalorder %s66, %s67
    %p79 = scmp.eq.s32.totalorder %s15, 3
    %p80 = por %p78, %p79
    %p82 = scmp.ne.s32.totalorder %s67, %s81
    %p83 = scmp.eq.s32.totalorder %s15, 0
    %p84 = por %p82, %p83
    %s85 = ssub.s32 %s9, %s16
    %p86 = scmp.eq.s32.totalorder %s85, 0
    %s88 = sadd.s32 %s87, 1
    %s89 = scalar_select %p86, %s87, %s88
    %p92 = pneg %p86
    %p93 = scmp.eq.s32.totalorder %s9, 3
    %p94 = por %p92, %p93
    %p95 = scmp.ne.s32.totalorder %s87, %s90
    %p96 = scmp.eq.s32.totalorder %s9, 0
    %p97 = por %p95, %p96
    %p98 = scmp.ne.s32.totalorder %s87, %s90
    %p99 = scmp.eq.s32.totalorder %s14, 3
    %p100 = por %p98, %p99
    %p101 = scmp.ne.s32.totalorder %s90, %s91
    %p102 = scmp.eq.s32.totalorder %s14, 0
    %p103 = por %p101, %p102
    %p104 = scmp.ne.s32.totalorder %s90, %s91
    %p105 = scmp.eq.s32.totalorder %s15, 3
    %p106 = por %p104, %p105
    %p108 = scmp.ne.s32.totalorder %s91, %s107
    %p109 = scmp.eq.s32.totalorder %s15, 0
    %p110 = por %p108, %p109
    %p111 = scmp.le.s32.totalorder 1, %s9
    %p112 = scmp.lt.s32.totalorder %s9, 5
    %p113 = pnand %p111, %p112
    %p114 = pneg %p113
    // Predicated region
    $region9: #{respath_block.4} parent=5 // pred_check
      _
    $region10: #{respath_block.4} parent=5 // pred_check_branch
      %116 = sbr.rel (%p113) target = $region12
    $region11: #{respath_block.4} parent=5 // pred_region
      %s117 = ssub.s32 %s9, 1
      // Predicated region
      $region13: #{respath_block.4} parent=11 // pred_check
        %p118 = pneg %p56
      $region14: #{respath_block.4} parent=11 // pred_check_branch
        %120 = sbr.rel (%p118) target = $region16
      $region15: #{respath_block.4} parent=11 // pred_region
        _
      $region16: #{respath_block.4} parent=11 // pred_fallthru
        _
      // Predicated region
      $region17: #{respath_block.4} parent=11 // pred_check
        %p121 = pneg %p77
      $region18: #{respath_block.4} parent=11 // pred_check_branch
        %123 = sbr.rel (%p121) target = $region20
      $region19: #{respath_block.4} parent=11 // pred_region
        _
      $region20: #{respath_block.4} parent=11 // pred_fallthru
        _
    $region12: #{respath_block.4} parent=5 // pred_fallthru
      _
    %p124 = scmp.lt.s32.totalorder %s9, 4
    // Predicated region
    $region21: #{respath_block.4} parent=5 // pred_check
      %p125 = pneg %p124
    $region22: #{respath_block.4} parent=5 // pred_check_branch
      %127 = sbr.rel (%p125) target = $region24
    $region23: #{respath_block.4} parent=5 // pred_region
      // Predicated region
      $region25: #{respath_block.4} parent=23 // pred_check
        %p128 = pneg %p29
      $region26: #{respath_block.4} parent=23 // pred_check_branch
        %130 = sbr.rel (%p128) target = $region28
      $region27: #{respath_block.4} parent=23 // pred_region
        %p131 = scmp.lt.s32.totalorder %s9, 3
        %s132 = scalar_select %p131, %s9, 3
        %s133 = smul.addr %s132, 30
        %s134 = smul.addr %s133, 8
        %s135 = scalar_lea.vmem %s0, %s134
      $region28: #{respath_block.4} parent=23 // pred_fallthru
        _
    $region24: #{respath_block.4} parent=5 // pred_fallthru
      _
    %p136 = scmp.le.s32.totalorder 1, %s9
    %p137 = scmp.lt.s32.totalorder %s9, 5
    %p138 = pnand %p136, %p137
    %p139 = pneg %p138
    // Predicated region
    $region29: #{respath_block.4} parent=5 // pred_check
      _
    $region30: #{respath_block.4} parent=5 // pred_check_branch
      %141 = sbr.rel (%p138) target = $region32
    $region31: #{respath_block.4} parent=5 // pred_region
      %s142 = ssub.s32 %s9, 1
      %p143 = scmp.lt.s32.totalorder %s14, 3
      %s144 = scalar_select %p143, %s14, 3
      %s145 = smul.addr %s144, 30
      %s146 = smul.addr %s145, 8
      %s147 = scalar_lea.vmem %s0, %s146
      %p148 = pneg %p35
      %p149 = pneg %p32
      %p150 = pneg %p56
      %p151 = pneg %p53
      %p152 = pneg %p77
      %p153 = pneg %p74
      %p154 = pneg %p103
      %p155 = pneg %p100
      %p156 = scmp.lt.s32.totalorder %s14, 3
      %s157 = scalar_select %p156, %s14, 3
      %s158 = smul.addr %s157, 8
      %s159 = scalar_lea.vmem %s3, %s158
      %p160 = scmp.lt.s32.totalorder %s14, 3
      %s161 = scalar_select %p160, %s14, 3
      %s162 = smul.addr %s161, 30
      %s163 = smul.addr %s162, 8
      %s164 = scalar_lea.vmem %s0, %s163
      %p165 = scmp.lt.s32.totalorder %s14, 3
      %s166 = scalar_select %p165, %s14, 3
      %s167 = smul.addr %s166, 8
      %s168 = scalar_lea.vmem %s3, %s167
      %v169 = vld [vmem:[%s164] sm:$0xff]
      %v170 = vld [vmem:[%s164 + $0x8] sm:$0xff]
      %v171 = vld [vmem:[%s164 + $0x10] sm:$0x3]
      %v172 = vld [vmem:[%s164 + $0x18] sm:$0xff]
      %v173 = vld [vmem:[%s164 + $0x20] sm:$0xff]
      %v174 = vld [vmem:[%s164 + $0x28] sm:$0x3]
      %v175 = vld [vmem:[%s164 + $0x30] sm:$0xff]
      %v176 = vld [vmem:[%s164 + $0x38] sm:$0xff]
      %v177 = vld [vmem:[%s164 + $0x40] sm:$0x3]
      %v178 = vld [vmem:[%s164 + $0x48] sm:$0xff]
      %v179 = vld [vmem:[%s164 + $0x50] sm:$0xff]
      %v180 = vld [vmem:[%s164 + $0x58] sm:$0x3]
      %v181 = vld [vmem:[%s164 + $0x60] sm:$0xff]
      %v182 = vld [vmem:[%s164 + $0x68] sm:$0xff]
      %v183 = vld [vmem:[%s164 + $0x70] sm:$0x3]
      %v184 = vld [vmem:[%s164 + $0x78] sm:$0xff]
      %v185 = vld [vmem:[%s164 + $0x80] sm:$0xff]
      %v186 = vld [vmem:[%s164 + $0x88] sm:$0x3]
      %v187 = vld [vmem:[%s164 + $0x90] sm:$0xff]
      %v188 = vld [vmem:[%s164 + $0x98] sm:$0xff]
      %v189 = vld [vmem:[%s164 + $0xa0] sm:$0x3]
      %v190 = vld [vmem:[%s164 + $0xa8] sm:$0xff]
      %v191 = vld [vmem:[%s164 + $0xb0] sm:$0xff]
      %v192 = vld [vmem:[%s164 + $0xb8] sm:$0x3]
      %v193 = vld [vmem:[%s164 + $0xc0] sm:$0xff]
      %v194 = vld [vmem:[%s164 + $0xc8] sm:$0xff]
      %v195 = vld [vmem:[%s164 + $0xd0] sm:$0x3]
      %v196 = vld [vmem:[%s164 + $0xd8] sm:$0xff]
      %v197 = vld [vmem:[%s164 + $0xe0] sm:$0xff]
      %v198 = vld [vmem:[%s164 + $0xe8] sm:$0x3]
      %vm223 = vcmask 1046528
      %v224 = vrot.slane %v169, 1
      %v225 = vrot.slane %v170, 1
      %v226 = vsel %vm223, %v224, %v225
      %v227 = vrot.slane %v171, 1
      %v228 = vsel %vm223, %v225, %v227
      %v229 = vrot.slane %v172, 1
      %v230 = vrot.slane %v173, 1
      %v231 = vsel %vm223, %v229, %v230
      %v232 = vrot.slane %v174, 1
      %v233 = vsel %vm223, %v230, %v232
      %v234 = vrot.slane %v175, 1
      %v235 = vrot.slane %v176, 1
      %v236 = vsel %vm223, %v234, %v235
      %v237 = vrot.slane %v177, 1
      %v238 = vsel %vm223, %v235, %v237
      %v239 = vrot.slane %v178, 1
      %v240 = vrot.slane %v179, 1
      %v241 = vsel %vm223, %v239, %v240
      %v242 = vrot.slane %v180, 1
      %v243 = vsel %vm223, %v240, %v242
      %v244 = vrot.slane %v181, 1
      %v245 = vrot.slane %v182, 1
      %v246 = vsel %vm223, %v244, %v245
      %v247 = vrot.slane %v183, 1
      %v248 = vsel %vm223, %v245, %v247
      %v249 = vrot.slane %v184, 1
      %v250 = vrot.slane %v185, 1
      %v251 = vsel %vm223, %v249, %v250
      %v252 = vrot.slane %v186, 1
      %v253 = vsel %vm223, %v250, %v252
      %v254 = vrot.slane %v187, 1
      %v255 = vrot.slane %v188, 1
      %v256 = vsel %vm223, %v254, %v255
      %v257 = vrot.slane %v189, 1
      %v258 = vsel %vm223, %v255, %v257
      %v259 = vrot.slane %v190, 1
      %v260 = vrot.slane %v191, 1
      %v261 = vsel %vm223, %v259, %v260
      %v262 = vrot.slane %v192, 1
      %v263 = vsel %vm223, %v260, %v262
      %264 = vrot.lane.b32.xlu0 %v226, 4
      %v265 = vpop.permute.xlu0 %264
      %266 = vrot.lane.b32.xlu0 %v228, 4
      %v267 = vpop.permute.xlu0 %266
      %268 = vrot.lane.b32.xlu0 %v231, 4
      %v269 = vpop.permute.xlu0 %268
      %270 = vrot.lane.b32.xlu0 %v233, 4
      %v271 = vpop.permute.xlu0 %270
      %272 = vrot.lane.b32.xlu0 %v236, 4
      %v273 = vpop.permute.xlu0 %272
      %274 = vrot.lane.b32.xlu0 %v238, 4
      %v275 = vpop.permute.xlu0 %274
      %276 = vrot.lane.b32.xlu0 %v241, 4
      %v277 = vpop.permute.xlu0 %276
      %278 = vrot.lane.b32.xlu0 %v243, 4
      %v279 = vpop.permute.xlu0 %278
      %280 = vrot.lane.b32.xlu0 %v246, 4
      %v281 = vpop.permute.xlu0 %280
      %282 = vrot.lane.b32.xlu0 %v248, 4
      %v283 = vpop.permute.xlu0 %282
      %284 = vrot.lane.b32.xlu0 %v251, 4
      %v285 = vpop.permute.xlu0 %284
      %286 = vrot.lane.b32.xlu0 %v253, 4
      %v287 = vpop.permute.xlu0 %286
      %288 = vrot.lane.b32.xlu0 %v256, 4
      %v289 = vpop.permute.xlu0 %288
      %290 = vrot.lane.b32.xlu0 %v258, 4
      %v291 = vpop.permute.xlu0 %290
      %292 = vrot.lane.b32.xlu0 %v261, 4
      %v293 = vpop.permute.xlu0 %292
      %294 = vrot.lane.b32.xlu0 %v263, 4
      %v295 = vpop.permute.xlu0 %294
      %vm312 = vcmask 1045504
      %v313 = vrot.slane %v169, 2
      %v314 = vrot.slane %v170, 2
      %v315 = vsel %vm312, %v313, %v314
      %v316 = vrot.slane %v171, 2
      %v317 = vsel %vm312, %v314, %v316
      %v318 = vrot.slane %v172, 2
      %v319 = vrot.slane %v173, 2
      %v320 = vsel %vm312, %v318, %v319
      %v321 = vrot.slane %v174, 2
      %v322 = vsel %vm312, %v319, %v321
      %v323 = vrot.slane %v175, 2
      %v324 = vrot.slane %v176, 2
      %v325 = vsel %vm312, %v323, %v324
      %v326 = vrot.slane %v177, 2
      %v327 = vsel %vm312, %v324, %v326
      %v328 = vrot.slane %v178, 2
      %v329 = vrot.slane %v179, 2
      %v330 = vsel %vm312, %v328, %v329
      %v331 = vrot.slane %v180, 2
      %v332 = vsel %vm312, %v329, %v331
      %v333 = vrot.slane %v181, 2
      %v334 = vrot.slane %v182, 2
      %v335 = vsel %vm312, %v333, %v334
      %v336 = vrot.slane %v183, 2
      %v337 = vsel %vm312, %v334, %v336
      %v338 = vrot.slane %v184, 2
      %v339 = vrot.slane %v185, 2
      %v340 = vsel %vm312, %v338, %v339
      %v341 = vrot.slane %v186, 2
      %v342 = vsel %vm312, %v339, %v341
      %v343 = vrot.slane %v187, 2
      %v344 = vrot.slane %v188, 2
      %v345 = vsel %vm312, %v343, %v344
      %v346 = vrot.slane %v189, 2
      %v347 = vsel %vm312, %v344, %v346
      %v348 = vrot.slane %v190, 2
      %v349 = vrot.slane %v191, 2
      %v350 = vsel %vm312, %v348, %v349
      %v351 = vrot.slane %v192, 2
      %v352 = vsel %vm312, %v349, %v351
      %353 = vrot.lane.b32.xlu0 %v315, 8
      %v354 = vpop.permute.xlu0 %353
      %355 = vrot.lane.b32.xlu0 %v317, 8
      %v356 = vpop.permute.xlu0 %355
      %357 = vrot.lane.b32.xlu0 %v320, 8
      %v358 = vpop.permute.xlu0 %357
      %359 = vrot.lane.b32.xlu0 %v322, 8
      %v360 = vpop.permute.xlu0 %359
      %361 = vrot.lane.b32.xlu0 %v325, 8
      %v362 = vpop.permute.xlu0 %361
      %363 = vrot.lane.b32.xlu0 %v327, 8
      %v364 = vpop.permute.xlu0 %363
      %365 = vrot.lane.b32.xlu0 %v330, 8
      %v366 = vpop.permute.xlu0 %365
      %367 = vrot.lane.b32.xlu0 %v332, 8
      %v368 = vpop.permute.xlu0 %367
      %369 = vrot.lane.b32.xlu0 %v335, 8
      %v370 = vpop.permute.xlu0 %369
      %371 = vrot.lane.b32.xlu0 %v337, 8
      %v372 = vpop.permute.xlu0 %371
      %373 = vrot.lane.b32.xlu0 %v340, 8
      %v374 = vpop.permute.xlu0 %373
      %375 = vrot.lane.b32.xlu0 %v342, 8
      %v376 = vpop.permute.xlu0 %375
      %377 = vrot.lane.b32.xlu0 %v345, 8
      %v378 = vpop.permute.xlu0 %377
      %379 = vrot.lane.b32.xlu0 %v347, 8
      %v380 = vpop.permute.xlu0 %379
      %381 = vrot.lane.b32.xlu0 %v350, 8
      %v382 = vpop.permute.xlu0 %381
      %383 = vrot.lane.b32.xlu0 %v352, 8
      %v384 = vpop.permute.xlu0 %383
      %403 = vrot.lane.b32.xlu0 %v172, 12
      %v404 = vpop.permute.xlu0 %403
      %405 = vrot.lane.b32.xlu0 %v173, 12
      %v406 = vpop.permute.xlu0 %405
      %407 = vrot.lane.b32.xlu0 %v175, 12
      %v408 = vpop.permute.xlu0 %407
      %409 = vrot.lane.b32.xlu0 %v176, 12
      %v410 = vpop.permute.xlu0 %409
      %411 = vrot.lane.b32.xlu0 %v178, 12
      %v412 = vpop.permute.xlu0 %411
      %413 = vrot.lane.b32.xlu0 %v179, 12
      %v414 = vpop.permute.xlu0 %413
      %415 = vrot.lane.b32.xlu0 %v181, 12
      %v416 = vpop.permute.xlu0 %415
      %417 = vrot.lane.b32.xlu0 %v182, 12
      %v418 = vpop.permute.xlu0 %417
      %419 = vrot.lane.b32.xlu0 %v184, 12
      %v420 = vpop.permute.xlu0 %419
      %421 = vrot.lane.b32.xlu0 %v185, 12
      %v422 = vpop.permute.xlu0 %421
      %423 = vrot.lane.b32.xlu0 %v187, 12
      %v424 = vpop.permute.xlu0 %423
      %425 = vrot.lane.b32.xlu0 %v188, 12
      %v426 = vpop.permute.xlu0 %425
      %427 = vrot.lane.b32.xlu0 %v190, 12
      %v428 = vpop.permute.xlu0 %427
      %429 = vrot.lane.b32.xlu0 %v191, 12
      %v430 = vpop.permute.xlu0 %429
      %431 = vrot.lane.b32.xlu0 %v193, 12
      %v432 = vpop.permute.xlu0 %431
      %433 = vrot.lane.b32.xlu0 %v194, 12
      %v434 = vpop.permute.xlu0 %433
      %v452 = vrot.slane %v193, 1
      %v453 = vrot.slane %v194, 1
      %v454 = vsel %vm223, %v452, %v453
      %v455 = vrot.slane %v195, 1
      %v456 = vsel %vm223, %v453, %v455
      %457 = vrot.lane.b32.xlu0 %v231, 16
      %v458 = vpop.permute.xlu0 %457
      %459 = vrot.lane.b32.xlu0 %v233, 16
      %v460 = vpop.permute.xlu0 %459
      %461 = vrot.lane.b32.xlu0 %v236, 16
      %v462 = vpop.permute.xlu0 %461
      %463 = vrot.lane.b32.xlu0 %v238, 16
      %v464 = vpop.permute.xlu0 %463
      %465 = vrot.lane.b32.xlu0 %v241, 16
      %v466 = vpop.permute.xlu0 %465
      %467 = vrot.lane.b32.xlu0 %v243, 16
      %v468 = vpop.permute.xlu0 %467
      %469 = vrot.lane.b32.xlu0 %v246, 16
      %v470 = vpop.permute.xlu0 %469
      %471 = vrot.lane.b32.xlu0 %v248, 16
      %v472 = vpop.permute.xlu0 %471
      %473 = vrot.lane.b32.xlu0 %v251, 16
      %v474 = vpop.permute.xlu0 %473
      %475 = vrot.lane.b32.xlu0 %v253, 16
      %v476 = vpop.permute.xlu0 %475
      %477 = vrot.lane.b32.xlu0 %v256, 16
      %v478 = vpop.permute.xlu0 %477
      %479 = vrot.lane.b32.xlu0 %v258, 16
      %v480 = vpop.permute.xlu0 %479
      %481 = vrot.lane.b32.xlu0 %v261, 16
      %v482 = vpop.permute.xlu0 %481
      %483 = vrot.lane.b32.xlu0 %v263, 16
      %v484 = vpop.permute.xlu0 %483
      %485 = vrot.lane.b32.xlu0 %v454, 16
      %v486 = vpop.permute.xlu0 %485
      %487 = vrot.lane.b32.xlu0 %v456, 16
      %v488 = vpop.permute.xlu0 %487
      %v505 = vrot.slane %v193, 2
      %v506 = vrot.slane %v194, 2
      %v507 = vsel %vm312, %v505, %v506
      %v508 = vrot.slane %v195, 2
      %v509 = vsel %vm312, %v506, %v508
      %510 = vrot.lane.b32.xlu0 %v320, 20
      %v511 = vpop.permute.xlu0 %510
      %512 = vrot.lane.b32.xlu0 %v322, 20
      %v513 = vpop.permute.xlu0 %512
      %514 = vrot.lane.b32.xlu0 %v325, 20
      %v515 = vpop.permute.xlu0 %514
      %516 = vrot.lane.b32.xlu0 %v327, 20
      %v517 = vpop.permute.xlu0 %516
      %518 = vrot.lane.b32.xlu0 %v330, 20
      %v519 = vpop.permute.xlu0 %518
      %520 = vrot.lane.b32.xlu0 %v332, 20
      %v521 = vpop.permute.xlu0 %520
      %522 = vrot.lane.b32.xlu0 %v335, 20
      %v523 = vpop.permute.xlu0 %522
      %524 = vrot.lane.b32.xlu0 %v337, 20
      %v525 = vpop.permute.xlu0 %524
      %526 = vrot.lane.b32.xlu0 %v340, 20
      %v527 = vpop.permute.xlu0 %526
      %528 = vrot.lane.b32.xlu0 %v342, 20
      %v529 = vpop.permute.xlu0 %528
      %530 = vrot.lane.b32.xlu0 %v345, 20
      %v531 = vpop.permute.xlu0 %530
      %532 = vrot.lane.b32.xlu0 %v347, 20
      %v533 = vpop.permute.xlu0 %532
      %534 = vrot.lane.b32.xlu0 %v350, 20
      %v535 = vpop.permute.xlu0 %534
      %536 = vrot.lane.b32.xlu0 %v352, 20
      %v537 = vpop.permute.xlu0 %536
      %538 = vrot.lane.b32.xlu0 %v507, 20
      %v539 = vpop.permute.xlu0 %538
      %540 = vrot.lane.b32.xlu0 %v509, 20
      %v541 = vpop.permute.xlu0 %540
      %560 = vrot.lane.b32.xlu0 %v175, 24
      %v561 = vpop.permute.xlu0 %560
      %562 = vrot.lane.b32.xlu0 %v176, 24
      %v563 = vpop.permute.xlu0 %562
      %564 = vrot.lane.b32.xlu0 %v178, 24
      %v565 = vpop.permute.xlu0 %564
      %566 = vrot.lane.b32.xlu0 %v179, 24
      %v567 = vpop.permute.xlu0 %566
      %568 = vrot.lane.b32.xlu0 %v181, 24
      %v569 = vpop.permute.xlu0 %568
      %570 = vrot.lane.b32.xlu0 %v182, 24
      %v571 = vpop.permute.xlu0 %570
      %572 = vrot.lane.b32.xlu0 %v184, 24
      %v573 = vpop.permute.xlu0 %572
      %574 = vrot.lane.b32.xlu0 %v185, 24
      %v575 = vpop.permute.xlu0 %574
      %576 = vrot.lane.b32.xlu0 %v187, 24
      %v577 = vpop.permute.xlu0 %576
      %578 = vrot.lane.b32.xlu0 %v188, 24
      %v579 = vpop.permute.xlu0 %578
      %580 = vrot.lane.b32.xlu0 %v190, 24
      %v581 = vpop.permute.xlu0 %580
      %582 = vrot.lane.b32.xlu0 %v191, 24
      %v583 = vpop.permute.xlu0 %582
      %584 = vrot.lane.b32.xlu0 %v193, 24
      %v585 = vpop.permute.xlu0 %584
      %586 = vrot.lane.b32.xlu0 %v194, 24
      %v587 = vpop.permute.xlu0 %586
      %588 = vrot.lane.b32.xlu0 %v196, 24
      %v589 = vpop.permute.xlu0 %588
      %590 = vrot.lane.b32.xlu0 %v197, 24
      %v591 = vpop.permute.xlu0 %590
      %v609 = vrot.slane %v196, 1
      %v610 = vrot.slane %v197, 1
      %v611 = vsel %vm223, %v609, %v610
      %v612 = vrot.slane %v198, 1
      %v613 = vsel %vm223, %v610, %v612
      %614 = vrot.lane.b32.xlu0 %v236, 28
      %v615 = vpop.permute.xlu0 %614
      %616 = vrot.lane.b32.xlu0 %v238, 28
      %v617 = vpop.permute.xlu0 %616
      %618 = vrot.lane.b32.xlu0 %v241, 28
      %v619 = vpop.permute.xlu0 %618
      %620 = vrot.lane.b32.xlu0 %v243, 28
      %v621 = vpop.permute.xlu0 %620
      %622 = vrot.lane.b32.xlu0 %v246, 28
      %v623 = vpop.permute.xlu0 %622
      %624 = vrot.lane.b32.xlu0 %v248, 28
      %v625 = vpop.permute.xlu0 %624
      %626 = vrot.lane.b32.xlu0 %v251, 28
      %v627 = vpop.permute.xlu0 %626
      %628 = vrot.lane.b32.xlu0 %v253, 28
      %v629 = vpop.permute.xlu0 %628
      %630 = vrot.lane.b32.xlu0 %v256, 28
      %v631 = vpop.permute.xlu0 %630
      %632 = vrot.lane.b32.xlu0 %v258, 28
      %v633 = vpop.permute.xlu0 %632
      %634 = vrot.lane.b32.xlu0 %v261, 28
      %v635 = vpop.permute.xlu0 %634
      %636 = vrot.lane.b32.xlu0 %v263, 28
      %v637 = vpop.permute.xlu0 %636
      %638 = vrot.lane.b32.xlu0 %v454, 28
      %v639 = vpop.permute.xlu0 %638
      %640 = vrot.lane.b32.xlu0 %v456, 28
      %v641 = vpop.permute.xlu0 %640
      %642 = vrot.lane.b32.xlu0 %v611, 28
      %v643 = vpop.permute.xlu0 %642
      %644 = vrot.lane.b32.xlu0 %v613, 28
      %v645 = vpop.permute.xlu0 %644
      %v662 = vrot.slane %v196, 2
      %v663 = vrot.slane %v197, 2
      %v664 = vsel %vm312, %v662, %v663
      %v665 = vrot.slane %v198, 2
      %v666 = vsel %vm312, %v663, %v665
      %667 = vrot.lane.b32.xlu0 %v325, 32
      %v668 = vpop.permute.xlu0 %667
      %669 = vrot.lane.b32.xlu0 %v327, 32
      %v670 = vpop.permute.xlu0 %669
      %671 = vrot.lane.b32.xlu0 %v330, 32
      %v672 = vpop.permute.xlu0 %671
      %673 = vrot.lane.b32.xlu0 %v332, 32
      %v674 = vpop.permute.xlu0 %673
      %675 = vrot.lane.b32.xlu0 %v335, 32
      %v676 = vpop.permute.xlu0 %675
      %677 = vrot.lane.b32.xlu0 %v337, 32
      %v678 = vpop.permute.xlu0 %677
      %679 = vrot.lane.b32.xlu0 %v340, 32
      %v680 = vpop.permute.xlu0 %679
      %681 = vrot.lane.b32.xlu0 %v342, 32
      %v682 = vpop.permute.xlu0 %681
      %683 = vrot.lane.b32.xlu0 %v345, 32
      %v684 = vpop.permute.xlu0 %683
      %685 = vrot.lane.b32.xlu0 %v347, 32
      %v686 = vpop.permute.xlu0 %685
      %687 = vrot.lane.b32.xlu0 %v350, 32
      %v688 = vpop.permute.xlu0 %687
      %689 = vrot.lane.b32.xlu0 %v352, 32
      %v690 = vpop.permute.xlu0 %689
      %691 = vrot.lane.b32.xlu0 %v507, 32
      %v692 = vpop.permute.xlu0 %691
      %693 = vrot.lane.b32.xlu0 %v509, 32
      %v694 = vpop.permute.xlu0 %693
      %695 = vrot.lane.b32.xlu0 %v664, 32
      %v696 = vpop.permute.xlu0 %695
      %697 = vrot.lane.b32.xlu0 %v666, 32
      %v698 = vpop.permute.xlu0 %697
      %vm715 = vcmask 31744
      %v716 = vsel %vm715, %v169, %v265
      %v717 = vsel %vm715, %v170, %v267
      %v718 = vsel %vm715, %v172, %v269
      %v719 = vsel %vm715, %v173, %v271
      %v720 = vsel %vm715, %v175, %v273
      %v721 = vsel %vm715, %v176, %v275
      %v722 = vsel %vm715, %v178, %v277
      %v723 = vsel %vm715, %v179, %v279
      %v724 = vsel %vm715, %v181, %v281
      %v725 = vsel %vm715, %v182, %v283
      %v726 = vsel %vm715, %v184, %v285
      %v727 = vsel %vm715, %v185, %v287
      %v728 = vsel %vm715, %v187, %v289
      %v729 = vsel %vm715, %v188, %v291
      %v730 = vsel %vm715, %v190, %v293
      %v731 = vsel %vm715, %v191, %v295
      %vm732 = vcmask 64512
      %v733 = vsel %vm732, %v716, %v354
      %v734 = vsel %vm732, %v717, %v356
      %v735 = vsel %vm732, %v718, %v358
      %v736 = vsel %vm732, %v719, %v360
      %v737 = vsel %vm732, %v720, %v362
      %v738 = vsel %vm732, %v721, %v364
      %v739 = vsel %vm732, %v722, %v366
      %v740 = vsel %vm732, %v723, %v368
      %v741 = vsel %vm732, %v724, %v370
      %v742 = vsel %vm732, %v725, %v372
      %v743 = vsel %vm732, %v726, %v374
      %v744 = vsel %vm732, %v727, %v376
      %v745 = vsel %vm732, %v728, %v378
      %v746 = vsel %vm732, %v729, %v380
      %v747 = vsel %vm732, %v730, %v382
      %v748 = vsel %vm732, %v731, %v384
      %vm749 = vcmask 97280
      %v750 = vsel %vm749, %v733, %v404
      %v751 = vsel %vm749, %v734, %v406
      %v752 = vsel %vm749, %v735, %v408
      %v753 = vsel %vm749, %v736, %v410
      %v754 = vsel %vm749, %v737, %v412
      %v755 = vsel %vm749, %v738, %v414
      %v756 = vsel %vm749, %v739, %v416
      %v757 = vsel %vm749, %v740, %v418
      %v758 = vsel %vm749, %v741, %v420
      %v759 = vsel %vm749, %v742, %v422
      %v760 = vsel %vm749, %v743, %v424
      %v761 = vsel %vm749, %v744, %v426
      %v762 = vsel %vm749, %v745, %v428
      %v763 = vsel %vm749, %v746, %v430
      %v764 = vsel %vm749, %v747, %v432
      %v765 = vsel %vm749, %v748, %v434
      %vm766 = vcmask 130048
      %v767 = vsel %vm766, %v750, %v458
      %v768 = vsel %vm766, %v751, %v460
      %v769 = vsel %vm766, %v752, %v462
      %v770 = vsel %vm766, %v753, %v464
      %v771 = vsel %vm766, %v754, %v466
      %v772 = vsel %vm766, %v755, %v468
      %v773 = vsel %vm766, %v756, %v470
      %v774 = vsel %vm766, %v757, %v472
      %v775 = vsel %vm766, %v758, %v474
      %v776 = vsel %vm766, %v759, %v476
      %v777 = vsel %vm766, %v760, %v478
      %v778 = vsel %vm766, %v761, %v480
      %v779 = vsel %vm766, %v762, %v482
      %v780 = vsel %vm766, %v763, %v484
      %v781 = vsel %vm766, %v764, %v486
      %v782 = vsel %vm766, %v765, %v488
      %vm783 = vcmask 162816
      %v784 = vsel %vm783, %v767, %v511
      %v785 = vsel %vm783, %v768, %v513
      %v786 = vsel %vm783, %v769, %v515
      %v787 = vsel %vm783, %v770, %v517
      %v788 = vsel %vm783, %v771, %v519
      %v789 = vsel %vm783, %v772, %v521
      %v790 = vsel %vm783, %v773, %v523
      %v791 = vsel %vm783, %v774, %v525
      %v792 = vsel %vm783, %v775, %v527
      %v793 = vsel %vm783, %v776, %v529
      %v794 = vsel %vm783, %v777, %v531
      %v795 = vsel %vm783, %v778, %v533
      %v796 = vsel %vm783, %v779, %v535
      %v797 = vsel %vm783, %v780, %v537
      %v798 = vsel %vm783, %v781, %v539
      %v799 = vsel %vm783, %v782, %v541
      %vm800 = vcmask 195584
      %v801 = vsel %vm800, %v784, %v561
      %v802 = vsel %vm800, %v785, %v563
      %v803 = vsel %vm800, %v786, %v565
      %v804 = vsel %vm800, %v787, %v567
      %v805 = vsel %vm800, %v788, %v569
      %v806 = vsel %vm800, %v789, %v571
      %v807 = vsel %vm800, %v790, %v573
      %v808 = vsel %vm800, %v791, %v575
      %v809 = vsel %vm800, %v792, %v577
      %v810 = vsel %vm800, %v793, %v579
      %v811 = vsel %vm800, %v794, %v581
      %v812 = vsel %vm800, %v795, %v583
      %v813 = vsel %vm800, %v796, %v585
      %v814 = vsel %vm800, %v797, %v587
      %v815 = vsel %vm800, %v798, %v589
      %v816 = vsel %vm800, %v799, %v591
      %vm817 = vcmask 228352
      %v818 = vsel %vm817, %v801, %v615
      %v819 = vsel %vm817, %v802, %v617
      %v820 = vsel %vm817, %v803, %v619
      %v821 = vsel %vm817, %v804, %v621
      %v822 = vsel %vm817, %v805, %v623
      %v823 = vsel %vm817, %v806, %v625
      %v824 = vsel %vm817, %v807, %v627
      %v825 = vsel %vm817, %v808, %v629
      %v826 = vsel %vm817, %v809, %v631
      %v827 = vsel %vm817, %v810, %v633
      %v828 = vsel %vm817, %v811, %v635
      %v829 = vsel %vm817, %v812, %v637
      %v830 = vsel %vm817, %v813, %v639
      %v831 = vsel %vm817, %v814, %v641
      %v832 = vsel %vm817, %v815, %v643
      %v833 = vsel %vm817, %v816, %v645
      %vm834 = vcmask 261120
      %v835 = vsel %vm834, %v818, %v668
      %v836 = vsel %vm834, %v819, %v670
      %v837 = vsel %vm834, %v820, %v672
      %v838 = vsel %vm834, %v821, %v674
      %v839 = vsel %vm834, %v822, %v676
      %v840 = vsel %vm834, %v823, %v678
      %v841 = vsel %vm834, %v824, %v680
      %v842 = vsel %vm834, %v825, %v682
      %v843 = vsel %vm834, %v826, %v684
      %v844 = vsel %vm834, %v827, %v686
      %v845 = vsel %vm834, %v828, %v688
      %v846 = vsel %vm834, %v829, %v690
      %v847 = vsel %vm834, %v830, %v692
      %v848 = vsel %vm834, %v831, %v694
      %v849 = vsel %vm834, %v832, %v696
      %v850 = vsel %vm834, %v833, %v698
      %v851 = vld [vmem:[%s1] sm:$0xff]
      %v852 = vld [vmem:[%s1 + $0x8] sm:$0xff]
      %v853 = vld [vmem:[%s1 + $0x10] sm:$0xff]
      %v854 = vld [vmem:[%s1 + $0x18] sm:$0xff]
      %v855 = vld [vmem:[%s1 + $0x20] sm:$0xf]
      %vm856 = vcmask 293888
      %v858 = vsel %vm856, %v835, 0
      %v861 = vsel %vm856, %v836, 0
      %v864 = vsel %vm856, %v837, 0
      %v867 = vsel %vm856, %v838, 0
      %v870 = vsel %vm856, %v839, 0
      %v873 = vsel %vm856, %v840, 0
      %v876 = vsel %vm856, %v841, 0
      %v879 = vsel %vm856, %v842, 0
      %v882 = vsel %vm856, %v843, 0
      %v885 = vsel %vm856, %v844, 0
      %v888 = vsel %vm856, %v845, 0
      %v891 = vsel %vm856, %v846, 0
      %v894 = vsel %vm856, %v847, 0
      %v897 = vsel %vm856, %v848, 0
      %v900 = vsel %vm856, %v849, 0
      %v903 = vsel %vm856, %v850, 0
      %vm905 = vcmask 1043456
      %v907 = vsel %vm905, %v855, 0
      %909 = vmatprep.subr.mxu0 0.0
      %910 = vmatpush1.msra.mxu0 %v851
      %911 = vmatprep.subr.mxu0 0.0
      %912 = vmatpush1.msra.mxu0 %v852
      %913 = vmatprep.subr.mxu0 0.0
      %914 = vmatpush1.msra.mxu0 %v853
      %915 = vmatprep.subr.mxu0 0.0
      %916 = vmatpush1.msra.mxu0 %v854
      %917 = vmatprep.subr.mxu0 0.0
      %918 = vmatpush1.msra.mxu0 %v907
      %919 = vmatprep.subr.mxu0 0.0
      %920 = vmatpush1.msra.mxu0 0.0
      %921 = vmatprep.subr.mxu0 0.0
      %922 = vmatpush1.msra.mxu0 0.0
      %923 = vmatprep.subr.mxu0 0.0
      %924 = vmatpush1.msra.mxu0 0.0
      %925 = vmatprep.subr.mxu0 0.0
      %926 = vmatpush1.msra.mxu0 0.0
      %927 = vmatprep.subr.mxu0 0.0
      %928 = vmatpush1.msra.mxu0 0.0
      %929 = vmatprep.subr.mxu0 0.0
      %930 = vmatpush1.msra.mxu0 0.0
      %931 = vmatprep.subr.mxu0 0.0
      %932 = vmatpush1.msra.mxu0 0.0
      %933 = vmatprep.subr.mxu0 0.0
      %934 = vmatpush1.msra.mxu0 0.0
      %935 = vmatprep.subr.mxu0 0.0
      %936 = vmatpush1.msra.mxu0 0.0
      %937 = vmatprep.subr.mxu0 0.0
      %938 = vmatpush1.msra.mxu0 0.0
      %939 = vmatprep.subr.mxu0 0.0
      %940 = vmatpush1.msra.mxu0 0.0
      %941 = vmatprep.subr.mxu0 0.0
      %942 = vmatpush1.msra.mxu0 0.0
      %943 = vmatprep.subr.mxu0 0.0
      %944 = vmatpush1.msra.mxu0 0.0
      %945 = vmatprep.subr.mxu0 0.0
      %946 = vmatpush1.msra.mxu0 0.0
      %947 = vmatprep.subr.mxu0 0.0
      %948 = vmatpush1.msra.mxu0 0.0
      %949 = vmatprep.subr.mxu0 0.0
      %950 = vmatpush1.msra.mxu0 0.0
      %951 = vmatprep.subr.mxu0 0.0
      %952 = vmatpush1.msra.mxu0 0.0
      %953 = vmatprep.subr.mxu0 0.0
      %954 = vmatpush1.msra.mxu0 0.0
      %955 = vmatprep.subr.mxu0 0.0
      %956 = vmatpush1.msra.mxu0 0.0
      %957 = vmatprep.subr.mxu0 0.0
      %958 = vmatpush1.msra.mxu0 0.0
      %959 = vmatprep.subr.mxu0 0.0
      %960 = vmatpush1.msra.mxu0 0.0
      %961 = vmatprep.subr.mxu0 0.0
      %962 = vmatpush1.msra.mxu0 0.0
      %963 = vmatprep.subr.mxu0 0.0
      %964 = vmatpush1.msra.mxu0 0.0
      %965 = vmatprep.subr.mxu0 0.0
      %966 = vmatpush1.msra.mxu0 0.0
      %967 = vmatprep.subr.mxu0 0.0
      %968 = vmatpush1.msra.mxu0 0.0
      %969 = vmatprep.subr.mxu0 0.0
      %970 = vmatpush1.msra.mxu0 0.0
      %971 = vmatprep.subr.mxu0 0.0
      %972 = vmatpush1.msra.mxu0 0.0
      %973 = vmatprep.mubr.f32.mxu0 0.0
      %974 = vmatmul.mubr.f32.gmra.mrb[0].mxu0 %v858
      %v975 = vpop.f32.mrb[0].mxu0
      %v976 = vadd.f32 0.0, %v975
      %v977 = vpop.f32.mrb[0].mxu0
      %978 = vmatprep.mubr.f32.mxu0 0.0
      %979 = vmatmul.mubr.f32.gmra.mrb[0].mxu0 %v861
      %v980 = vpop.f32.mrb[0].mxu0
      %v981 = vadd.f32 0.0, %v980
      %v982 = vpop.f32.mrb[0].mxu0
      %983 = vmatprep.mubr.f32.mxu0 0.0
      %984 = vmatmul.mubr.f32.gmra.mrb[0].mxu0 %v864
      %v985 = vpop.f32.mrb[0].mxu0
      %v986 = vadd.f32 0.0, %v985
      %v987 = vpop.f32.mrb[0].mxu0
      %988 = vmatprep.mubr.f32.mxu0 0.0
      %989 = vmatmul.mubr.f32.gmra.mrb[0].mxu0 %v867
      %v990 = vpop.f32.mrb[0].mxu0
      %v991 = vadd.f32 0.0, %v990
      %v992 = vpop.f32.mrb[0].mxu0
      %993 = vmatprep.mubr.f32.mxu0 0.0
      %994 = vmatmul.mubr.f32.gmra.mrb[0].mxu0 %v870
      %v995 = vpop.f32.mrb[0].mxu0
      %v996 = vadd.f32 0.0, %v995
      %v997 = vpop.f32.mrb[0].mxu0
      %998 = vmatprep.mubr.f32.mxu0 0.0
      %999 = vmatmul.mubr.f32.gmra.mrb[0].mxu0 %v873
      %v1000 = vpop.f32.mrb[0].mxu0
      %v1001 = vadd.f32 0.0, %v1000
      %v1002 = vpop.f32.mrb[0].mxu0
      %1003 = vmatprep.mubr.f32.mxu0 0.0
      %1004 = vmatmul.mubr.f32.gmra.mrb[0].mxu0 %v876
      %v1005 = vpop.f32.mrb[0].mxu0
      %v1006 = vadd.f32 0.0, %v1005
      %v1007 = vpop.f32.mrb[0].mxu0
      %1008 = vmatprep.mubr.f32.mxu0 0.0
      %1009 = vmatmul.mubr.f32.gmra.mrb[0].mxu0 %v879
      %v1010 = vpop.f32.mrb[0].mxu0
      %v1011 = vadd.f32 0.0, %v1010
      %v1012 = vpop.f32.mrb[0].mxu0
      %1013 = vmatprep.mubr.f32.mxu0 0.0
      %1014 = vmatmul.mubr.f32.gmra.mrb[0].mxu0 %v882
      %v1015 = vpop.f32.mrb[0].mxu0
      %v1016 = vadd.f32 0.0, %v1015
      %v1017 = vpop.f32.mrb[0].mxu0
      %1018 = vmatprep.mubr.f32.mxu0 0.0
      %1019 = vmatmul.mubr.f32.gmra.mrb[0].mxu0 %v885
      %v1020 = vpop.f32.mrb[0].mxu0
      %v1021 = vadd.f32 0.0, %v1020
      %v1022 = vpop.f32.mrb[0].mxu0
      %1023 = vmatprep.mubr.f32.mxu0 0.0
      %1024 = vmatmul.mubr.f32.gmra.mrb[0].mxu0 %v888
      %v1025 = vpop.f32.mrb[0].mxu0
      %v1026 = vadd.f32 0.0, %v1025
      %v1027 = vpop.f32.mrb[0].mxu0
      %1028 = vmatprep.mubr.f32.mxu0 0.0
      %1029 = vmatmul.mubr.f32.gmra.mrb[0].mxu0 %v891
      %v1030 = vpop.f32.mrb[0].mxu0
      %v1031 = vadd.f32 0.0, %v1030
      %v1032 = vpop.f32.mrb[0].mxu0
      %1033 = vmatprep.mubr.f32.mxu0 0.0
      %1034 = vmatmul.mubr.f32.gmra.mrb[0].mxu0 %v894
      %v1035 = vpop.f32.mrb[0].mxu0
      %v1036 = vadd.f32 0.0, %v1035
      %v1037 = vpop.f32.mrb[0].mxu0
      %1038 = vmatprep.mubr.f32.mxu0 0.0
      %1039 = vmatmul.mubr.f32.gmra.mrb[0].mxu0 %v897
      %v1040 = vpop.f32.mrb[0].mxu0
      %v1041 = vadd.f32 0.0, %v1040
      %v1042 = vpop.f32.mrb[0].mxu0
      %1043 = vmatprep.mubr.f32.mxu0 0.0
      %1044 = vmatmul.mubr.f32.gmra.mrb[0].mxu0 %v900
      %v1045 = vpop.f32.mrb[0].mxu0
      %v1046 = vadd.f32 0.0, %v1045
      %v1047 = vpop.f32.mrb[0].mxu0
      %1048 = vmatprep.mubr.f32.mxu0 0.0
      %1049 = vmatmul.mubr.f32.gmra.mrb[0].mxu0 %v903
      %v1050 = vpop.f32.mrb[0].mxu0
      %v1051 = vadd.f32 0.0, %v1050
      %v1052 = vpop.f32.mrb[0].mxu0
      %1053 = vdwg.mxu0
      %v1054 = vld [vmem:[%s2] sm:$0x3]
      %v1055 = vlaneseq
      %v1056 = vshrl.u32 %v1055, 7
      %v1057 = vsub.s32 0, %v1056
      %v1058 = vrot.slane %v1054, %v1057
      %v1059 = vmul.f32 %v976, %v1058
      %v1060 = vmul.f32 %v981, %v1058
      %v1061 = vmul.f32 %v986, %v1058
      %v1062 = vmul.f32 %v991, %v1058
      %v1063 = vmul.f32 %v996, %v1058
      %v1064 = vmul.f32 %v1001, %v1058
      %v1065 = vmul.f32 %v1006, %v1058
      %v1066 = vmul.f32 %v1011, %v1058
      %v1067 = vmul.f32 %v1016, %v1058
      %v1068 = vmul.f32 %v1021, %v1058
      %v1069 = vmul.f32 %v1026, %v1058
      %v1070 = vmul.f32 %v1031, %v1058
      %v1071 = vmul.f32 %v1036, %v1058
      %v1072 = vmul.f32 %v1041, %v1058
      %v1073 = vmul.f32 %v1046, %v1058
      %v1074 = vmul.f32 %v1051, %v1058
      %v1075 = vlaneseq
      %v1076 = vshrl.u32 %v1075, 7
      %v1077 = vsub.s32 1, %v1076
      %v1078 = vrot.slane %v1054, %v1077
      %v1079 = vadd.f32 %v1059, %v1078
      %v1080 = vadd.f32 %v1060, %v1078
      %v1081 = vadd.f32 %v1061, %v1078
      %v1082 = vadd.f32 %v1062, %v1078
      %v1083 = vadd.f32 %v1063, %v1078
      %v1084 = vadd.f32 %v1064, %v1078
      %v1085 = vadd.f32 %v1065, %v1078
      %v1086 = vadd.f32 %v1066, %v1078
      %v1087 = vadd.f32 %v1067, %v1078
      %v1088 = vadd.f32 %v1068, %v1078
      %v1089 = vadd.f32 %v1069, %v1078
      %v1090 = vadd.f32 %v1070, %v1078
      %v1091 = vadd.f32 %v1071, %v1078
      %v1092 = vadd.f32 %v1072, %v1078
      %v1093 = vadd.f32 %v1073, %v1078
      %v1094 = vadd.f32 %v1074, %v1078
      %1111 = vrot.lane.b32.xlu0 %v1079, 120
      %v1112 = vpop.permute.xlu0 %1111
      %1113 = vrot.lane.b32.xlu0 %v1080, 120
      %v1114 = vpop.permute.xlu0 %1113
      %1115 = vrot.lane.b32.xlu0 %v1081, 120
      %v1116 = vpop.permute.xlu0 %1115
      %1117 = vrot.lane.b32.xlu0 %v1082, 120
      %v1118 = vpop.permute.xlu0 %1117
      %1119 = vrot.lane.b32.xlu0 %v1083, 120
      %v1120 = vpop.permute.xlu0 %1119
      %1121 = vrot.lane.b32.xlu0 %v1084, 120
      %v1122 = vpop.permute.xlu0 %1121
      %1123 = vrot.lane.b32.xlu0 %v1085, 120
      %v1124 = vpop.permute.xlu0 %1123
      %1125 = vrot.lane.b32.xlu0 %v1086, 120
      %v1126 = vpop.permute.xlu0 %1125
      %1127 = vrot.lane.b32.xlu0 %v1087, 120
      %v1128 = vpop.permute.xlu0 %1127
      %1129 = vrot.lane.b32.xlu0 %v1088, 120
      %v1130 = vpop.permute.xlu0 %1129
      %1131 = vrot.lane.b32.xlu0 %v1089, 120
      %v1132 = vpop.permute.xlu0 %1131
      %1133 = vrot.lane.b32.xlu0 %v1090, 120
      %v1134 = vpop.permute.xlu0 %1133
      %1135 = vrot.lane.b32.xlu0 %v1091, 120
      %v1136 = vpop.permute.xlu0 %1135
      %1137 = vrot.lane.b32.xlu0 %v1092, 120
      %v1138 = vpop.permute.xlu0 %1137
      %1139 = vrot.lane.b32.xlu0 %v1093, 120
      %v1140 = vpop.permute.xlu0 %1139
      %1141 = vrot.lane.b32.xlu0 %v1094, 120
      %v1142 = vpop.permute.xlu0 %1141
      %v1159 = vadd.f32 %v1079, %v1112
      %v1160 = vadd.f32 %v1080, %v1114
      %v1161 = vadd.f32 %v1081, %v1116
      %v1162 = vadd.f32 %v1082, %v1118
      %v1163 = vadd.f32 %v1083, %v1120
      %v1164 = vadd.f32 %v1084, %v1122
      %v1165 = vadd.f32 %v1085, %v1124
      %v1166 = vadd.f32 %v1086, %v1126
      %v1167 = vadd.f32 %v1087, %v1128
      %v1168 = vadd.f32 %v1088, %v1130
      %v1169 = vadd.f32 %v1089, %v1132
      %v1170 = vadd.f32 %v1090, %v1134
      %v1171 = vadd.f32 %v1091, %v1136
      %v1172 = vadd.f32 %v1092, %v1138
      %v1173 = vadd.f32 %v1093, %v1140
      %v1174 = vadd.f32 %v1094, %v1142
      %v1175 = vmax.f32 %v1159, 0.0
      %v1176 = vmax.f32 %v1160, 0.0
      %v1177 = vmax.f32 %v1161, 0.0
      %v1178 = vmax.f32 %v1162, 0.0
      %v1179 = vmax.f32 %v1163, 0.0
      %v1180 = vmax.f32 %v1164, 0.0
      %v1181 = vmax.f32 %v1165, 0.0
      %v1182 = vmax.f32 %v1166, 0.0
      %v1183 = vmax.f32 %v1167, 0.0
      %v1184 = vmax.f32 %v1168, 0.0
      %v1185 = vmax.f32 %v1169, 0.0
      %v1186 = vmax.f32 %v1170, 0.0
      %v1187 = vmax.f32 %v1171, 0.0
      %v1188 = vmax.f32 %v1172, 0.0
      %v1189 = vmax.f32 %v1173, 0.0
      %v1190 = vmax.f32 %v1174, 0.0
      %v1191 = vmul.f32 %v1175, %v1175
      %v1192 = vmul.f32 %v1176, %v1176
      %v1193 = vmul.f32 %v1177, %v1177
      %v1194 = vmul.f32 %v1178, %v1178
      %v1195 = vmul.f32 %v1179, %v1179
      %v1196 = vmul.f32 %v1180, %v1180
      %v1197 = vmul.f32 %v1181, %v1181
      %v1198 = vmul.f32 %v1182, %v1182
      %v1199 = vmul.f32 %v1183, %v1183
      %v1200 = vmul.f32 %v1184, %v1184
      %v1201 = vmul.f32 %v1185, %v1185
      %v1202 = vmul.f32 %v1186, %v1186
      %v1203 = vmul.f32 %v1187, %v1187
      %v1204 = vmul.f32 %v1188, %v1188
      %v1205 = vmul.f32 %v1189, %v1189
      %v1206 = vmul.f32 %v1190, %v1190
      %1223 = vrot.lane.b32.xlu0 %v1191, 8
      %v1224 = vpop.permute.xlu0 %1223
      %1225 = vrot.lane.b32.xlu0 %v1192, 8
      %v1226 = vpop.permute.xlu0 %1225
      %1227 = vrot.lane.b32.xlu0 %v1193, 8
      %v1228 = vpop.permute.xlu0 %1227
      %1229 = vrot.lane.b32.xlu0 %v1194, 8
      %v1230 = vpop.permute.xlu0 %1229
      %1231 = vrot.lane.b32.xlu0 %v1195, 8
      %v1232 = vpop.permute.xlu0 %1231
      %1233 = vrot.lane.b32.xlu0 %v1196, 8
      %v1234 = vpop.permute.xlu0 %1233
      %1235 = vrot.lane.b32.xlu0 %v1197, 8
      %v1236 = vpop.permute.xlu0 %1235
      %1237 = vrot.lane.b32.xlu0 %v1198, 8
      %v1238 = vpop.permute.xlu0 %1237
      %1239 = vrot.lane.b32.xlu0 %v1199, 8
      %v1240 = vpop.permute.xlu0 %1239
      %1241 = vrot.lane.b32.xlu0 %v1200, 8
      %v1242 = vpop.permute.xlu0 %1241
      %1243 = vrot.lane.b32.xlu0 %v1201, 8
      %v1244 = vpop.permute.xlu0 %1243
      %1245 = vrot.lane.b32.xlu0 %v1202, 8
      %v1246 = vpop.permute.xlu0 %1245
      %1247 = vrot.lane.b32.xlu0 %v1203, 8
      %v1248 = vpop.permute.xlu0 %1247
      %1249 = vrot.lane.b32.xlu0 %v1204, 8
      %v1250 = vpop.permute.xlu0 %1249
      %1251 = vrot.lane.b32.xlu0 %v1205, 8
      %v1252 = vpop.permute.xlu0 %1251
      %1253 = vrot.lane.b32.xlu0 %v1206, 8
      %v1254 = vpop.permute.xlu0 %1253
      %v1271 = vsel %vm732, %v1175, %v1224
      %v1272 = vsel %vm732, %v1176, %v1226
      %v1273 = vsel %vm732, %v1177, %v1228
      %v1274 = vsel %vm732, %v1178, %v1230
      %v1275 = vsel %vm732, %v1179, %v1232
      %v1276 = vsel %vm732, %v1180, %v1234
      %v1277 = vsel %vm732, %v1181, %v1236
      %v1278 = vsel %vm732, %v1182, %v1238
      %v1279 = vsel %vm732, %v1183, %v1240
      %v1280 = vsel %vm732, %v1184, %v1242
      %v1281 = vsel %vm732, %v1185, %v1244
      %v1282 = vsel %vm732, %v1186, %v1246
      %v1283 = vsel %vm732, %v1187, %v1248
      %v1284 = vsel %vm732, %v1188, %v1250
      %v1285 = vsel %vm732, %v1189, %v1252
      %v1286 = vsel %vm732, %v1190, %v1254
      %1287 = vmatprep.subr.mxu0 0.0
      %1288 = vmatpush1.msra.mxu0 %v1271
      %1289 = vmatprep.subr.mxu0 0.0
      %1290 = vmatpush1.msra.mxu0 %v1272
      %1291 = vmatprep.subr.mxu0 0.0
      %1292 = vmatpush1.msra.mxu0 %v1273
      %1293 = vmatprep.subr.mxu0 0.0
      %1294 = vmatpush1.msra.mxu0 %v1274
      %1295 = vmatprep.subr.mxu0 0.0
      %1296 = vmatpush1.msra.mxu0 %v1275
      %1297 = vmatprep.subr.mxu0 0.0
      %1298 = vmatpush1.msra.mxu0 %v1276
      %1299 = vmatprep.subr.mxu0 0.0
      %1300 = vmatpush1.msra.mxu0 %v1277
      %1301 = vmatprep.subr.mxu0 0.0
      %1302 = vmatpush1.msra.mxu0 %v1278
      %1303 = vmatprep.subr.mxu0 0.0
      %1304 = vmatpush1.msra.mxu0 %v1279
      %1305 = vmatprep.subr.mxu0 0.0
      %1306 = vmatpush1.msra.mxu0 %v1280
      %1307 = vmatprep.subr.mxu0 0.0
      %1308 = vmatpush1.msra.mxu0 %v1281
      %1309 = vmatprep.subr.mxu0 0.0
      %1310 = vmatpush1.msra.mxu0 %v1282
      %1311 = vmatprep.subr.mxu0 0.0
      %1312 = vmatpush1.msra.mxu0 %v1283
      %1313 = vmatprep.subr.mxu0 0.0
      %1314 = vmatpush1.msra.mxu0 %v1284
      %1315 = vmatprep.subr.mxu0 0.0
      %1316 = vmatpush1.msra.mxu0 %v1285
      %1317 = vmatprep.subr.mxu0 0.0
      %1318 = vmatpush1.msra.mxu0 %v1286
      %1319 = vmatprep.subr.mxu0 0.0
      %1320 = vmatpush1.msra.mxu0 0.0
      %1321 = vmatprep.subr.mxu0 0.0
      %1322 = vmatpush1.msra.mxu0 0.0
      %1323 = vmatprep.subr.mxu0 0.0
      %1324 = vmatpush1.msra.mxu0 0.0
      %1325 = vmatprep.subr.mxu0 0.0
      %1326 = vmatpush1.msra.mxu0 0.0
      %1327 = vmatprep.subr.mxu0 0.0
      %1328 = vmatpush1.msra.mxu0 0.0
      %1329 = vmatprep.subr.mxu0 0.0
      %1330 = vmatpush1.msra.mxu0 0.0
      %1331 = vmatprep.subr.mxu0 0.0
      %1332 = vmatpush1.msra.mxu0 0.0
      %1333 = vmatprep.subr.mxu0 0.0
      %1334 = vmatpush1.msra.mxu0 0.0
      %1335 = vmatprep.subr.mxu0 0.0
      %1336 = vmatpush1.msra.mxu0 0.0
      %1337 = vmatprep.subr.mxu0 0.0
      %1338 = vmatpush1.msra.mxu0 0.0
      %1339 = vmatprep.subr.mxu0 0.0
      %1340 = vmatpush1.msra.mxu0 0.0
      %1341 = vmatprep.subr.mxu0 0.0
      %1342 = vmatpush1.msra.mxu0 0.0
      %1343 = vmatprep.subr.mxu0 0.0
      %1344 = vmatpush1.msra.mxu0 0.0
      %1345 = vmatprep.subr.mxu0 0.0
      %1346 = vmatpush1.msra.mxu0 0.0
      %1347 = vmatprep.subr.mxu0 0.0
      %1348 = vmatpush1.msra.mxu0 0.0
      %1349 = vmatprep.subr.mxu0 0.0
      %1350 = vmatpush1.msra.mxu0 0.0
      %1351 = vmatprep.mubr.f32.mxu0 0.0
      %1352 = vmatmul.mubr.f32.gmra.mrb[0].mxu0 1.0
      %v1353 = vpop.f32.mrb[0].mxu0
      %v1354 = vadd.f32 0.0, %v1353
      %v1355 = vpop.f32.mrb[0].mxu0
      %1356 = vdwg.mxu0
      %1357 = vst.msk [vmem:[%s168] sm:$0xff] %vm766, %v1354
      %p1358 = scmp.lt.s32.totalorder %s14, 3
      %s1359 = scalar_select %p1358, %s14, 3
      %s1360 = smul.addr %s1359, 8
      %s1361 = scalar_lea.vmem %s3, %s1360
      // Predicated region
      $region33: #{respath_block.4} parent=31 // pred_check
        %p1362 = pneg %p100
      $region34: #{respath_block.4} parent=31 // pred_check_branch
        %1364 = sbr.rel (%p1362) target = $region36
      $region35: #{respath_block.4} parent=31 // pred_region
        _
      $region36: #{respath_block.4} parent=31 // pred_fallthru
        _
    $region32: #{respath_block.4} parent=5 // pred_fallthru
      _
    %p1365 = scmp.le.s32.totalorder 2, %s9
    // Predicated region
    $region37: #{respath_block.4} parent=5 // pred_check
      %p1366 = pneg %p1365
    $region38: #{respath_block.4} parent=5 // pred_check_branch
      %1368 = sbr.rel (%p1366) target = $region40
    $region39: #{respath_block.4} parent=5 // pred_region
      %s1369 = ssub.s32 %s9, 2
      // Predicated region
      $region41: #{respath_block.4} parent=39 // pred_check
        %p1370 = pneg %p106
      $region42: #{respath_block.4} parent=39 // pred_check_branch
        %1372 = sbr.rel (%p1370) target = $region44
      $region43: #{respath_block.4} parent=39 // pred_region
        %p1373 = scmp.lt.s32.totalorder %s15, 3
        %s1374 = scalar_select %p1373, %s15, 3
        %s1375 = smul.addr %s1374, 8
        %s1376 = scalar_lea.vmem %s3, %s1375
      $region44: #{respath_block.4} parent=39 // pred_fallthru
        _
    $region40: #{respath_block.4} parent=5 // pred_fallthru
      _
  $region6: #{respath_block.4} parent=0 // loop_footer
    %s13 = sadd.s32 1, %s9
  $region7: #{respath_block.4} parent=0 // loop_footer_branch
    %8 = sbr.rel target = $region3
  $region8: #{respath_block.4} parent=0 // loop_exit
    _

// kernel: respath_block.3
$region0: #{respath_block.3}
  #allocation0 [shape = 'u32[]', space=smem, size = 0x4, offset = 0x4, fixed_abs, tag = 'smem constant byte address 0x4 - core index']
  #allocation1 [shape = 'u32[144,128]{1,0:T(1,128)}', space=vmem, size = 0x12000, scoped, tag = 'internal scratch']
  %s0 = inlined_call_operand.vmem [shape: f32[4,10,18,4], index: 0, kind: input, shape index: {}]
  %s1 = inlined_call_operand.vmem [shape: f32[36,16], index: 1, kind: input, shape index: {}]
  %s2 = inlined_call_operand.vmem [shape: f32[4,8,32], index: 2, kind: output, shape index: {}]
  %s3 = sld [smem:[#allocation0]]
  $region41: #{respath_block.3} parent=0
    _
  %s5 = ssub.s32 1, %s3
  %s6 = scalar_select 0, %s5, %s3
  loop: start=0, step=1, limit=6
  $region2: #{respath_block.3} parent=0 // loop_pre_header
    _
  $region3: #{respath_block.3} parent=0 // loop_header
    %s8 = sphi 0, %s12
    %p9 = scmp.ge.s32.totalorder %s8, 6
    %s18 = sphi 0, %s20
    %s21 = sphi 0, %s18
    %s22 = sphi 0, %s21
    %s38 = sphi 0, %s22
    %s42 = sphi 0, %s42
    %s44 = sphi 0, %s42
    %s45 = sphi 0, %s44
    %s59 = sphi 0, %s45
    %s65 = sphi 0, %s67
    %s68 = sphi 0, %s65
    %s69 = sphi 0, %s68
    %s85 = sphi 0, %s69
  $region4: #{respath_block.3} parent=0 // loop_header_branch
    %11 = sbr.rel (%p9) target = $region8
  $region5: #{respath_block.3} parent=0 // loop_body
    %s13 = ssub.s32 %s8, 1
    %s14 = ssub.s32 %s8, 2
    %s15 = sadd.s32 %s8, 1
    %s16 = ssub.s32 %s8, %s15
    %p17 = scmp.eq.s32.totalorder %s16, 0
    %s19 = sadd.s32 %s18, 1
    %s20 = scalar_select %p17, %s18, %s19
    %p23 = pneg %p17
    %p24 = scmp.eq.s32.totalorder %s8, 3
    %p25 = por %p23, %p24
    %p26 = scmp.ne.s32.totalorder %s18, %s21
    %p27 = scmp.eq.s32.totalorder %s8, 0
    %p28 = por %p26, %p27
    %p29 = scmp.ne.s32.totalorder %s18, %s21
    %p30 = scmp.eq.s32.totalorder %s13, 3
    %p31 = por %p29, %p30
    %p32 = scmp.ne.s32.totalorder %s21, %s22
    %p33 = scmp.eq.s32.totalorder %s13, 0
    %p34 = por %p32, %p33
    %p35 = scmp.ne.s32.totalorder %s21, %s22
    %p36 = scmp.eq.s32.totalorder %s14, 3
    %p37 = por %p35, %p36
    %p39 = scmp.ne.s32.totalorder %s22, %s38
    %p40 = scmp.eq.s32.totalorder %s14, 0
    %p41 = por %p39, %p40
    %s43 = sadd.s32 %s42, 1
    %p46 = scmp.eq.s32.totalorder %s8, 3
    %p47 = scmp.ne.s32.totalorder %s42, %s44
    %p48 = scmp.eq.s32.totalorder %s8, 0
    %p49 = por %p47, %p48
    %p50 = scmp.ne.s32.totalorder %s42, %s44
    %p51 = scmp.eq.s32.totalorder %s13, 3
    %p52 = por %p50, %p51
    %p53 = scmp.ne.s32.totalorder %s44, %s45
    %p54 = scmp.eq.s32.totalorder %s13, 0
    %p55 = por %p53, %p54
    %p56 = scmp.ne.s32.totalorder %s44, %s45
    %p57 = scmp.eq.s32.totalorder %s14, 3
    %p58 = por %p56, %p57
    %p60 = scmp.ne.s32.totalorder %s45, %s59
    %p61 = scmp.eq.s32.totalorder %s14, 0
    %p62 = por %p60, %p61
    %s63 = ssub.s32 %s8, %s15
    %p64 = scmp.eq.s32.totalorder %s63, 0
    %s66 = sadd.s32 %s65, 1
    %s67 = scalar_select %p64, %s65, %s66
    %p70 = pneg %p64
    %p71 = scmp.eq.s32.totalorder %s8, 3
    %p72 = por %p70, %p71
    %p73 = scmp.ne.s32.totalorder %s65, %s68
    %p74 = scmp.eq.s32.totalorder %s8, 0
    %p75 = por %p73, %p74
    %p76 = scmp.ne.s32.totalorder %s65, %s68
    %p77 = scmp.eq.s32.totalorder %s13, 3
    %p78 = por %p76, %p77
    %p79 = scmp.ne.s32.totalorder %s68, %s69
    %p80 = scmp.eq.s32.totalorder %s13, 0
    %p81 = por %p79, %p80
    %p82 = scmp.ne.s32.totalorder %s68, %s69
    %p83 = scmp.eq.s32.totalorder %s14, 3
    %p84 = por %p82, %p83
    %p86 = scmp.ne.s32.totalorder %s69, %s85
    %p87 = scmp.eq.s32.totalorder %s14, 0
    %p88 = por %p86, %p87
    %p89 = scmp.le.s32.totalorder 1, %s8
    %p90 = scmp.lt.s32.totalorder %s8, 5
    %p91 = pnand %p89, %p90
    %p92 = pneg %p91
    // Predicated region
    $region9: #{respath_block.3} parent=5 // pred_check
      _
    $region10: #{respath_block.3} parent=5 // pred_check_branch
      %94 = sbr.rel (%p91) target = $region12
    $region11: #{respath_block.3} parent=5 // pred_region
      %s95 = ssub.s32 %s8, 1
      // Predicated region
      $region13: #{respath_block.3} parent=11 // pred_check
        %p96 = pneg %p55
      $region14: #{respath_block.3} parent=11 // pred_check_branch
        %98 = sbr.rel (%p96) target = $region16
      $region15: #{respath_block.3} parent=11 // pred_region
        _
      $region16: #{respath_block.3} parent=11 // pred_fallthru
        _
    $region12: #{respath_block.3} parent=5 // pred_fallthru
      _
    %p99 = scmp.lt.s32.totalorder %s8, 4
    // Predicated region
    $region17: #{respath_block.3} parent=5 // pred_check
      %p100 = pneg %p99
    $region18: #{respath_block.3} parent=5 // pred_check_branch
      %102 = sbr.rel (%p100) target = $region20
    $region19: #{respath_block.3} parent=5 // pred_region
      // Predicated region
      $region21: #{respath_block.3} parent=19 // pred_check
        %p103 = pneg %p28
      $region22: #{respath_block.3} parent=19 // pred_check_branch
        %105 = sbr.rel (%p103) target = $region24
      $region23: #{respath_block.3} parent=19 // pred_region
        %p106 = scmp.lt.s32.totalorder %s8, 3
        %s107 = scalar_select %p106, %s8, 3
        %s108 = smul.addr %s107, 30
        %s109 = smul.addr %s108, 8
        %s110 = scalar_lea.vmem %s0, %s109
      $region24: #{respath_block.3} parent=19 // pred_fallthru
        _
    $region20: #{respath_block.3} parent=5 // pred_fallthru
      _
    %p111 = scmp.le.s32.totalorder 1, %s8
    %p112 = scmp.lt.s32.totalorder %s8, 5
    %p113 = pnand %p111, %p112
    %p114 = pneg %p113
    // Predicated region
    $region25: #{respath_block.3} parent=5 // pred_check
      _
    $region26: #{respath_block.3} parent=5 // pred_check_branch
      %116 = sbr.rel (%p113) target = $region28
    $region27: #{respath_block.3} parent=5 // pred_region
      %s117 = ssub.s32 %s8, 1
      %p118 = scmp.lt.s32.totalorder %s13, 3
      %s119 = scalar_select %p118, %s13, 3
      %s120 = smul.addr %s119, 30
      %s121 = smul.addr %s120, 8
      %s122 = scalar_lea.vmem %s0, %s121
      %p123 = pneg %p34
      %p124 = pneg %p31
      %p125 = pneg %p55
      %p126 = pneg %p52
      %p127 = pneg %p81
      %p128 = pneg %p78
      %p129 = scmp.lt.s32.totalorder %s13, 3
      %s130 = scalar_select %p129, %s13, 3
      %s131 = smul.addr %s130, 8
      %s132 = scalar_lea.vmem %s2, %s131
      %p133 = scmp.lt.s32.totalorder %s13, 3
      %s134 = scalar_select %p133, %s13, 3
      %s135 = smul.addr %s134, 30
      %s136 = smul.addr %s135, 8
      %s137 = scalar_lea.vmem %s0, %s136
      %p138 = scmp.lt.s32.totalorder %s13, 3
      %s139 = scalar_select %p138, %s13, 3
      %s140 = smul.addr %s139, 8
      %s141 = scalar_lea.vmem %s2, %s140
      %v142 = vld [vmem:[%s137] sm:$0xff]
      %v143 = vld [vmem:[%s137 + $0x8] sm:$0xff]
      %v144 = vld [vmem:[%s137 + $0x10] sm:$0x3]
      %v145 = vld [vmem:[%s137 + $0x18] sm:$0xff]
      %v146 = vld [vmem:[%s137 + $0x20] sm:$0xff]
      %v147 = vld [vmem:[%s137 + $0x28] sm:$0x3]
      %v148 = vld [vmem:[%s137 + $0x30] sm:$0xff]
      %v149 = vld [vmem:[%s137 + $0x38] sm:$0xff]
      %v150 = vld [vmem:[%s137 + $0x40] sm:$0x3]
      %v151 = vld [vmem:[%s137 + $0x48] sm:$0xff]
      %v152 = vld [vmem:[%s137 + $0x50] sm:$0xff]
      %v153 = vld [vmem:[%s137 + $0x58] sm:$0x3]
      %v154 = vld [vmem:[%s137 + $0x60] sm:$0xff]
      %v155 = vld [vmem:[%s137 + $0x68] sm:$0xff]
      %v156 = vld [vmem:[%s137 + $0x70] sm:$0x3]
      %v157 = vld [vmem:[%s137 + $0x78] sm:$0xff]
      %v158 = vld [vmem:[%s137 + $0x80] sm:$0xff]
      %v159 = vld [vmem:[%s137 + $0x88] sm:$0x3]
      %v160 = vld [vmem:[%s137 + $0x90] sm:$0xff]
      %v161 = vld [vmem:[%s137 + $0x98] sm:$0xff]
      %v162 = vld [vmem:[%s137 + $0xa0] sm:$0x3]
      %v163 = vld [vmem:[%s137 + $0xa8] sm:$0xff]
      %v164 = vld [vmem:[%s137 + $0xb0] sm:$0xff]
      %v165 = vld [vmem:[%s137 + $0xb8] sm:$0x3]
      %v166 = vld [vmem:[%s137 + $0xc0] sm:$0xff]
      %v167 = vld [vmem:[%s137 + $0xc8] sm:$0xff]
      %v168 = vld [vmem:[%s137 + $0xd0] sm:$0x3]
      %v169 = vld [vmem:[%s137 + $0xd8] sm:$0xff]
      %v170 = vld [vmem:[%s137 + $0xe0] sm:$0xff]
      %v171 = vld [vmem:[%s137 + $0xe8] sm:$0x3]
      %vm196 = vcmask 1046528
      %v197 = vrot.slane %v142, 1
      %v198 = vrot.slane %v143, 1
      %v199 = vsel %vm196, %v197, %v198
      %v200 = vrot.slane %v144, 1
      %v201 = vsel %vm196, %v198, %v200
      %v202 = vrot.slane %v145, 1
      %v203 = vrot.slane %v146, 1
      %v204 = vsel %vm196, %v202, %v203
      %v205 = vrot.slane %v147, 1
      %v206 = vsel %vm196, %v203, %v205
      %v207 = vrot.slane %v148, 1
      %v208 = vrot.slane %v149, 1
      %v209 = vsel %vm196, %v207, %v208
      %v210 = vrot.slane %v150, 1
      %v211 = vsel %vm196, %v208, %v210
      %v212 = vrot.slane %v151, 1
      %v213 = vrot.slane %v152, 1
      %v214 = vsel %vm196, %v212, %v213
      %v215 = vrot.slane %v153, 1
      %v216 = vsel %vm196, %v213, %v215
      %v217 = vrot.slane %v154, 1
      %v218 = vrot.slane %v155, 1
      %v219 = vsel %vm196, %v217, %v218
      %v220 = vrot.slane %v156, 1
      %v221 = vsel %vm196, %v218, %v220
      %v222 = vrot.slane %v157, 1
      %v223 = vrot.slane %v158, 1
      %v224 = vsel %vm196, %v222, %v223
      %v225 = vrot.slane %v159, 1
      %v226 = vsel %vm196, %v223, %v225
      %v227 = vrot.slane %v160, 1
      %v228 = vrot.slane %v161, 1
      %v229 = vsel %vm196, %v227, %v228
      %v230 = vrot.slane %v162, 1
      %v231 = vsel %vm196, %v228, %v230
      %v232 = vrot.slane %v163, 1
      %v233 = vrot.slane %v164, 1
      %v234 = vsel %vm196, %v232, %v233
      %v235 = vrot.slane %v165, 1
      %v236 = vsel %vm196, %v233, %v235
      %237 = vrot.lane.b32.xlu0 %v199, 4
      %v238 = vpop.permute.xlu0 %237
      %239 = vrot.lane.b32.xlu0 %v201, 4
      %v240 = vpop.permute.xlu0 %239
      %241 = vrot.lane.b32.xlu0 %v204, 4
      %v242 = vpop.permute.xlu0 %241
      %243 = vrot.lane.b32.xlu0 %v206, 4
      %v244 = vpop.permute.xlu0 %243
      %245 = vrot.lane.b32.xlu0 %v209, 4
      %v246 = vpop.permute.xlu0 %245
      %247 = vrot.lane.b32.xlu0 %v211, 4
      %v248 = vpop.permute.xlu0 %247
      %249 = vrot.lane.b32.xlu0 %v214, 4
      %v250 = vpop.permute.xlu0 %249
      %251 = vrot.lane.b32.xlu0 %v216, 4
      %v252 = vpop.permute.xlu0 %251
      %253 = vrot.lane.b32.xlu0 %v219, 4
      %v254 = vpop.permute.xlu0 %253
      %255 = vrot.lane.b32.xlu0 %v221, 4
      %v256 = vpop.permute.xlu0 %255
      %257 = vrot.lane.b32.xlu0 %v224, 4
      %v258 = vpop.permute.xlu0 %257
      %259 = vrot.lane.b32.xlu0 %v226, 4
      %v260 = vpop.permute.xlu0 %259
      %261 = vrot.lane.b32.xlu0 %v229, 4
      %v262 = vpop.permute.xlu0 %261
      %263 = vrot.lane.b32.xlu0 %v231, 4
      %v264 = vpop.permute.xlu0 %263
      %265 = vrot.lane.b32.xlu0 %v234, 4
      %v266 = vpop.permute.xlu0 %265
      %267 = vrot.lane.b32.xlu0 %v236, 4
      %v268 = vpop.permute.xlu0 %267
      %vm285 = vcmask 1045504
      %v286 = vrot.slane %v142, 2
      %v287 = vrot.slane %v143, 2
      %v288 = vsel %vm285, %v286, %v287
      %v289 = vrot.slane %v144, 2
      %v290 = vsel %vm285, %v287, %v289
      %v291 = vrot.slane %v145, 2
      %v292 = vrot.slane %v146, 2
      %v293 = vsel %vm285, %v291, %v292
      %v294 = vrot.slane %v147, 2
      %v295 = vsel %vm285, %v292, %v294
      %v296 = vrot.slane %v148, 2
      %v297 = vrot.slane %v149, 2
      %v298 = vsel %vm285, %v296, %v297
      %v299 = vrot.slane %v150, 2
      %v300 = vsel %vm285, %v297, %v299
      %v301 = vrot.slane %v151, 2
      %v302 = vrot.slane %v152, 2
      %v303 = vsel %vm285, %v301, %v302
      %v304 = vrot.slane %v153, 2
      %v305 = vsel %vm285, %v302, %v304
      %v306 = vrot.slane %v154, 2
      %v307 = vrot.slane %v155, 2
      %v308 = vsel %vm285, %v306, %v307
      %v309 = vrot.slane %v156, 2
      %v310 = vsel %vm285, %v307, %v309
      %v311 = vrot.slane %v157, 2
      %v312 = vrot.slane %v158, 2
      %v313 = vsel %vm285, %v311, %v312
      %v314 = vrot.slane %v159, 2
      %v315 = vsel %vm285, %v312, %v314
      %v316 = vrot.slane %v160, 2
      %v317 = vrot.slane %v161, 2
      %v318 = vsel %vm285, %v316, %v317
      %v319 = vrot.slane %v162, 2
      %v320 = vsel %vm285, %v317, %v319
      %v321 = vrot.slane %v163, 2
      %v322 = vrot.slane %v164, 2
      %v323 = vsel %vm285, %v321, %v322
      %v324 = vrot.slane %v165, 2
      %v325 = vsel %vm285, %v322, %v324
      %326 = vrot.lane.b32.xlu0 %v288, 8
      %v327 = vpop.permute.xlu0 %326
      %328 = vrot.lane.b32.xlu0 %v290, 8
      %v329 = vpop.permute.xlu0 %328
      %330 = vrot.lane.b32.xlu0 %v293, 8
      %v331 = vpop.permute.xlu0 %330
      %332 = vrot.lane.b32.xlu0 %v295, 8
      %v333 = vpop.permute.xlu0 %332
      %334 = vrot.lane.b32.xlu0 %v298, 8
      %v335 = vpop.permute.xlu0 %334
      %336 = vrot.lane.b32.xlu0 %v300, 8
      %v337 = vpop.permute.xlu0 %336
      %338 = vrot.lane.b32.xlu0 %v303, 8
      %v339 = vpop.permute.xlu0 %338
      %340 = vrot.lane.b32.xlu0 %v305, 8
      %v341 = vpop.permute.xlu0 %340
      %342 = vrot.lane.b32.xlu0 %v308, 8
      %v343 = vpop.permute.xlu0 %342
      %344 = vrot.lane.b32.xlu0 %v310, 8
      %v345 = vpop.permute.xlu0 %344
      %346 = vrot.lane.b32.xlu0 %v313, 8
      %v347 = vpop.permute.xlu0 %346
      %348 = vrot.lane.b32.xlu0 %v315, 8
      %v349 = vpop.permute.xlu0 %348
      %350 = vrot.lane.b32.xlu0 %v318, 8
      %v351 = vpop.permute.xlu0 %350
      %352 = vrot.lane.b32.xlu0 %v320, 8
      %v353 = vpop.permute.xlu0 %352
      %354 = vrot.lane.b32.xlu0 %v323, 8
      %v355 = vpop.permute.xlu0 %354
      %356 = vrot.lane.b32.xlu0 %v325, 8
      %v357 = vpop.permute.xlu0 %356
      %376 = vrot.lane.b32.xlu0 %v145, 12
      %v377 = vpop.permute.xlu0 %376
      %378 = vrot.lane.b32.xlu0 %v146, 12
      %v379 = vpop.permute.xlu0 %378
      %380 = vrot.lane.b32.xlu0 %v148, 12
      %v381 = vpop.permute.xlu0 %380
      %382 = vrot.lane.b32.xlu0 %v149, 12
      %v383 = vpop.permute.xlu0 %382
      %384 = vrot.lane.b32.xlu0 %v151, 12
      %v385 = vpop.permute.xlu0 %384
      %386 = vrot.lane.b32.xlu0 %v152, 12
      %v387 = vpop.permute.xlu0 %386
      %388 = vrot.lane.b32.xlu0 %v154, 12
      %v389 = vpop.permute.xlu0 %388
      %390 = vrot.lane.b32.xlu0 %v155, 12
      %v391 = vpop.permute.xlu0 %390
      %392 = vrot.lane.b32.xlu0 %v157, 12
      %v393 = vpop.permute.xlu0 %392
      %394 = vrot.lane.b32.xlu0 %v158, 12
      %v395 = vpop.permute.xlu0 %394
      %396 = vrot.lane.b32.xlu0 %v160, 12
      %v397 = vpop.permute.xlu0 %396
      %398 = vrot.lane.b32.xlu0 %v161, 12
      %v399 = vpop.permute.xlu0 %398
      %400 = vrot.lane.b32.xlu0 %v163, 12
      %v401 = vpop.permute.xlu0 %400
      %402 = vrot.lane.b32.xlu0 %v164, 12
      %v403 = vpop.permute.xlu0 %402
      %404 = vrot.lane.b32.xlu0 %v166, 12
      %v405 = vpop.permute.xlu0 %404
      %406 = vrot.lane.b32.xlu0 %v167, 12
      %v407 = vpop.permute.xlu0 %406
      %v425 = vrot.slane %v166, 1
      %v426 = vrot.slane %v167, 1
      %v427 = vsel %vm196, %v425, %v426
      %v428 = vrot.slane %v168, 1
      %v429 = vsel %vm196, %v426, %v428
      %430 = vrot.lane.b32.xlu0 %v204, 16
      %v431 = vpop.permute.xlu0 %430
      %432 = vrot.lane.b32.xlu0 %v206, 16
      %v433 = vpop.permute.xlu0 %432
      %434 = vrot.lane.b32.xlu0 %v209, 16
      %v435 = vpop.permute.xlu0 %434
      %436 = vrot.lane.b32.xlu0 %v211, 16
      %v437 = vpop.permute.xlu0 %436
      %438 = vrot.lane.b32.xlu0 %v214, 16
      %v439 = vpop.permute.xlu0 %438
      %440 = vrot.lane.b32.xlu0 %v216, 16
      %v441 = vpop.permute.xlu0 %440
      %442 = vrot.lane.b32.xlu0 %v219, 16
      %v443 = vpop.permute.xlu0 %442
      %444 = vrot.lane.b32.xlu0 %v221, 16
      %v445 = vpop.permute.xlu0 %444
      %446 = vrot.lane.b32.xlu0 %v224, 16
      %v447 = vpop.permute.xlu0 %446
      %448 = vrot.lane.b32.xlu0 %v226, 16
      %v449 = vpop.permute.xlu0 %448
      %450 = vrot.lane.b32.xlu0 %v229, 16
      %v451 = vpop.permute.xlu0 %450
      %452 = vrot.lane.b32.xlu0 %v231, 16
      %v453 = vpop.permute.xlu0 %452
      %454 = vrot.lane.b32.xlu0 %v234, 16
      %v455 = vpop.permute.xlu0 %454
      %456 = vrot.lane.b32.xlu0 %v236, 16
      %v457 = vpop.permute.xlu0 %456
      %458 = vrot.lane.b32.xlu0 %v427, 16
      %v459 = vpop.permute.xlu0 %458
      %460 = vrot.lane.b32.xlu0 %v429, 16
      %v461 = vpop.permute.xlu0 %460
      %v478 = vrot.slane %v166, 2
      %v479 = vrot.slane %v167, 2
      %v480 = vsel %vm285, %v478, %v479
      %v481 = vrot.slane %v168, 2
      %v482 = vsel %vm285, %v479, %v481
      %483 = vrot.lane.b32.xlu0 %v293, 20
      %v484 = vpop.permute.xlu0 %483
      %485 = vrot.lane.b32.xlu0 %v295, 20
      %v486 = vpop.permute.xlu0 %485
      %487 = vrot.lane.b32.xlu0 %v298, 20
      %v488 = vpop.permute.xlu0 %487
      %489 = vrot.lane.b32.xlu0 %v300, 20
      %v490 = vpop.permute.xlu0 %489
      %491 = vrot.lane.b32.xlu0 %v303, 20
      %v492 = vpop.permute.xlu0 %491
      %493 = vrot.lane.b32.xlu0 %v305, 20
      %v494 = vpop.permute.xlu0 %493
      %495 = vrot.lane.b32.xlu0 %v308, 20
      %v496 = vpop.permute.xlu0 %495
      %497 = vrot.lane.b32.xlu0 %v310, 20
      %v498 = vpop.permute.xlu0 %497
      %499 = vrot.lane.b32.xlu0 %v313, 20
      %v500 = vpop.permute.xlu0 %499
      %501 = vrot.lane.b32.xlu0 %v315, 20
      %v502 = vpop.permute.xlu0 %501
      %503 = vrot.lane.b32.xlu0 %v318, 20
      %v504 = vpop.permute.xlu0 %503
      %505 = vrot.lane.b32.xlu0 %v320, 20
      %v506 = vpop.permute.xlu0 %505
      %507 = vrot.lane.b32.xlu0 %v323, 20
      %v508 = vpop.permute.xlu0 %507
      %509 = vrot.lane.b32.xlu0 %v325, 20
      %v510 = vpop.permute.xlu0 %509
      %511 = vrot.lane.b32.xlu0 %v480, 20
      %v512 = vpop.permute.xlu0 %511
      %513 = vrot.lane.b32.xlu0 %v482, 20
      %v514 = vpop.permute.xlu0 %513
      %533 = vrot.lane.b32.xlu0 %v148, 24
      %v534 = vpop.permute.xlu0 %533
      %535 = vrot.lane.b32.xlu0 %v149, 24
      %v536 = vpop.permute.xlu0 %535
      %537 = vrot.lane.b32.xlu0 %v151, 24
      %v538 = vpop.permute.xlu0 %537
      %539 = vrot.lane.b32.xlu0 %v152, 24
      %v540 = vpop.permute.xlu0 %539
      %541 = vrot.lane.b32.xlu0 %v154, 24
      %v542 = vpop.permute.xlu0 %541
      %543 = vrot.lane.b32.xlu0 %v155, 24
      %v544 = vpop.permute.xlu0 %543
      %545 = vrot.lane.b32.xlu0 %v157, 24
      %v546 = vpop.permute.xlu0 %545
      %547 = vrot.lane.b32.xlu0 %v158, 24
      %v548 = vpop.permute.xlu0 %547
      %549 = vrot.lane.b32.xlu0 %v160, 24
      %v550 = vpop.permute.xlu0 %549
      %551 = vrot.lane.b32.xlu0 %v161, 24
      %v552 = vpop.permute.xlu0 %551
      %553 = vrot.lane.b32.xlu0 %v163, 24
      %v554 = vpop.permute.xlu0 %553
      %555 = vrot.lane.b32.xlu0 %v164, 24
      %v556 = vpop.permute.xlu0 %555
      %557 = vrot.lane.b32.xlu0 %v166, 24
      %v558 = vpop.permute.xlu0 %557
      %559 = vrot.lane.b32.xlu0 %v167, 24
      %v560 = vpop.permute.xlu0 %559
      %561 = vrot.lane.b32.xlu0 %v169, 24
      %v562 = vpop.permute.xlu0 %561
      %563 = vrot.lane.b32.xlu0 %v170, 24
      %v564 = vpop.permute.xlu0 %563
      %v582 = vrot.slane %v169, 1
      %v583 = vrot.slane %v170, 1
      %v584 = vsel %vm196, %v582, %v583
      %v585 = vrot.slane %v171, 1
      %v586 = vsel %vm196, %v583, %v585
      %587 = vrot.lane.b32.xlu0 %v209, 28
      %v588 = vpop.permute.xlu0 %587
      %589 = vrot.lane.b32.xlu0 %v211, 28
      %v590 = vpop.permute.xlu0 %589
      %591 = vrot.lane.b32.xlu0 %v214, 28
      %v592 = vpop.permute.xlu0 %591
      %593 = vrot.lane.b32.xlu0 %v216, 28
      %v594 = vpop.permute.xlu0 %593
      %595 = vrot.lane.b32.xlu0 %v219, 28
      %v596 = vpop.permute.xlu0 %595
      %597 = vrot.lane.b32.xlu0 %v221, 28
      %v598 = vpop.permute.xlu0 %597
      %599 = vrot.lane.b32.xlu0 %v224, 28
      %v600 = vpop.permute.xlu0 %599
      %601 = vrot.lane.b32.xlu0 %v226, 28
      %v602 = vpop.permute.xlu0 %601
      %603 = vrot.lane.b32.xlu0 %v229, 28
      %v604 = vpop.permute.xlu0 %603
      %605 = vrot.lane.b32.xlu0 %v231, 28
      %v606 = vpop.permute.xlu0 %605
      %607 = vrot.lane.b32.xlu0 %v234, 28
      %v608 = vpop.permute.xlu0 %607
      %609 = vrot.lane.b32.xlu0 %v236, 28
      %v610 = vpop.permute.xlu0 %609
      %611 = vrot.lane.b32.xlu0 %v427, 28
      %v612 = vpop.permute.xlu0 %611
      %613 = vrot.lane.b32.xlu0 %v429, 28
      %v614 = vpop.permute.xlu0 %613
      %615 = vrot.lane.b32.xlu0 %v584, 28
      %v616 = vpop.permute.xlu0 %615
      %617 = vrot.lane.b32.xlu0 %v586, 28
      %v618 = vpop.permute.xlu0 %617
      %v635 = vrot.slane %v169, 2
      %v636 = vrot.slane %v170, 2
      %v637 = vsel %vm285, %v635, %v636
      %v638 = vrot.slane %v171, 2
      %v639 = vsel %vm285, %v636, %v638
      %640 = vrot.lane.b32.xlu0 %v298, 32
      %v641 = vpop.permute.xlu0 %640
      %642 = vrot.lane.b32.xlu0 %v300, 32
      %v643 = vpop.permute.xlu0 %642
      %644 = vrot.lane.b32.xlu0 %v303, 32
      %v645 = vpop.permute.xlu0 %644
      %646 = vrot.lane.b32.xlu0 %v305, 32
      %v647 = vpop.permute.xlu0 %646
      %648 = vrot.lane.b32.xlu0 %v308, 32
      %v649 = vpop.permute.xlu0 %648
      %650 = vrot.lane.b32.xlu0 %v310, 32
      %v651 = vpop.permute.xlu0 %650
      %652 = vrot.lane.b32.xlu0 %v313, 32
      %v653 = vpop.permute.xlu0 %652
      %654 = vrot.lane.b32.xlu0 %v315, 32
      %v655 = vpop.permute.xlu0 %654
      %656 = vrot.lane.b32.xlu0 %v318, 32
      %v657 = vpop.permute.xlu0 %656
      %658 = vrot.lane.b32.xlu0 %v320, 32
      %v659 = vpop.permute.xlu0 %658
      %660 = vrot.lane.b32.xlu0 %v323, 32
      %v661 = vpop.permute.xlu0 %660
      %662 = vrot.lane.b32.xlu0 %v325, 32
      %v663 = vpop.permute.xlu0 %662
      %664 = vrot.lane.b32.xlu0 %v480, 32
      %v665 = vpop.permute.xlu0 %664
      %666 = vrot.lane.b32.xlu0 %v482, 32
      %v667 = vpop.permute.xlu0 %666
      %668 = vrot.lane.b32.xlu0 %v637, 32
      %v669 = vpop.permute.xlu0 %668
      %670 = vrot.lane.b32.xlu0 %v639, 32
      %v671 = vpop.permute.xlu0 %670
      %vm688 = vcmask 31744
      %v689 = vsel %vm688, %v142, %v238
      %v690 = vsel %vm688, %v143, %v240
      %v691 = vsel %vm688, %v145, %v242
      %v692 = vsel %vm688, %v146, %v244
      %v693 = vsel %vm688, %v148, %v246
      %v694 = vsel %vm688, %v149, %v248
      %v695 = vsel %vm688, %v151, %v250
      %v696 = vsel %vm688, %v152, %v252
      %v697 = vsel %vm688, %v154, %v254
      %v698 = vsel %vm688, %v155, %v256
      %v699 = vsel %vm688, %v157, %v258
      %v700 = vsel %vm688, %v158, %v260
      %v701 = vsel %vm688, %v160, %v262
      %v702 = vsel %vm688, %v161, %v264
      %v703 = vsel %vm688, %v163, %v266
      %v704 = vsel %vm688, %v164, %v268
      %vm705 = vcmask 64512
      %v706 = vsel %vm705, %v689, %v327
      %v707 = vsel %vm705, %v690, %v329
      %v708 = vsel %vm705, %v691, %v331
      %v709 = vsel %vm705, %v692, %v333
      %v710 = vsel %vm705, %v693, %v335
      %v711 = vsel %vm705, %v694, %v337
      %v712 = vsel %vm705, %v695, %v339
      %v713 = vsel %vm705, %v696, %v341
      %v714 = vsel %vm705, %v697, %v343
      %v715 = vsel %vm705, %v698, %v345
      %v716 = vsel %vm705, %v699, %v347
      %v717 = vsel %vm705, %v700, %v349
      %v718 = vsel %vm705, %v701, %v351
      %v719 = vsel %vm705, %v702, %v353
      %v720 = vsel %vm705, %v703, %v355
      %v721 = vsel %vm705, %v704, %v357
      %vm722 = vcmask 97280
      %v723 = vsel %vm722, %v706, %v377
      %v724 = vsel %vm722, %v707, %v379
      %v725 = vsel %vm722, %v708, %v381
      %v726 = vsel %vm722, %v709, %v383
      %v727 = vsel %vm722, %v710, %v385
      %v728 = vsel %vm722, %v711, %v387
      %v729 = vsel %vm722, %v712, %v389
      %v730 = vsel %vm722, %v713, %v391
      %v731 = vsel %vm722, %v714, %v393
      %v732 = vsel %vm722, %v715, %v395
      %v733 = vsel %vm722, %v716, %v397
      %v734 = vsel %vm722, %v717, %v399
      %v735 = vsel %vm722, %v718, %v401
      %v736 = vsel %vm722, %v719, %v403
      %v737 = vsel %vm722, %v720, %v405
      %v738 = vsel %vm722, %v721, %v407
      %vm739 = vcmask 130048
      %v740 = vsel %vm739, %v723, %v431
      %v741 = vsel %vm739, %v724, %v433
      %v742 = vsel %vm739, %v725, %v435
      %v743 = vsel %vm739, %v726, %v437
      %v744 = vsel %vm739, %v727, %v439
      %v745 = vsel %vm739, %v728, %v441
      %v746 = vsel %vm739, %v729, %v443
      %v747 = vsel %vm739, %v730, %v445
      %v748 = vsel %vm739, %v731, %v447
      %v749 = vsel %vm739, %v732, %v449
      %v750 = vsel %vm739, %v733, %v451
      %v751 = vsel %vm739, %v734, %v453
      %v752 = vsel %vm739, %v735, %v455
      %v753 = vsel %vm739, %v736, %v457
      %v754 = vsel %vm739, %v737, %v459
      %v755 = vsel %vm739, %v738, %v461
      %vm756 = vcmask 162816
      %v757 = vsel %vm756, %v740, %v484
      %v758 = vsel %vm756, %v741, %v486
      %v759 = vsel %vm756, %v742, %v488
      %v760 = vsel %vm756, %v743, %v490
      %v761 = vsel %vm756, %v744, %v492
      %v762 = vsel %vm756, %v745, %v494
      %v763 = vsel %vm756, %v746, %v496
      %v764 = vsel %vm756, %v747, %v498
      %v765 = vsel %vm756, %v748, %v500
      %v766 = vsel %vm756, %v749, %v502
      %v767 = vsel %vm756, %v750, %v504
      %v768 = vsel %vm756, %v751, %v506
      %v769 = vsel %vm756, %v752, %v508
      %v770 = vsel %vm756, %v753, %v510
      %v771 = vsel %vm756, %v754, %v512
      %v772 = vsel %vm756, %v755, %v514
      %vm773 = vcmask 195584
      %v774 = vsel %vm773, %v757, %v534
      %v775 = vsel %vm773, %v758, %v536
      %v776 = vsel %vm773, %v759, %v538
      %v777 = vsel %vm773, %v760, %v540
      %v778 = vsel %vm773, %v761, %v542
      %v779 = vsel %vm773, %v762, %v544
      %v780 = vsel %vm773, %v763, %v546
      %v781 = vsel %vm773, %v764, %v548
      %v782 = vsel %vm773, %v765, %v550
      %v783 = vsel %vm773, %v766, %v552
      %v784 = vsel %vm773, %v767, %v554
      %v785 = vsel %vm773, %v768, %v556
      %v786 = vsel %vm773, %v769, %v558
      %v787 = vsel %vm773, %v770, %v560
      %v788 = vsel %vm773, %v771, %v562
      %v789 = vsel %vm773, %v772, %v564
      %vm790 = vcmask 228352
      %v791 = vsel %vm790, %v774, %v588
      %v792 = vsel %vm790, %v775, %v590
      %v793 = vsel %vm790, %v776, %v592
      %v794 = vsel %vm790, %v777, %v594
      %v795 = vsel %vm790, %v778, %v596
      %v796 = vsel %vm790, %v779, %v598
      %v797 = vsel %vm790, %v780, %v600
      %v798 = vsel %vm790, %v781, %v602
      %v799 = vsel %vm790, %v782, %v604
      %v800 = vsel %vm790, %v783, %v606
      %v801 = vsel %vm790, %v784, %v608
      %v802 = vsel %vm790, %v785, %v610
      %v803 = vsel %vm790, %v786, %v612
      %v804 = vsel %vm790, %v787, %v614
      %v805 = vsel %vm790, %v788, %v616
      %v806 = vsel %vm790, %v789, %v618
      %vm807 = vcmask 261120
      %v808 = vsel %vm807, %v791, %v641
      %v809 = vsel %vm807, %v792, %v643
      %v810 = vsel %vm807, %v793, %v645
      %v811 = vsel %vm807, %v794, %v647
      %v812 = vsel %vm807, %v795, %v649
      %v813 = vsel %vm807, %v796, %v651
      %v814 = vsel %vm807, %v797, %v653
      %v815 = vsel %vm807, %v798, %v655
      %v816 = vsel %vm807, %v799, %v657
      %v817 = vsel %vm807, %v800, %v659
      %v818 = vsel %vm807, %v801, %v661
      %v819 = vsel %vm807, %v802, %v663
      %v820 = vsel %vm807, %v803, %v665
      %v821 = vsel %vm807, %v804, %v667
      %v822 = vsel %vm807, %v805, %v669
      %v823 = vsel %vm807, %v806, %v671
      %v824 = vld [vmem:[%s1] sm:$0xff]
      %v825 = vld [vmem:[%s1 + $0x8] sm:$0xff]
      %v826 = vld [vmem:[%s1 + $0x10] sm:$0xff]
      %v827 = vld [vmem:[%s1 + $0x18] sm:$0xff]
      %v828 = vld [vmem:[%s1 + $0x20] sm:$0xf]
      %vm829 = vcmask 293888
      %v831 = vsel %vm829, %v808, 0
      %v834 = vsel %vm829, %v809, 0
      %v837 = vsel %vm829, %v810, 0
      %v840 = vsel %vm829, %v811, 0
      %v843 = vsel %vm829, %v812, 0
      %v846 = vsel %vm829, %v813, 0
      %v849 = vsel %vm829, %v814, 0
      %v852 = vsel %vm829, %v815, 0
      %v855 = vsel %vm829, %v816, 0
      %v858 = vsel %vm829, %v817, 0
      %v861 = vsel %vm829, %v818, 0
      %v864 = vsel %vm829, %v819, 0
      %v867 = vsel %vm829, %v820, 0
      %v870 = vsel %vm829, %v821, 0
      %v873 = vsel %vm829, %v822, 0
      %v876 = vsel %vm829, %v823, 0
      %vm878 = vcmask 1043456
      %v880 = vsel %vm878, %v828, 0
      %882 = vmatprep.subr.mxu0 0.0
      %883 = vmatpush1.msra.mxu0 %v824
      %884 = vmatprep.subr.mxu0 0.0
      %885 = vmatpush1.msra.mxu0 %v825
      %886 = vmatprep.subr.mxu0 0.0
      %887 = vmatpush1.msra.mxu0 %v826
      %888 = vmatprep.subr.mxu0 0.0
      %889 = vmatpush1.msra.mxu0 %v827
      %890 = vmatprep.subr.mxu0 0.0
      %891 = vmatpush1.msra.mxu0 %v880
      %892 = vmatprep.subr.mxu0 0.0
      %893 = vmatpush1.msra.mxu0 0.0
      %894 = vmatprep.subr.mxu0 0.0
      %895 = vmatpush1.msra.mxu0 0.0
      %896 = vmatprep.subr.mxu0 0.0
      %897 = vmatpush1.msra.mxu0 0.0
      %898 = vmatprep.subr.mxu0 0.0
      %899 = vmatpush1.msra.mxu0 0.0
      %900 = vmatprep.subr.mxu0 0.0
      %901 = vmatpush1.msra.mxu0 0.0
      %902 = vmatprep.subr.mxu0 0.0
      %903 = vmatpush1.msra.mxu0 0.0
      %904 = vmatprep.subr.mxu0 0.0
      %905 = vmatpush1.msra.mxu0 0.0
      %906 = vmatprep.subr.mxu0 0.0
      %907 = vmatpush1.msra.mxu0 0.0
      %908 = vmatprep.subr.mxu0 0.0
      %909 = vmatpush1.msra.mxu0 0.0
      %910 = vmatprep.subr.mxu0 0.0
      %911 = vmatpush1.msra.mxu0 0.0
      %912 = vmatprep.subr.mxu0 0.0
      %913 = vmatpush1.msra.mxu0 0.0
      %914 = vmatprep.subr.mxu0 0.0
      %915 = vmatpush1.msra.mxu0 0.0
      %916 = vmatprep.subr.mxu0 0.0
      %917 = vmatpush1.msra.mxu0 0.0
      %918 = vmatprep.subr.mxu0 0.0
      %919 = vmatpush1.msra.mxu0 0.0
      %920 = vmatprep.subr.mxu0 0.0
      %921 = vmatpush1.msra.mxu0 0.0
      %922 = vmatprep.subr.mxu0 0.0
      %923 = vmatpush1.msra.mxu0 0.0
      %924 = vmatprep.subr.mxu0 0.0
      %925 = vmatpush1.msra.mxu0 0.0
      %926 = vmatprep.subr.mxu0 0.0
      %927 = vmatpush1.msra.mxu0 0.0
      %928 = vmatprep.subr.mxu0 0.0
      %929 = vmatpush1.msra.mxu0 0.0
      %930 = vmatprep.subr.mxu0 0.0
      %931 = vmatpush1.msra.mxu0 0.0
      %932 = vmatprep.subr.mxu0 0.0
      %933 = vmatpush1.msra.mxu0 0.0
      %934 = vmatprep.subr.mxu0 0.0
      %935 = vmatpush1.msra.mxu0 0.0
      %936 = vmatprep.subr.mxu0 0.0
      %937 = vmatpush1.msra.mxu0 0.0
      %938 = vmatprep.subr.mxu0 0.0
      %939 = vmatpush1.msra.mxu0 0.0
      %940 = vmatprep.subr.mxu0 0.0
      %941 = vmatpush1.msra.mxu0 0.0
      %942 = vmatprep.subr.mxu0 0.0
      %943 = vmatpush1.msra.mxu0 0.0
      %944 = vmatprep.subr.mxu0 0.0
      %945 = vmatpush1.msra.mxu0 0.0
      %946 = vmatprep.mubr.f32.mxu0 0.0
      %947 = vmatmul.mubr.f32.gmra.mrb[0].mxu0 %v831
      %v948 = vpop.f32.mrb[0].mxu0
      %v949 = vadd.f32 0.0, %v948
      %v950 = vpop.f32.mrb[0].mxu0
      %951 = vmatprep.mubr.f32.mxu0 0.0
      %952 = vmatmul.mubr.f32.gmra.mrb[0].mxu0 %v834
      %v953 = vpop.f32.mrb[0].mxu0
      %v954 = vadd.f32 0.0, %v953
      %v955 = vpop.f32.mrb[0].mxu0
      %956 = vmatprep.mubr.f32.mxu0 0.0
      %957 = vmatmul.mubr.f32.gmra.mrb[0].mxu0 %v837
      %v958 = vpop.f32.mrb[0].mxu0
      %v959 = vadd.f32 0.0, %v958
      %v960 = vpop.f32.mrb[0].mxu0
      %961 = vmatprep.mubr.f32.mxu0 0.0
      %962 = vmatmul.mubr.f32.gmra.mrb[0].mxu0 %v840
      %v963 = vpop.f32.mrb[0].mxu0
      %v964 = vadd.f32 0.0, %v963
      %v965 = vpop.f32.mrb[0].mxu0
      %966 = vmatprep.mubr.f32.mxu0 0.0
      %967 = vmatmul.mubr.f32.gmra.mrb[0].mxu0 %v843
      %v968 = vpop.f32.mrb[0].mxu0
      %v969 = vadd.f32 0.0, %v968
      %v970 = vpop.f32.mrb[0].mxu0
      %971 = vmatprep.mubr.f32.mxu0 0.0
      %972 = vmatmul.mubr.f32.gmra.mrb[0].mxu0 %v846
      %v973 = vpop.f32.mrb[0].mxu0
      %v974 = vadd.f32 0.0, %v973
      %v975 = vpop.f32.mrb[0].mxu0
      %976 = vmatprep.mubr.f32.mxu0 0.0
      %977 = vmatmul.mubr.f32.gmra.mrb[0].mxu0 %v849
      %v978 = vpop.f32.mrb[0].mxu0
      %v979 = vadd.f32 0.0, %v978
      %v980 = vpop.f32.mrb[0].mxu0
      %981 = vmatprep.mubr.f32.mxu0 0.0
      %982 = vmatmul.mubr.f32.gmra.mrb[0].mxu0 %v852
      %v983 = vpop.f32.mrb[0].mxu0
      %v984 = vadd.f32 0.0, %v983
      %v985 = vpop.f32.mrb[0].mxu0
      %986 = vmatprep.mubr.f32.mxu0 0.0
      %987 = vmatmul.mubr.f32.gmra.mrb[0].mxu0 %v855
      %v988 = vpop.f32.mrb[0].mxu0
      %v989 = vadd.f32 0.0, %v988
      %v990 = vpop.f32.mrb[0].mxu0
      %991 = vmatprep.mubr.f32.mxu0 0.0
      %992 = vmatmul.mubr.f32.gmra.mrb[0].mxu0 %v858
      %v993 = vpop.f32.mrb[0].mxu0
      %v994 = vadd.f32 0.0, %v993
      %v995 = vpop.f32.mrb[0].mxu0
      %996 = vmatprep.mubr.f32.mxu0 0.0
      %997 = vmatmul.mubr.f32.gmra.mrb[0].mxu0 %v861
      %v998 = vpop.f32.mrb[0].mxu0
      %v999 = vadd.f32 0.0, %v998
      %v1000 = vpop.f32.mrb[0].mxu0
      %1001 = vmatprep.mubr.f32.mxu0 0.0
      %1002 = vmatmul.mubr.f32.gmra.mrb[0].mxu0 %v864
      %v1003 = vpop.f32.mrb[0].mxu0
      %v1004 = vadd.f32 0.0, %v1003
      %v1005 = vpop.f32.mrb[0].mxu0
      %1006 = vmatprep.mubr.f32.mxu0 0.0
      %1007 = vmatmul.mubr.f32.gmra.mrb[0].mxu0 %v867
      %v1008 = vpop.f32.mrb[0].mxu0
      %v1009 = vadd.f32 0.0, %v1008
      %v1010 = vpop.f32.mrb[0].mxu0
      %1011 = vmatprep.mubr.f32.mxu0 0.0
      %1012 = vmatmul.mubr.f32.gmra.mrb[0].mxu0 %v870
      %v1013 = vpop.f32.mrb[0].mxu0
      %v1014 = vadd.f32 0.0, %v1013
      %v1015 = vpop.f32.mrb[0].mxu0
      %1016 = vmatprep.mubr.f32.mxu0 0.0
      %1017 = vmatmul.mubr.f32.gmra.mrb[0].mxu0 %v873
      %v1018 = vpop.f32.mrb[0].mxu0
      %v1019 = vadd.f32 0.0, %v1018
      %v1020 = vpop.f32.mrb[0].mxu0
      %1021 = vmatprep.mubr.f32.mxu0 0.0
      %1022 = vmatmul.mubr.f32.gmra.mrb[0].mxu0 %v876
      %v1023 = vpop.f32.mrb[0].mxu0
      %v1024 = vadd.f32 0.0, %v1023
      %v1025 = vpop.f32.mrb[0].mxu0
      %1026 = vdwg.mxu0
      %v1027 = vmul.f32 %v949, %v949
      %v1028 = vmul.f32 %v954, %v954
      %v1029 = vmul.f32 %v959, %v959
      %v1030 = vmul.f32 %v964, %v964
      %v1031 = vmul.f32 %v969, %v969
      %v1032 = vmul.f32 %v974, %v974
      %v1033 = vmul.f32 %v979, %v979
      %v1034 = vmul.f32 %v984, %v984
      %v1035 = vmul.f32 %v989, %v989
      %v1036 = vmul.f32 %v994, %v994
      %v1037 = vmul.f32 %v999, %v999
      %v1038 = vmul.f32 %v1004, %v1004
      %v1039 = vmul.f32 %v1009, %v1009
      %v1040 = vmul.f32 %v1014, %v1014
      %v1041 = vmul.f32 %v1019, %v1019
      %v1042 = vmul.f32 %v1024, %v1024
      %1059 = vrot.lane.b32.xlu0 %v1027, 16
      %v1060 = vpop.permute.xlu0 %1059
      %1061 = vrot.lane.b32.xlu0 %v1028, 16
      %v1062 = vpop.permute.xlu0 %1061
      %1063 = vrot.lane.b32.xlu0 %v1029, 16
      %v1064 = vpop.permute.xlu0 %1063
      %1065 = vrot.lane.b32.xlu0 %v1030, 16
      %v1066 = vpop.permute.xlu0 %1065
      %1067 = vrot.lane.b32.xlu0 %v1031, 16
      %v1068 = vpop.permute.xlu0 %1067
      %1069 = vrot.lane.b32.xlu0 %v1032, 16
      %v1070 = vpop.permute.xlu0 %1069
      %1071 = vrot.lane.b32.xlu0 %v1033, 16
      %v1072 = vpop.permute.xlu0 %1071
      %1073 = vrot.lane.b32.xlu0 %v1034, 16
      %v1074 = vpop.permute.xlu0 %1073
      %1075 = vrot.lane.b32.xlu0 %v1035, 16
      %v1076 = vpop.permute.xlu0 %1075
      %1077 = vrot.lane.b32.xlu0 %v1036, 16
      %v1078 = vpop.permute.xlu0 %1077
      %1079 = vrot.lane.b32.xlu0 %v1037, 16
      %v1080 = vpop.permute.xlu0 %1079
      %1081 = vrot.lane.b32.xlu0 %v1038, 16
      %v1082 = vpop.permute.xlu0 %1081
      %1083 = vrot.lane.b32.xlu0 %v1039, 16
      %v1084 = vpop.permute.xlu0 %1083
      %1085 = vrot.lane.b32.xlu0 %v1040, 16
      %v1086 = vpop.permute.xlu0 %1085
      %1087 = vrot.lane.b32.xlu0 %v1041, 16
      %v1088 = vpop.permute.xlu0 %1087
      %1089 = vrot.lane.b32.xlu0 %v1042, 16
      %v1090 = vpop.permute.xlu0 %1089
      %v1107 = vsel %vm739, %v949, %v1060
      %v1108 = vsel %vm739, %v954, %v1062
      %v1109 = vsel %vm739, %v959, %v1064
      %v1110 = vsel %vm739, %v964, %v1066
      %v1111 = vsel %vm739, %v969, %v1068
      %v1112 = vsel %vm739, %v974, %v1070
      %v1113 = vsel %vm739, %v979, %v1072
      %v1114 = vsel %vm739, %v984, %v1074
      %v1115 = vsel %vm739, %v989, %v1076
      %v1116 = vsel %vm739, %v994, %v1078
      %v1117 = vsel %vm739, %v999, %v1080
      %v1118 = vsel %vm739, %v1004, %v1082
      %v1119 = vsel %vm739, %v1009, %v1084
      %v1120 = vsel %vm739, %v1014, %v1086
      %v1121 = vsel %vm739, %v1019, %v1088
      %v1122 = vsel %vm739, %v1024, %v1090
      %1123 = vmatprep.subr.mxu0 0.0
      %1124 = vmatpush1.msra.mxu0 %v1107
      %1125 = vmatprep.subr.mxu0 0.0
      %1126 = vmatpush1.msra.mxu0 %v1108
      %1127 = vmatprep.subr.mxu0 0.0
      %1128 = vmatpush1.msra.mxu0 %v1109
      %1129 = vmatprep.subr.mxu0 0.0
      %1130 = vmatpush1.msra.mxu0 %v1110
      %1131 = vmatprep.subr.mxu0 0.0
      %1132 = vmatpush1.msra.mxu0 %v1111
      %1133 = vmatprep.subr.mxu0 0.0
      %1134 = vmatpush1.msra.mxu0 %v1112
      %1135 = vmatprep.subr.mxu0 0.0
      %1136 = vmatpush1.msra.mxu0 %v1113
      %1137 = vmatprep.subr.mxu0 0.0
      %1138 = vmatpush1.msra.mxu0 %v1114
      %1139 = vmatprep.subr.mxu0 0.0
      %1140 = vmatpush1.msra.mxu0 %v1115
      %1141 = vmatprep.subr.mxu0 0.0
      %1142 = vmatpush1.msra.mxu0 %v1116
      %1143 = vmatprep.subr.mxu0 0.0
      %1144 = vmatpush1.msra.mxu0 %v1117
      %1145 = vmatprep.subr.mxu0 0.0
      %1146 = vmatpush1.msra.mxu0 %v1118
      %1147 = vmatprep.subr.mxu0 0.0
      %1148 = vmatpush1.msra.mxu0 %v1119
      %1149 = vmatprep.subr.mxu0 0.0
      %1150 = vmatpush1.msra.mxu0 %v1120
      %1151 = vmatprep.subr.mxu0 0.0
      %1152 = vmatpush1.msra.mxu0 %v1121
      %1153 = vmatprep.subr.mxu0 0.0
      %1154 = vmatpush1.msra.mxu0 %v1122
      %1155 = vmatprep.subr.mxu0 0.0
      %1156 = vmatpush1.msra.mxu0 0.0
      %1157 = vmatprep.subr.mxu0 0.0
      %1158 = vmatpush1.msra.mxu0 0.0
      %1159 = vmatprep.subr.mxu0 0.0
      %1160 = vmatpush1.msra.mxu0 0.0
      %1161 = vmatprep.subr.mxu0 0.0
      %1162 = vmatpush1.msra.mxu0 0.0
      %1163 = vmatprep.subr.mxu0 0.0
      %1164 = vmatpush1.msra.mxu0 0.0
      %1165 = vmatprep.subr.mxu0 0.0
      %1166 = vmatpush1.msra.mxu0 0.0
      %1167 = vmatprep.subr.mxu0 0.0
      %1168 = vmatpush1.msra.mxu0 0.0
      %1169 = vmatprep.subr.mxu0 0.0
      %1170 = vmatpush1.msra.mxu0 0.0
      %1171 = vmatprep.subr.mxu0 0.0
      %1172 = vmatpush1.msra.mxu0 0.0
      %1173 = vmatprep.subr.mxu0 0.0
      %1174 = vmatpush1.msra.mxu0 0.0
      %1175 = vmatprep.subr.mxu0 0.0
      %1176 = vmatpush1.msra.mxu0 0.0
      %1177 = vmatprep.subr.mxu0 0.0
      %1178 = vmatpush1.msra.mxu0 0.0
      %1179 = vmatprep.subr.mxu0 0.0
      %1180 = vmatpush1.msra.mxu0 0.0
      %1181 = vmatprep.subr.mxu0 0.0
      %1182 = vmatpush1.msra.mxu0 0.0
      %1183 = vmatprep.subr.mxu0 0.0
      %1184 = vmatpush1.msra.mxu0 0.0
      %1185 = vmatprep.subr.mxu0 0.0
      %1186 = vmatpush1.msra.mxu0 0.0
      %1187 = vmatprep.mubr.f32.mxu0 0.0
      %1188 = vmatmul.mubr.f32.gmra.mrb[0].mxu0 1.0
      %v1189 = vpop.f32.mrb[0].mxu0
      %v1190 = vadd.f32 0.0, %v1189
      %v1191 = vpop.f32.mrb[0].mxu0
      %1192 = vdwg.mxu0
      %1193 = vst.msk [vmem:[%s141] sm:$0xff] %vm807, %v1190
      %p1194 = scmp.lt.s32.totalorder %s13, 3
      %s1195 = scalar_select %p1194, %s13, 3
      %s1196 = smul.addr %s1195, 8
      %s1197 = scalar_lea.vmem %s2, %s1196
      // Predicated region
      $region29: #{respath_block.3} parent=27 // pred_check
        %p1198 = pneg %p78
      $region30: #{respath_block.3} parent=27 // pred_check_branch
        %1200 = sbr.rel (%p1198) target = $region32
      $region31: #{respath_block.3} parent=27 // pred_region
        _
      $region32: #{respath_block.3} parent=27 // pred_fallthru
        _
    $region28: #{respath_block.3} parent=5 // pred_fallthru
      _
    %p1201 = scmp.le.s32.totalorder 2, %s8
    // Predicated region
    $region33: #{respath_block.3} parent=5 // pred_check
      %p1202 = pneg %p1201
    $region34: #{respath_block.3} parent=5 // pred_check_branch
      %1204 = sbr.rel (%p1202) target = $region36
    $region35: #{respath_block.3} parent=5 // pred_region
      %s1205 = ssub.s32 %s8, 2
      // Predicated region
      $region37: #{respath_block.3} parent=35 // pred_check
        %p1206 = pneg %p84
      $region38: #{respath_block.3} parent=35 // pred_check_branch
        %1208 = sbr.rel (%p1206) target = $region40
      $region39: #{respath_block.3} parent=35 // pred_region
        %p1209 = scmp.lt.s32.totalorder %s14, 3
        %s1210 = scalar_select %p1209, %s14, 3
        %s1211 = smul.addr %s1210, 8
        %s1212 = scalar_lea.vmem %s2, %s1211
      $region40: #{respath_block.3} parent=35 // pred_fallthru
        _
    $region36: #{respath_block.3} parent=5 // pred_fallthru
      _
  $region6: #{respath_block.3} parent=0 // loop_footer
    %s12 = sadd.s32 1, %s8
  $region7: #{respath_block.3} parent=0 // loop_footer_branch
    %7 = sbr.rel target = $region3
  $region8: #{respath_block.3} parent=0 // loop_exit
    _

</llo_original>
